<compile_context>
chip_gen: v7x
topology: tpu7x:2x2x1
jax: 0.10.0
libtpu: 0.0.40
codegen_flags: <defaults>
</compile_context>

<pallas_src>
import jax
import jax.numpy as jnp
from jax import lax
from jax.experimental import pallas as pl
from jax.experimental.pallas import tpu as pltpu

LATENT_DIM = 512


# ---------------------------------------------------------------------------
# Fused encoder kernel: 3 convs + flatten + merged FC heads, all in VMEM.
# ---------------------------------------------------------------------------
def _encoder_kernel(a1_ref,
                    r1_ref, g1_ref, b1_ref,
                    r2_ref, g2_ref, b2_ref,
                    r3_ref, g3_ref, b3_ref,
                    s_ref, wfc_ref, bfc_ref,
                    out_ref):
    f32 = jnp.float32
    bf16 = jnp.bfloat16

    def conv_relu(a, r_ref, g_ref, b_ref):
        acc = None
        for di in range(r_ref.shape[0]):          # kh row taps (static unroll)
            # 0/1 row selection: picks input rows  s*oh + di - pad  per image.
            # Exact (one nonzero per row), so the bf16 re-cast is lossless.
            sel = jnp.dot(r_ref[di], a, preferred_element_type=f32).astype(bf16)
            # Column taps + conv weights folded into a single [W*C, OW*O] matrix.
            part = jnp.dot(sel, g_ref[di], preferred_element_type=f32)
            acc = part if acc is None else acc + part
        acc = acc + b_ref[...]                     # [1, OW*O] broadcasts over rows
        return jnp.maximum(acc, 0.0).astype(bf16)

    a2 = conv_relu(a1_ref[...], r1_ref, g1_ref, b1_ref)   # [B*14, 14*6]
    a3 = conv_relu(a2,          r2_ref, g2_ref, b2_ref)   # [B*7,  7*12]
    a4 = conv_relu(a3,          r3_ref, g3_ref, b3_ref)   # [B*5,  5*24]

    # Flatten (PyTorch (c,h,w) order is baked into wfc's row permutation) plus the
    # merged fc_mean/fc_log_var GEMM -> lane-dense [B, 1024] output.
    z = jnp.zeros(out_ref.shape, f32)
    for h in range(wfc_ref.shape[0]):              # 5 output rows of conv3
        rows_h = jnp.dot(s_ref[h], a4, preferred_element_type=f32).astype(bf16)  # [B, 120]
        z = z + jnp.dot(rows_h, wfc_ref[h], preferred_element_type=f32)          # [B, 1024]
    out_ref[...] = z + bfc_ref[...]


# ---------------------------------------------------------------------------
# One-time parameter preparation (constants for the fused kernel).
# ---------------------------------------------------------------------------
def _row_select(out_h, in_h, stride, pad, di, batch):
    """[batch*out_h, batch*in_h] 0/1 matrix selecting input row stride*oh+di-pad."""
    rows = stride * jnp.arange(out_h) + di - pad
    valid = ((rows >= 0) & (rows < in_h)).astype(jnp.float32)
    r_img = jax.nn.one_hot(jnp.clip(rows, 0, in_h - 1), in_h, dtype=jnp.float32)
    r_img = r_img * valid[:, None]                 # zero rows where tap hits padding
    return jnp.kron(jnp.eye(batch, dtype=jnp.float32), r_img)


def _col_taps_weights(w_di, in_w, out_w, stride, pad):
    """[in_w*C, out_w*O] matrix folding the kw column taps with conv weights at row tap di."""
    O, C, kw = w_di.shape
    cols = stride * jnp.arange(out_w)[:, None] + jnp.arange(kw)[None, :] - pad   # [OW, kw]
    valid = ((cols >= 0) & (cols < in_w)).astype(jnp.float32)
    sel = jax.nn.one_hot(jnp.clip(cols, 0, in_w - 1), in_w, dtype=jnp.float32)
    sel = sel * valid[..., None]                   # [OW, kw, W]
    g = jnp.einsum("aji,ocj->icao", sel, w_di.astype(jnp.float32))   # [W, C, OW, O]
    return g.reshape(in_w * C, out_w * O)


def prepare_encoder_params(params, batch):
    """Transform PyTorch-layout params into kernel-ready bf16 constants (done once)."""
    bf16 = jnp.bfloat16
    conv_cfg = [("w1", "b1", 28, 14, 2, 1),
                ("w2", "b2", 14, 7, 2, 1),
                ("w3", "b3", 7, 5, 1, 0)]
    prepped = {}
    for idx, (wk, bk, H, OH, s, p) in enumerate(conv_cfg, start=1):
        w, b = params[wk], params[bk]
        O, C, kh, kw = w.shape
        r = jnp.stack([_row_select(OH, H, s, p, di, batch) for di in range(kh)])
        g = jnp.stack([_col_taps_weights(w[:, :, di, :], H, OH, s, p) for di in range(kh)])
        prepped[f"r{idx}"] = r.astype(bf16)                     # [kh, B*OH, B*H]
        prepped[f"g{idx}"] = g.astype(bf16)                     # [kh, H*C,  OH*O]
        prepped[f"b{idx}"] = jnp.tile(b, OH).reshape(1, OH * O).astype(jnp.float32)

    # Merge fc_mean / fc_log_var into one weight; permute rows from PyTorch's
    # NCHW-flatten order (c*25 + h*5 + w) to the kernel's (h, w*24 + c) layout.
    nfc = 2 * LATENT_DIM
    wcomb = jnp.concatenate([params["wm"], params["wv"]], axis=0)          # [1024, 600]
    wfc = wcomb.reshape(nfc, 24, 5, 5).transpose(2, 3, 1, 0).reshape(5, 5 * 24, nfc)
    prepped["wfc"] = wfc.astype(bf16)                                       # [5, 120, 1024]
    prepped["bfc"] = jnp.concatenate([params["bm"], params["bv"]]).reshape(1, nfc).astype(jnp.float32)

    # Row-gather matrices for the flatten stage: S[h] @ a4 -> conv3 row h of every image.
    eye5 = jnp.eye(5, dtype=jnp.float32)
    s_sel = jnp.stack([jnp.kron(jnp.eye(batch, dtype=jnp.float32), eye5[h:h + 1, :])
                       for h in range(5)])                                  # [5, B, B*5]
    prepped["s"] = s_sel.astype(bf16)
    return prepped


# ---------------------------------------------------------------------------
# Forward pass: one fused pallas_call (batch must match the prepared constants).
# ---------------------------------------------------------------------------
def encoder_forward(prepped, x):
    B = x.shape[0]
    # NCHW -> [B*H, W*C] layout for the first activation (only input-side glue).
    a1 = x.transpose(0, 2, 3, 1).reshape(B * 28, 28 * 3).astype(jnp.bfloat16)

    vmem = pl.BlockSpec(memory_space=pltpu.MemorySpace.VMEM)
    n_out = prepped["bfc"].shape[1]                 # 1024 = mean ++ log_var
    z = pl.pallas_call(
        _encoder_kernel,
        out_shape=jax.ShapeDtypeStruct((B, n_out), jnp.float32),
        in_specs=[vmem] * 13,
        out_specs=vmem,
    )(a1,
      prepped["r1"], prepped["g1"], prepped["b1"],
      prepped["r2"], prepped["g2"], prepped["b2"],
      prepped["r3"], prepped["g3"], prepped["b3"],
      prepped["s"], prepped["wfc"], prepped["bfc"])
    return z[:, :LATENT_DIM], z[:, LATENT_DIM:]


# ---------------------------------------------------------------------------
# Parameter init (PyTorch layout) and pure-JAX reference for correctness.
# ---------------------------------------------------------------------------
def init_params(key):
    ks = jax.random.split(key, 10)

    def init(k, shape, fan_in):
        return (jax.random.normal(k, shape, jnp.float32) / jnp.sqrt(fan_in)).astype(jnp.float32)

    return {
        "w1": init(ks[0], (6, 3, 4, 4), 3 * 4 * 4),
        "b1": init(ks[1], (6,), 3 * 4 * 4),
        "w2": init(ks[2], (12, 6, 4, 4), 6 * 4 * 4),
        "b2": init(ks[3], (12,), 6 * 4 * 4),
        "w3": init(ks[4], (24, 12, 3, 3), 12 * 3 * 3),
        "b3": init(ks[5], (24,), 12 * 3 * 3),
        "wm": init(ks[6], (LATENT_DIM, 24 * 5 * 5), 24 * 5 * 5),   # PyTorch Linear [out, in]
        "bm": init(ks[7], (LATENT_DIM,), 24 * 5 * 5),
        "wv": init(ks[8], (LATENT_DIM, 24 * 5 * 5), 24 * 5 * 5),
        "bv": init(ks[9], (LATENT_DIM,), 24 * 5 * 5),
    }


def encoder_reference(params, x):
    def conv(x, w, b, stride, pad):
        y = lax.conv_general_dilated(
            x, w, window_strides=(stride, stride),
            padding=[(pad, pad), (pad, pad)],
            dimension_numbers=("NCHW", "OIHW", "NCHW"))
        return jax.nn.relu(y + b[None, :, None, None])

    x = conv(x, params["w1"], params["b1"], 2, 1)
    x = conv(x, params["w2"], params["b2"], 2, 1)
    x = conv(x, params["w3"], params["b3"], 1, 0)
    x = x.reshape(x.shape[0], -1)
    z_mean = x @ params["wm"].T + params["bm"]
    z_log_var = x @ params["wv"].T + params["bv"]
    return z_mean, z_log_var


if __name__ == "__main__":
    key = jax.random.PRNGKey(0)
    k_param, k_x = jax.random.split(key)
    params = init_params(k_param)

    # batch=2, NCHW input; 28x28 spatial so flatten size is 24*5*5 = 600.
    x = jax.random.normal(k_x, (2, 3, 28, 28), jnp.float32)

    # One-time weight transform (outside the hot path).
    prepped = prepare_encoder_params(params, batch=2)

    fwd = jax.jit(encoder_forward)
    z_mean, z_log_var = jax.block_until_ready(fwd(prepped, x))

    assert z_mean.shape == (2, LATENT_DIM) and z_log_var.shape == (2, LATENT_DIM)

    # Correctness vs. pure-JAX reference.  Both paths round MXU operands to bf16
    # (the kernel explicitly, the reference via default TPU matmul precision), so a
    # slightly relaxed tolerance is used.
    ref_mean, ref_log_var = encoder_reference(params, x)
    assert jnp.allclose(z_mean, ref_mean, atol=1e-2, rtol=1e-2)
    assert jnp.allclose(z_log_var, ref_log_var, atol=1e-2, rtol=1e-2)

    print("KERNEL_OK")
</pallas_src>

<mosaic_0001>
module attributes {stable_mosaic.version = 11 : i64} {
  func.func @_encoder_kernel(%arg0: memref<56x84xbf16, #tpu.memory_space<vmem>>, %arg1: memref<4x28x56xbf16, #tpu.memory_space<vmem>>, %arg2: memref<4x84x84xbf16, #tpu.memory_space<vmem>>, %arg3: memref<1x84xf32, #tpu.memory_space<vmem>>, %arg4: memref<4x14x28xbf16, #tpu.memory_space<vmem>>, %arg5: memref<4x84x84xbf16, #tpu.memory_space<vmem>>, %arg6: memref<1x84xf32, #tpu.memory_space<vmem>>, %arg7: memref<3x10x14xbf16, #tpu.memory_space<vmem>>, %arg8: memref<3x84x120xbf16, #tpu.memory_space<vmem>>, %arg9: memref<1x120xf32, #tpu.memory_space<vmem>>, %arg10: memref<5x2x10xbf16, #tpu.memory_space<vmem>>, %arg11: memref<5x120x1024xbf16, #tpu.memory_space<vmem>>, %arg12: memref<1x1024xf32, #tpu.memory_space<vmem>>, %arg13: memref<2x1024xf32, #tpu.memory_space<vmem>>) attributes {dimension_semantics = [], scalar_prefetch = 0 : i64, scratch_operands = 0 : i64, tpu.core_type = #tpu.core_type<tc>} {
    %c0 = arith.constant 0 : index
    %c0_0 = arith.constant 0 : index
    %0 = vector.load %arg0[%c0, %c0_0] : memref<56x84xbf16, #tpu.memory_space<vmem>>, vector<56x84xbf16>
    %c0_1 = arith.constant 0 : index
    %c0_2 = arith.constant 0 : index
    %c0_3 = arith.constant 0 : index
    %1 = vector.load %arg1[%c0_1, %c0_2, %c0_3] : memref<4x28x56xbf16, #tpu.memory_space<vmem>>, vector<1x28x56xbf16>
    %2 = vector.shape_cast %1 : vector<1x28x56xbf16> to vector<28x56xbf16>
    %cst = arith.constant dense<0.000000e+00> : vector<28x84xf32>
    %3 = tpu.matmul %2, %0, %cst {dimension_numbers = #tpu.dot_dimension_numbers<[1], [0], [0], [1], [0, 0, 1, 1], [], []>} : vector<28x56xbf16>, vector<56x84xbf16>, vector<28x84xf32> -> vector<28x84xf32>
    %4 = arith.truncf %3 : vector<28x84xf32> to vector<28x84xbf16>
    %c0_4 = arith.constant 0 : index
    %c0_5 = arith.constant 0 : index
    %c0_6 = arith.constant 0 : index
    %5 = vector.load %arg2[%c0_4, %c0_5, %c0_6] : memref<4x84x84xbf16, #tpu.memory_space<vmem>>, vector<1x84x84xbf16>
    %6 = vector.shape_cast %5 : vector<1x84x84xbf16> to vector<84x84xbf16>
    %cst_7 = arith.constant dense<0.000000e+00> : vector<28x84xf32>
    %7 = tpu.matmul %4, %6, %cst_7 {dimension_numbers = #tpu.dot_dimension_numbers<[1], [0], [0], [1], [0, 0, 1, 1], [], []>} : vector<28x84xbf16>, vector<84x84xbf16>, vector<28x84xf32> -> vector<28x84xf32>
    %c1 = arith.constant 1 : index
    %c0_8 = arith.constant 0 : index
    %c0_9 = arith.constant 0 : index
    %8 = vector.load %arg1[%c1, %c0_8, %c0_9] : memref<4x28x56xbf16, #tpu.memory_space<vmem>>, vector<1x28x56xbf16>
    %9 = vector.shape_cast %8 : vector<1x28x56xbf16> to vector<28x56xbf16>
    %cst_10 = arith.constant dense<0.000000e+00> : vector<28x84xf32>
    %10 = tpu.matmul %9, %0, %cst_10 {dimension_numbers = #tpu.dot_dimension_numbers<[1], [0], [0], [1], [0, 0, 1, 1], [], []>} : vector<28x56xbf16>, vector<56x84xbf16>, vector<28x84xf32> -> vector<28x84xf32>
    %11 = arith.truncf %10 : vector<28x84xf32> to vector<28x84xbf16>
    %c1_11 = arith.constant 1 : index
    %c0_12 = arith.constant 0 : index
    %c0_13 = arith.constant 0 : index
    %12 = vector.load %arg2[%c1_11, %c0_12, %c0_13] : memref<4x84x84xbf16, #tpu.memory_space<vmem>>, vector<1x84x84xbf16>
    %13 = vector.shape_cast %12 : vector<1x84x84xbf16> to vector<84x84xbf16>
    %cst_14 = arith.constant dense<0.000000e+00> : vector<28x84xf32>
    %14 = tpu.matmul %11, %13, %cst_14 {dimension_numbers = #tpu.dot_dimension_numbers<[1], [0], [0], [1], [0, 0, 1, 1], [], []>} : vector<28x84xbf16>, vector<84x84xbf16>, vector<28x84xf32> -> vector<28x84xf32>
    %15 = arith.addf %7, %14 : vector<28x84xf32>
    %c2 = arith.constant 2 : index
    %c0_15 = arith.constant 0 : index
    %c0_16 = arith.constant 0 : index
    %16 = vector.load %arg1[%c2, %c0_15, %c0_16] : memref<4x28x56xbf16, #tpu.memory_space<vmem>>, vector<1x28x56xbf16>
    %17 = vector.shape_cast %16 : vector<1x28x56xbf16> to vector<28x56xbf16>
    %cst_17 = arith.constant dense<0.000000e+00> : vector<28x84xf32>
    %18 = tpu.matmul %17, %0, %cst_17 {dimension_numbers = #tpu.dot_dimension_numbers<[1], [0], [0], [1], [0, 0, 1, 1], [], []>} : vector<28x56xbf16>, vector<56x84xbf16>, vector<28x84xf32> -> vector<28x84xf32>
    %19 = arith.truncf %18 : vector<28x84xf32> to vector<28x84xbf16>
    %c2_18 = arith.constant 2 : index
    %c0_19 = arith.constant 0 : index
    %c0_20 = arith.constant 0 : index
    %20 = vector.load %arg2[%c2_18, %c0_19, %c0_20] : memref<4x84x84xbf16, #tpu.memory_space<vmem>>, vector<1x84x84xbf16>
    %21 = vector.shape_cast %20 : vector<1x84x84xbf16> to vector<84x84xbf16>
    %cst_21 = arith.constant dense<0.000000e+00> : vector<28x84xf32>
    %22 = tpu.matmul %19, %21, %cst_21 {dimension_numbers = #tpu.dot_dimension_numbers<[1], [0], [0], [1], [0, 0, 1, 1], [], []>} : vector<28x84xbf16>, vector<84x84xbf16>, vector<28x84xf32> -> vector<28x84xf32>
    %23 = arith.addf %15, %22 : vector<28x84xf32>
    %c3 = arith.constant 3 : index
    %c0_22 = arith.constant 0 : index
    %c0_23 = arith.constant 0 : index
    %24 = vector.load %arg1[%c3, %c0_22, %c0_23] : memref<4x28x56xbf16, #tpu.memory_space<vmem>>, vector<1x28x56xbf16>
    %25 = vector.shape_cast %24 : vector<1x28x56xbf16> to vector<28x56xbf16>
    %cst_24 = arith.constant dense<0.000000e+00> : vector<28x84xf32>
    %26 = tpu.matmul %25, %0, %cst_24 {dimension_numbers = #tpu.dot_dimension_numbers<[1], [0], [0], [1], [0, 0, 1, 1], [], []>} : vector<28x56xbf16>, vector<56x84xbf16>, vector<28x84xf32> -> vector<28x84xf32>
    %27 = arith.truncf %26 : vector<28x84xf32> to vector<28x84xbf16>
    %c3_25 = arith.constant 3 : index
    %c0_26 = arith.constant 0 : index
    %c0_27 = arith.constant 0 : index
    %28 = vector.load %arg2[%c3_25, %c0_26, %c0_27] : memref<4x84x84xbf16, #tpu.memory_space<vmem>>, vector<1x84x84xbf16>
    %29 = vector.shape_cast %28 : vector<1x84x84xbf16> to vector<84x84xbf16>
    %cst_28 = arith.constant dense<0.000000e+00> : vector<28x84xf32>
    %30 = tpu.matmul %27, %29, %cst_28 {dimension_numbers = #tpu.dot_dimension_numbers<[1], [0], [0], [1], [0, 0, 1, 1], [], []>} : vector<28x84xbf16>, vector<84x84xbf16>, vector<28x84xf32> -> vector<28x84xf32>
    %31 = arith.addf %23, %30 : vector<28x84xf32>
    %c0_29 = arith.constant 0 : index
    %c0_30 = arith.constant 0 : index
    %32 = vector.load %arg3[%c0_29, %c0_30] : memref<1x84xf32, #tpu.memory_space<vmem>>, vector<1x84xf32>
    %33 = vector.broadcast %32 : vector<1x84xf32> to vector<28x84xf32>
    %34 = arith.addf %31, %33 : vector<28x84xf32>
    %cst_31 = arith.constant 0.000000e+00 : f32
    %35 = vector.broadcast %cst_31 : f32 to vector<28x84xf32>
    %36 = arith.maximumf %34, %35 : vector<28x84xf32>
    %37 = arith.truncf %36 : vector<28x84xf32> to vector<28x84xbf16>
    %c0_32 = arith.constant 0 : index
    %c0_33 = arith.constant 0 : index
    %c0_34 = arith.constant 0 : index
    %38 = vector.load %arg4[%c0_32, %c0_33, %c0_34] : memref<4x14x28xbf16, #tpu.memory_space<vmem>>, vector<1x14x28xbf16>
    %39 = vector.shape_cast %38 : vector<1x14x28xbf16> to vector<14x28xbf16>
    %cst_35 = arith.constant dense<0.000000e+00> : vector<14x84xf32>
    %40 = tpu.matmul %39, %37, %cst_35 {dimension_numbers = #tpu.dot_dimension_numbers<[1], [0], [0], [1], [0, 0, 1, 1], [], []>} : vector<14x28xbf16>, vector<28x84xbf16>, vector<14x84xf32> -> vector<14x84xf32>
    %41 = arith.truncf %40 : vector<14x84xf32> to vector<14x84xbf16>
    %c0_36 = arith.constant 0 : index
    %c0_37 = arith.constant 0 : index
    %c0_38 = arith.constant 0 : index
    %42 = vector.load %arg5[%c0_36, %c0_37, %c0_38] : memref<4x84x84xbf16, #tpu.memory_space<vmem>>, vector<1x84x84xbf16>
    %43 = vector.shape_cast %42 : vector<1x84x84xbf16> to vector<84x84xbf16>
    %cst_39 = arith.constant dense<0.000000e+00> : vector<14x84xf32>
    %44 = tpu.matmul %41, %43, %cst_39 {dimension_numbers = #tpu.dot_dimension_numbers<[1], [0], [0], [1], [0, 0, 1, 1], [], []>} : vector<14x84xbf16>, vector<84x84xbf16>, vector<14x84xf32> -> vector<14x84xf32>
    %c1_40 = arith.constant 1 : index
    %c0_41 = arith.constant 0 : index
    %c0_42 = arith.constant 0 : index
    %45 = vector.load %arg4[%c1_40, %c0_41, %c0_42] : memref<4x14x28xbf16, #tpu.memory_space<vmem>>, vector<1x14x28xbf16>
    %46 = vector.shape_cast %45 : vector<1x14x28xbf16> to vector<14x28xbf16>
    %cst_43 = arith.constant dense<0.000000e+00> : vector<14x84xf32>
    %47 = tpu.matmul %46, %37, %cst_43 {dimension_numbers = #tpu.dot_dimension_numbers<[1], [0], [0], [1], [0, 0, 1, 1], [], []>} : vector<14x28xbf16>, vector<28x84xbf16>, vector<14x84xf32> -> vector<14x84xf32>
    %48 = arith.truncf %47 : vector<14x84xf32> to vector<14x84xbf16>
    %c1_44 = arith.constant 1 : index
    %c0_45 = arith.constant 0 : index
    %c0_46 = arith.constant 0 : index
    %49 = vector.load %arg5[%c1_44, %c0_45, %c0_46] : memref<4x84x84xbf16, #tpu.memory_space<vmem>>, vector<1x84x84xbf16>
    %50 = vector.shape_cast %49 : vector<1x84x84xbf16> to vector<84x84xbf16>
    %cst_47 = arith.constant dense<0.000000e+00> : vector<14x84xf32>
    %51 = tpu.matmul %48, %50, %cst_47 {dimension_numbers = #tpu.dot_dimension_numbers<[1], [0], [0], [1], [0, 0, 1, 1], [], []>} : vector<14x84xbf16>, vector<84x84xbf16>, vector<14x84xf32> -> vector<14x84xf32>
    %52 = arith.addf %44, %51 : vector<14x84xf32>
    %c2_48 = arith.constant 2 : index
    %c0_49 = arith.constant 0 : index
    %c0_50 = arith.constant 0 : index
    %53 = vector.load %arg4[%c2_48, %c0_49, %c0_50] : memref<4x14x28xbf16, #tpu.memory_space<vmem>>, vector<1x14x28xbf16>
    %54 = vector.shape_cast %53 : vector<1x14x28xbf16> to vector<14x28xbf16>
    %cst_51 = arith.constant dense<0.000000e+00> : vector<14x84xf32>
    %55 = tpu.matmul %54, %37, %cst_51 {dimension_numbers = #tpu.dot_dimension_numbers<[1], [0], [0], [1], [0, 0, 1, 1], [], []>} : vector<14x28xbf16>, vector<28x84xbf16>, vector<14x84xf32> -> vector<14x84xf32>
    %56 = arith.truncf %55 : vector<14x84xf32> to vector<14x84xbf16>
    %c2_52 = arith.constant 2 : index
    %c0_53 = arith.constant 0 : index
    %c0_54 = arith.constant 0 : index
    %57 = vector.load %arg5[%c2_52, %c0_53, %c0_54] : memref<4x84x84xbf16, #tpu.memory_space<vmem>>, vector<1x84x84xbf16>
    %58 = vector.shape_cast %57 : vector<1x84x84xbf16> to vector<84x84xbf16>
    %cst_55 = arith.constant dense<0.000000e+00> : vector<14x84xf32>
    %59 = tpu.matmul %56, %58, %cst_55 {dimension_numbers = #tpu.dot_dimension_numbers<[1], [0], [0], [1], [0, 0, 1, 1], [], []>} : vector<14x84xbf16>, vector<84x84xbf16>, vector<14x84xf32> -> vector<14x84xf32>
    %60 = arith.addf %52, %59 : vector<14x84xf32>
    %c3_56 = arith.constant 3 : index
    %c0_57 = arith.constant 0 : index
    %c0_58 = arith.constant 0 : index
    %61 = vector.load %arg4[%c3_56, %c0_57, %c0_58] : memref<4x14x28xbf16, #tpu.memory_space<vmem>>, vector<1x14x28xbf16>
    %62 = vector.shape_cast %61 : vector<1x14x28xbf16> to vector<14x28xbf16>
    %cst_59 = arith.constant dense<0.000000e+00> : vector<14x84xf32>
    %63 = tpu.matmul %62, %37, %cst_59 {dimension_numbers = #tpu.dot_dimension_numbers<[1], [0], [0], [1], [0, 0, 1, 1], [], []>} : vector<14x28xbf16>, vector<28x84xbf16>, vector<14x84xf32> -> vector<14x84xf32>
    %64 = arith.truncf %63 : vector<14x84xf32> to vector<14x84xbf16>
    %c3_60 = arith.constant 3 : index
    %c0_61 = arith.constant 0 : index
    %c0_62 = arith.constant 0 : index
    %65 = vector.load %arg5[%c3_60, %c0_61, %c0_62] : memref<4x84x84xbf16, #tpu.memory_space<vmem>>, vector<1x84x84xbf16>
    %66 = vector.shape_cast %65 : vector<1x84x84xbf16> to vector<84x84xbf16>
    %cst_63 = arith.constant dense<0.000000e+00> : vector<14x84xf32>
    %67 = tpu.matmul %64, %66, %cst_63 {dimension_numbers = #tpu.dot_dimension_numbers<[1], [0], [0], [1], [0, 0, 1, 1], [], []>} : vector<14x84xbf16>, vector<84x84xbf16>, vector<14x84xf32> -> vector<14x84xf32>
    %68 = arith.addf %60, %67 : vector<14x84xf32>
    %c0_64 = arith.constant 0 : index
    %c0_65 = arith.constant 0 : index
    %69 = vector.load %arg6[%c0_64, %c0_65] : memref<1x84xf32, #tpu.memory_space<vmem>>, vector<1x84xf32>
    %70 = vector.broadcast %69 : vector<1x84xf32> to vector<14x84xf32>
    %71 = arith.addf %68, %70 : vector<14x84xf32>
    %cst_66 = arith.constant 0.000000e+00 : f32
    %72 = vector.broadcast %cst_66 : f32 to vector<14x84xf32>
    %73 = arith.maximumf %71, %72 : vector<14x84xf32>
    %74 = arith.truncf %73 : vector<14x84xf32> to vector<14x84xbf16>
    %c0_67 = arith.constant 0 : index
    %c0_68 = arith.constant 0 : index
    %c0_69 = arith.constant 0 : index
    %75 = vector.load %arg7[%c0_67, %c0_68, %c0_69] : memref<3x10x14xbf16, #tpu.memory_space<vmem>>, vector<1x10x14xbf16>
    %76 = vector.shape_cast %75 : vector<1x10x14xbf16> to vector<10x14xbf16>
    %cst_70 = arith.constant dense<0.000000e+00> : vector<10x84xf32>
    %77 = tpu.matmul %76, %74, %cst_70 {dimension_numbers = #tpu.dot_dimension_numbers<[1], [0], [0], [1], [0, 0, 1, 1], [], []>} : vector<10x14xbf16>, vector<14x84xbf16>, vector<10x84xf32> -> vector<10x84xf32>
    %78 = arith.truncf %77 : vector<10x84xf32> to vector<10x84xbf16>
    %c0_71 = arith.constant 0 : index
    %c0_72 = arith.constant 0 : index
    %c0_73 = arith.constant 0 : index
    %79 = vector.load %arg8[%c0_71, %c0_72, %c0_73] : memref<3x84x120xbf16, #tpu.memory_space<vmem>>, vector<1x84x120xbf16>
    %80 = vector.shape_cast %79 : vector<1x84x120xbf16> to vector<84x120xbf16>
    %cst_74 = arith.constant dense<0.000000e+00> : vector<10x120xf32>
    %81 = tpu.matmul %78, %80, %cst_74 {dimension_numbers = #tpu.dot_dimension_numbers<[1], [0], [0], [1], [0, 0, 1, 1], [], []>} : vector<10x84xbf16>, vector<84x120xbf16>, vector<10x120xf32> -> vector<10x120xf32>
    %c1_75 = arith.constant 1 : index
    %c0_76 = arith.constant 0 : index
    %c0_77 = arith.constant 0 : index
    %82 = vector.load %arg7[%c1_75, %c0_76, %c0_77] : memref<3x10x14xbf16, #tpu.memory_space<vmem>>, vector<1x10x14xbf16>
    %83 = vector.shape_cast %82 : vector<1x10x14xbf16> to vector<10x14xbf16>
    %cst_78 = arith.constant dense<0.000000e+00> : vector<10x84xf32>
    %84 = tpu.matmul %83, %74, %cst_78 {dimension_numbers = #tpu.dot_dimension_numbers<[1], [0], [0], [1], [0, 0, 1, 1], [], []>} : vector<10x14xbf16>, vector<14x84xbf16>, vector<10x84xf32> -> vector<10x84xf32>
    %85 = arith.truncf %84 : vector<10x84xf32> to vector<10x84xbf16>
    %c1_79 = arith.constant 1 : index
    %c0_80 = arith.constant 0 : index
    %c0_81 = arith.constant 0 : index
    %86 = vector.load %arg8[%c1_79, %c0_80, %c0_81] : memref<3x84x120xbf16, #tpu.memory_space<vmem>>, vector<1x84x120xbf16>
    %87 = vector.shape_cast %86 : vector<1x84x120xbf16> to vector<84x120xbf16>
    %cst_82 = arith.constant dense<0.000000e+00> : vector<10x120xf32>
    %88 = tpu.matmul %85, %87, %cst_82 {dimension_numbers = #tpu.dot_dimension_numbers<[1], [0], [0], [1], [0, 0, 1, 1], [], []>} : vector<10x84xbf16>, vector<84x120xbf16>, vector<10x120xf32> -> vector<10x120xf32>
    %89 = arith.addf %81, %88 : vector<10x120xf32>
    %c2_83 = arith.constant 2 : index
    %c0_84 = arith.constant 0 : index
    %c0_85 = arith.constant 0 : index
    %90 = vector.load %arg7[%c2_83, %c0_84, %c0_85] : memref<3x10x14xbf16, #tpu.memory_space<vmem>>, vector<1x10x14xbf16>
    %91 = vector.shape_cast %90 : vector<1x10x14xbf16> to vector<10x14xbf16>
    %cst_86 = arith.constant dense<0.000000e+00> : vector<10x84xf32>
    %92 = tpu.matmul %91, %74, %cst_86 {dimension_numbers = #tpu.dot_dimension_numbers<[1], [0], [0], [1], [0, 0, 1, 1], [], []>} : vector<10x14xbf16>, vector<14x84xbf16>, vector<10x84xf32> -> vector<10x84xf32>
    %93 = arith.truncf %92 : vector<10x84xf32> to vector<10x84xbf16>
    %c2_87 = arith.constant 2 : index
    %c0_88 = arith.constant 0 : index
    %c0_89 = arith.constant 0 : index
    %94 = vector.load %arg8[%c2_87, %c0_88, %c0_89] : memref<3x84x120xbf16, #tpu.memory_space<vmem>>, vector<1x84x120xbf16>
    %95 = vector.shape_cast %94 : vector<1x84x120xbf16> to vector<84x120xbf16>
    %cst_90 = arith.constant dense<0.000000e+00> : vector<10x120xf32>
    %96 = tpu.matmul %93, %95, %cst_90 {dimension_numbers = #tpu.dot_dimension_numbers<[1], [0], [0], [1], [0, 0, 1, 1], [], []>} : vector<10x84xbf16>, vector<84x120xbf16>, vector<10x120xf32> -> vector<10x120xf32>
    %97 = arith.addf %89, %96 : vector<10x120xf32>
    %c0_91 = arith.constant 0 : index
    %c0_92 = arith.constant 0 : index
    %98 = vector.load %arg9[%c0_91, %c0_92] : memref<1x120xf32, #tpu.memory_space<vmem>>, vector<1x120xf32>
    %99 = vector.broadcast %98 : vector<1x120xf32> to vector<10x120xf32>
    %100 = arith.addf %97, %99 : vector<10x120xf32>
    %cst_93 = arith.constant 0.000000e+00 : f32
    %101 = vector.broadcast %cst_93 : f32 to vector<10x120xf32>
    %102 = arith.maximumf %100, %101 : vector<10x120xf32>
    %103 = arith.truncf %102 : vector<10x120xf32> to vector<10x120xbf16>
    %cst_94 = arith.constant 0.000000e+00 : f32
    %104 = vector.broadcast %cst_94 : f32 to vector<2x1024xf32>
    %c0_95 = arith.constant 0 : index
    %c0_96 = arith.constant 0 : index
    %c0_97 = arith.constant 0 : index
    %105 = vector.load %arg10[%c0_95, %c0_96, %c0_97] : memref<5x2x10xbf16, #tpu.memory_space<vmem>>, vector<1x2x10xbf16>
    %106 = vector.shape_cast %105 : vector<1x2x10xbf16> to vector<2x10xbf16>
    %cst_98 = arith.constant dense<0.000000e+00> : vector<2x120xf32>
    %107 = tpu.matmul %106, %103, %cst_98 {dimension_numbers = #tpu.dot_dimension_numbers<[1], [0], [0], [1], [0, 0, 1, 1], [], []>} : vector<2x10xbf16>, vector<10x120xbf16>, vector<2x120xf32> -> vector<2x120xf32>
    %108 = arith.truncf %107 : vector<2x120xf32> to vector<2x120xbf16>
    %c0_99 = arith.constant 0 : index
    %c0_100 = arith.constant 0 : index
    %c0_101 = arith.constant 0 : index
    %109 = vector.load %arg11[%c0_99, %c0_100, %c0_101] : memref<5x120x1024xbf16, #tpu.memory_space<vmem>>, vector<1x120x1024xbf16>
    %110 = vector.shape_cast %109 : vector<1x120x1024xbf16> to vector<120x1024xbf16>
    %cst_102 = arith.constant dense<0.000000e+00> : vector<2x1024xf32>
    %111 = tpu.matmul %108, %110, %cst_102 {dimension_numbers = #tpu.dot_dimension_numbers<[1], [0], [0], [1], [0, 0, 1, 1], [], []>} : vector<2x120xbf16>, vector<120x1024xbf16>, vector<2x1024xf32> -> vector<2x1024xf32>
    %112 = arith.addf %104, %111 : vector<2x1024xf32>
    %c1_103 = arith.constant 1 : index
    %c0_104 = arith.constant 0 : index
    %c0_105 = arith.constant 0 : index
    %113 = vector.load %arg10[%c1_103, %c0_104, %c0_105] : memref<5x2x10xbf16, #tpu.memory_space<vmem>>, vector<1x2x10xbf16>
    %114 = vector.shape_cast %113 : vector<1x2x10xbf16> to vector<2x10xbf16>
    %cst_106 = arith.constant dense<0.000000e+00> : vector<2x120xf32>
    %115 = tpu.matmul %114, %103, %cst_106 {dimension_numbers = #tpu.dot_dimension_numbers<[1], [0], [0], [1], [0, 0, 1, 1], [], []>} : vector<2x10xbf16>, vector<10x120xbf16>, vector<2x120xf32> -> vector<2x120xf32>
    %116 = arith.truncf %115 : vector<2x120xf32> to vector<2x120xbf16>
    %c1_107 = arith.constant 1 : index
    %c0_108 = arith.constant 0 : index
    %c0_109 = arith.constant 0 : index
    %117 = vector.load %arg11[%c1_107, %c0_108, %c0_109] : memref<5x120x1024xbf16, #tpu.memory_space<vmem>>, vector<1x120x1024xbf16>
    %118 = vector.shape_cast %117 : vector<1x120x1024xbf16> to vector<120x1024xbf16>
    %cst_110 = arith.constant dense<0.000000e+00> : vector<2x1024xf32>
    %119 = tpu.matmul %116, %118, %cst_110 {dimension_numbers = #tpu.dot_dimension_numbers<[1], [0], [0], [1], [0, 0, 1, 1], [], []>} : vector<2x120xbf16>, vector<120x1024xbf16>, vector<2x1024xf32> -> vector<2x1024xf32>
    %120 = arith.addf %112, %119 : vector<2x1024xf32>
    %c2_111 = arith.constant 2 : index
    %c0_112 = arith.constant 0 : index
    %c0_113 = arith.constant 0 : index
    %121 = vector.load %arg10[%c2_111, %c0_112, %c0_113] : memref<5x2x10xbf16, #tpu.memory_space<vmem>>, vector<1x2x10xbf16>
    %122 = vector.shape_cast %121 : vector<1x2x10xbf16> to vector<2x10xbf16>
    %cst_114 = arith.constant dense<0.000000e+00> : vector<2x120xf32>
    %123 = tpu.matmul %122, %103, %cst_114 {dimension_numbers = #tpu.dot_dimension_numbers<[1], [0], [0], [1], [0, 0, 1, 1], [], []>} : vector<2x10xbf16>, vector<10x120xbf16>, vector<2x120xf32> -> vector<2x120xf32>
    %124 = arith.truncf %123 : vector<2x120xf32> to vector<2x120xbf16>
    %c2_115 = arith.constant 2 : index
    %c0_116 = arith.constant 0 : index
    %c0_117 = arith.constant 0 : index
    %125 = vector.load %arg11[%c2_115, %c0_116, %c0_117] : memref<5x120x1024xbf16, #tpu.memory_space<vmem>>, vector<1x120x1024xbf16>
    %126 = vector.shape_cast %125 : vector<1x120x1024xbf16> to vector<120x1024xbf16>
    %cst_118 = arith.constant dense<0.000000e+00> : vector<2x1024xf32>
    %127 = tpu.matmul %124, %126, %cst_118 {dimension_numbers = #tpu.dot_dimension_numbers<[1], [0], [0], [1], [0, 0, 1, 1], [], []>} : vector<2x120xbf16>, vector<120x1024xbf16>, vector<2x1024xf32> -> vector<2x1024xf32>
    %128 = arith.addf %120, %127 : vector<2x1024xf32>
    %c3_119 = arith.constant 3 : index
    %c0_120 = arith.constant 0 : index
    %c0_121 = arith.constant 0 : index
    %129 = vector.load %arg10[%c3_119, %c0_120, %c0_121] : memref<5x2x10xbf16, #tpu.memory_space<vmem>>, vector<1x2x10xbf16>
    %130 = vector.shape_cast %129 : vector<1x2x10xbf16> to vector<2x10xbf16>
    %cst_122 = arith.constant dense<0.000000e+00> : vector<2x120xf32>
    %131 = tpu.matmul %130, %103, %cst_122 {dimension_numbers = #tpu.dot_dimension_numbers<[1], [0], [0], [1], [0, 0, 1, 1], [], []>} : vector<2x10xbf16>, vector<10x120xbf16>, vector<2x120xf32> -> vector<2x120xf32>
    %132 = arith.truncf %131 : vector<2x120xf32> to vector<2x120xbf16>
    %c3_123 = arith.constant 3 : index
    %c0_124 = arith.constant 0 : index
    %c0_125 = arith.constant 0 : index
    %133 = vector.load %arg11[%c3_123, %c0_124, %c0_125] : memref<5x120x1024xbf16, #tpu.memory_space<vmem>>, vector<1x120x1024xbf16>
    %134 = vector.shape_cast %133 : vector<1x120x1024xbf16> to vector<120x1024xbf16>
    %cst_126 = arith.constant dense<0.000000e+00> : vector<2x1024xf32>
    %135 = tpu.matmul %132, %134, %cst_126 {dimension_numbers = #tpu.dot_dimension_numbers<[1], [0], [0], [1], [0, 0, 1, 1], [], []>} : vector<2x120xbf16>, vector<120x1024xbf16>, vector<2x1024xf32> -> vector<2x1024xf32>
    %136 = arith.addf %128, %135 : vector<2x1024xf32>
    %c4 = arith.constant 4 : index
    %c0_127 = arith.constant 0 : index
    %c0_128 = arith.constant 0 : index
    %137 = vector.load %arg10[%c4, %c0_127, %c0_128] : memref<5x2x10xbf16, #tpu.memory_space<vmem>>, vector<1x2x10xbf16>
    %138 = vector.shape_cast %137 : vector<1x2x10xbf16> to vector<2x10xbf16>
    %cst_129 = arith.constant dense<0.000000e+00> : vector<2x120xf32>
    %139 = tpu.matmul %138, %103, %cst_129 {dimension_numbers = #tpu.dot_dimension_numbers<[1], [0], [0], [1], [0, 0, 1, 1], [], []>} : vector<2x10xbf16>, vector<10x120xbf16>, vector<2x120xf32> -> vector<2x120xf32>
    %140 = arith.truncf %139 : vector<2x120xf32> to vector<2x120xbf16>
    %c4_130 = arith.constant 4 : index
    %c0_131 = arith.constant 0 : index
    %c0_132 = arith.constant 0 : index
    %141 = vector.load %arg11[%c4_130, %c0_131, %c0_132] : memref<5x120x1024xbf16, #tpu.memory_space<vmem>>, vector<1x120x1024xbf16>
    %142 = vector.shape_cast %141 : vector<1x120x1024xbf16> to vector<120x1024xbf16>
    %cst_133 = arith.constant dense<0.000000e+00> : vector<2x1024xf32>
    %143 = tpu.matmul %140, %142, %cst_133 {dimension_numbers = #tpu.dot_dimension_numbers<[1], [0], [0], [1], [0, 0, 1, 1], [], []>} : vector<2x120xbf16>, vector<120x1024xbf16>, vector<2x1024xf32> -> vector<2x1024xf32>
    %144 = arith.addf %136, %143 : vector<2x1024xf32>
    %c0_134 = arith.constant 0 : index
    %c0_135 = arith.constant 0 : index
    %145 = vector.load %arg12[%c0_134, %c0_135] : memref<1x1024xf32, #tpu.memory_space<vmem>>, vector<1x1024xf32>
    %146 = vector.broadcast %145 : vector<1x1024xf32> to vector<2x1024xf32>
    %147 = arith.addf %144, %146 : vector<2x1024xf32>
    %c0_136 = arith.constant 0 : index
    %c0_137 = arith.constant 0 : index
    %148 = vector.load %arg13[%c0_136, %c0_137] : memref<2x1024xf32, #tpu.memory_space<vmem>>, vector<2x1024xf32>
    tpu.vector_store %arg13[%c0_136, %c0_137], %147 {strides = array<i32>} : memref<2x1024xf32, #tpu.memory_space<vmem>>, vector<2x1024xf32>,
    return
  }
}

</mosaic_0001>

<llo_original>
// kernel: encoder_forward.1
$region0: #{encoder_forward.1}
  #allocation0 [shape = 'u32[]', space=smem, size = 0x4, offset = 0x4, fixed_abs, tag = 'smem constant byte address 0x4 - core index']
  #allocation1 [shape = 'u32[144,128]{1,0:T(1,128)}', space=vmem, size = 0x12000, scoped, tag = 'internal scratch']
  %s0 = inlined_call_operand.vmem [shape: bf16[56,84], index: 0, kind: input, shape index: {}]
  %s1 = inlined_call_operand.vmem [shape: bf16[4,28,56], index: 1, kind: input, shape index: {}]
  %s2 = inlined_call_operand.vmem [shape: bf16[4,84,84], index: 2, kind: input, shape index: {}]
  %s3 = inlined_call_operand.hbm [shape: f32[1,84], index: 3, kind: input, shape index: {}]
  %s4 = inlined_call_operand.vmem [shape: bf16[4,14,28], index: 4, kind: input, shape index: {}]
  %s5 = inlined_call_operand.vmem [shape: bf16[4,84,84], index: 5, kind: input, shape index: {}]
  %s6 = inlined_call_operand.hbm [shape: f32[1,84], index: 6, kind: input, shape index: {}]
  %s7 = inlined_call_operand.vmem [shape: bf16[3,10,14], index: 7, kind: input, shape index: {}]
  %s8 = inlined_call_operand.hbm [shape: bf16[3,84,120], index: 8, kind: input, shape index: {}]
  %s9 = inlined_call_operand.hbm [shape: f32[1,120], index: 9, kind: input, shape index: {}]
  %s10 = inlined_call_operand.hbm [shape: bf16[5,2,10], index: 10, kind: input, shape index: {}]
  %s11 = inlined_call_operand.hbm [shape: bf16[5,120,1024], index: 11, kind: input, shape index: {}]
  %s12 = inlined_call_operand.hbm [shape: f32[1,1024], index: 12, kind: input, shape index: {}]
  %s13 = inlined_call_operand.vmem [shape: f32[2,1024], index: 13, kind: output, shape index: {}]
  %s14 = sld [smem:[#allocation0]]
  $region90: #{encoder_forward.1} parent=0
    _
  %s16 = ssub.s32 1, %s14
  %s17 = scalar_select 0, %s16, %s14
  $region1: #{encoder_forward.1} parent=0
    #allocation2 [shape = 'u8[512]{0}', space=vmem, size = 0x400, scoped, tag = 'input window, operand 3, single buffered']
    #allocation3 [shape = 's32[1]{0}', space=sflag, size = 0x4, scoped, tag = 'scoped memory for encoder_forward.1']
    #allocation4 [shape = 'u8[512]{0}', space=vmem, size = 0x400, scoped, tag = 'input window, operand 6, single buffered']
    #allocation5 [shape = 's32[1]{0}', space=sflag, size = 0x4, scoped, tag = 'scoped memory for encoder_forward.1']
    #allocation6 [shape = 'u8[67584]{0}', space=vmem, size = 0x10800, scoped, tag = 'input window, operand 8, single buffered']
    #allocation7 [shape = 'u8[512]{0}', space=vmem, size = 0x400, scoped, tag = 'input window, operand 9, single buffered']
    #allocation8 [shape = 's32[1]{0}', space=sflag, size = 0x4, scoped, tag = 'scoped memory for encoder_forward.1']
    #allocation9 [shape = 'u8[2560]{0}', space=vmem, size = 0xc00, scoped, tag = 'input window, operand 10, single buffered']
    #allocation10 [shape = 'u8[1228800]{0}', space=vmem, size = 0x12c000, scoped, tag = 'input window, operand 11, single buffered']
    #allocation11 [shape = 's32[1]{0}', space=sflag, size = 0x4, scoped, tag = 'scoped memory for encoder_forward.1']
    #allocation12 [shape = 'u8[4096]{0}', space=vmem, size = 0x1000, scoped, tag = 'input window, operand 12, single buffered']
    %18 = vsyncpa [#allocation3], 0
    %19 = vsyncpa [#allocation5], 0
    %20 = vsyncpa [#allocation8], 0
    %21 = vsyncpa [#allocation11], 0
    // Predicated region
    $region2: #{encoder_forward.1} parent=1 // pred_check
      _
    $region3: #{encoder_forward.1} parent=1 // pred_check_branch
      %23 = sbr.rel (0) target = $region5
    $region4: #{encoder_forward.1} parent=1 // pred_region
      _
    $region5: #{encoder_forward.1} parent=1 // pred_fallthru
      _
    // Predicated region
    $region6: #{encoder_forward.1} parent=1 // pred_check
      _
    $region7: #{encoder_forward.1} parent=1 // pred_check_branch
      %25 = sbr.rel (0) target = $region9
    $region8: #{encoder_forward.1} parent=1 // pred_region
      _
    $region9: #{encoder_forward.1} parent=1 // pred_fallthru
      _
    // Predicated region
    $region10: #{encoder_forward.1} parent=1 // pred_check
      _
    $region11: #{encoder_forward.1} parent=1 // pred_check_branch
      %27 = sbr.rel (0) target = $region13
    $region12: #{encoder_forward.1} parent=1 // pred_region
      _
    $region13: #{encoder_forward.1} parent=1 // pred_fallthru
      _
    // Predicated region
    $region14: #{encoder_forward.1} parent=1 // pred_check
      _
    $region15: #{encoder_forward.1} parent=1 // pred_check_branch
      %29 = sbr.rel (0) target = $region17
    $region16: #{encoder_forward.1} parent=1 // pred_region
      %s31 = ssub.s32 16, 16
      %32 = vsyncadd [#allocation3], %s31
      %s34 = sshll.u32 [#allocation2], 4
      %s35 = int_to_ptr.vmem [resolvable:$true] %s34
      %37 = dma.hbm_to_vmem [thread:$0]  %s3, 16, %s35, [#allocation3]
    $region17: #{encoder_forward.1} parent=1 // pred_fallthru
      _
    // Predicated region
    $region18: #{encoder_forward.1} parent=1 // pred_check
      _
    $region19: #{encoder_forward.1} parent=1 // pred_check_branch
      %39 = sbr.rel (0) target = $region21
    $region20: #{encoder_forward.1} parent=1 // pred_region
      _
    $region21: #{encoder_forward.1} parent=1 // pred_fallthru
      _
    // Predicated region
    $region22: #{encoder_forward.1} parent=1 // pred_check
      _
    $region23: #{encoder_forward.1} parent=1 // pred_check_branch
      %41 = sbr.rel (0) target = $region25
    $region24: #{encoder_forward.1} parent=1 // pred_region
      _
    $region25: #{encoder_forward.1} parent=1 // pred_fallthru
      _
    // Predicated region
    $region26: #{encoder_forward.1} parent=1 // pred_check
      _
    $region27: #{encoder_forward.1} parent=1 // pred_check_branch
      %43 = sbr.rel (0) target = $region29
    $region28: #{encoder_forward.1} parent=1 // pred_region
      %s45 = ssub.s32 16, 16
      %46 = vsyncadd [#allocation5], %s45
      %s48 = sshll.u32 [#allocation4], 4
      %s49 = int_to_ptr.vmem [resolvable:$true] %s48
      %51 = dma.hbm_to_vmem [thread:$0]  %s6, 16, %s49, [#allocation5]
    $region29: #{encoder_forward.1} parent=1 // pred_fallthru
      _
    // Predicated region
    $region30: #{encoder_forward.1} parent=1 // pred_check
      _
    $region31: #{encoder_forward.1} parent=1 // pred_check_branch
      %53 = sbr.rel (0) target = $region33
    $region32: #{encoder_forward.1} parent=1 // pred_region
      _
    $region33: #{encoder_forward.1} parent=1 // pred_fallthru
      _
    // Predicated region
    $region34: #{encoder_forward.1} parent=1 // pred_check
      _
    $region35: #{encoder_forward.1} parent=1 // pred_check_branch
      %55 = sbr.rel (0) target = $region37
    $region36: #{encoder_forward.1} parent=1 // pred_region
      %s57 = ssub.s32 2112, 2112
      %58 = vsyncadd [#allocation5], %s57
      %s59 = sshll.u32 [#allocation6], 4
      %s60 = int_to_ptr.vmem [resolvable:$true] %s59
      %65 = dma.hbm_to_vmem [thread:$0]  %s8, 2112, %s60, [#allocation5], 64, 64, 4
    $region37: #{encoder_forward.1} parent=1 // pred_fallthru
      _
    // Predicated region
    $region38: #{encoder_forward.1} parent=1 // pred_check
      _
    $region39: #{encoder_forward.1} parent=1 // pred_check_branch
      %67 = sbr.rel (0) target = $region41
    $region40: #{encoder_forward.1} parent=1 // pred_region
      %s69 = ssub.s32 16, 16
      %70 = vsyncadd [#allocation8], %s69
      %s72 = sshll.u32 [#allocation7], 4
      %s73 = int_to_ptr.vmem [resolvable:$true] %s72
      %75 = dma.hbm_to_vmem [thread:$0]  %s9, 16, %s73, [#allocation8]
    $region41: #{encoder_forward.1} parent=1 // pred_fallthru
      _
    // Predicated region
    $region42: #{encoder_forward.1} parent=1 // pred_check
      _
    $region43: #{encoder_forward.1} parent=1 // pred_check_branch
      %77 = sbr.rel (0) target = $region45
    $region44: #{encoder_forward.1} parent=1 // pred_region
      %s79 = ssub.s32 80, 80
      %80 = vsyncadd [#allocation8], %s79
      %s81 = sshll.u32 [#allocation9], 4
      %s82 = int_to_ptr.vmem [resolvable:$true] %s81
      %87 = dma.hbm_to_vmem [thread:$0]  %s10, 80, %s82, [#allocation8], 16, 16, 1
    $region45: #{encoder_forward.1} parent=1 // pred_fallthru
      _
    // Predicated region
    $region46: #{encoder_forward.1} parent=1 // pred_check
      _
    $region47: #{encoder_forward.1} parent=1 // pred_check_branch
      %89 = sbr.rel (0) target = $region49
    $region48: #{encoder_forward.1} parent=1 // pred_region
      %s91 = ssub.s32 38400, 38400
      %92 = vsyncadd [#allocation11], %s91
      %s93 = sshll.u32 [#allocation10], 4
      %s94 = int_to_ptr.vmem [resolvable:$true] %s93
      %99 = dma.hbm_to_vmem [thread:$0]  %s11, 38400, %s94, [#allocation11], 512, 512, 32
    $region49: #{encoder_forward.1} parent=1 // pred_fallthru
      _
    // Predicated region
    $region50: #{encoder_forward.1} parent=1 // pred_check
      _
    $region51: #{encoder_forward.1} parent=1 // pred_check_branch
      %101 = sbr.rel (0) target = $region53
    $region52: #{encoder_forward.1} parent=1 // pred_region
      %s103 = ssub.s32 128, 128
      %104 = vsyncadd [#allocation11], %s103
      %s106 = sshll.u32 [#allocation12], 4
      %s107 = int_to_ptr.vmem [resolvable:$true] %s106
      %109 = dma.hbm_to_vmem [thread:$0]  %s12, 128, %s107, [#allocation11]
    $region53: #{encoder_forward.1} parent=1 // pred_fallthru
      _
    // Predicated region
    $region54: #{encoder_forward.1} parent=1 // pred_check
      _
    $region55: #{encoder_forward.1} parent=1 // pred_check_branch
      %111 = sbr.rel (0) target = $region57
    $region56: #{encoder_forward.1} parent=1 // pred_region
      %112 = dma.done [#allocation3], 16
    $region57: #{encoder_forward.1} parent=1 // pred_fallthru
      _
    // Predicated region
    $region58: #{encoder_forward.1} parent=1 // pred_check
      _
    $region59: #{encoder_forward.1} parent=1 // pred_check_branch
      %114 = sbr.rel (0) target = $region61
    $region60: #{encoder_forward.1} parent=1 // pred_region
      %115 = dma.done [#allocation5], 16
    $region61: #{encoder_forward.1} parent=1 // pred_fallthru
      _
    // Predicated region
    $region62: #{encoder_forward.1} parent=1 // pred_check
      _
    $region63: #{encoder_forward.1} parent=1 // pred_check_branch
      %117 = sbr.rel (0) target = $region65
    $region64: #{encoder_forward.1} parent=1 // pred_region
      %118 = dma.done [#allocation5], 2112
    $region65: #{encoder_forward.1} parent=1 // pred_fallthru
      _
    // Predicated region
    $region66: #{encoder_forward.1} parent=1 // pred_check
      _
    $region67: #{encoder_forward.1} parent=1 // pred_check_branch
      %120 = sbr.rel (0) target = $region69
    $region68: #{encoder_forward.1} parent=1 // pred_region
      %121 = dma.done [#allocation8], 16
    $region69: #{encoder_forward.1} parent=1 // pred_fallthru
      _
    // Predicated region
    $region70: #{encoder_forward.1} parent=1 // pred_check
      _
    $region71: #{encoder_forward.1} parent=1 // pred_check_branch
      %123 = sbr.rel (0) target = $region73
    $region72: #{encoder_forward.1} parent=1 // pred_region
      %124 = dma.done [#allocation8], 80
    $region73: #{encoder_forward.1} parent=1 // pred_fallthru
      _
    // Predicated region
    $region74: #{encoder_forward.1} parent=1 // pred_check
      _
    $region75: #{encoder_forward.1} parent=1 // pred_check_branch
      %126 = sbr.rel (0) target = $region77
    $region76: #{encoder_forward.1} parent=1 // pred_region
      %127 = dma.done [#allocation11], 38400
    $region77: #{encoder_forward.1} parent=1 // pred_fallthru
      _
    // Predicated region
    $region78: #{encoder_forward.1} parent=1 // pred_check
      _
    $region79: #{encoder_forward.1} parent=1 // pred_check_branch
      %129 = sbr.rel (0) target = $region81
    $region80: #{encoder_forward.1} parent=1 // pred_region
      %130 = dma.done [#allocation11], 128
    $region81: #{encoder_forward.1} parent=1 // pred_fallthru
      _
    %v132 = vld [vmem:[%s0] sm:$0xf]
    %v133 = vld [vmem:[%s0 + $0x4] sm:$0xf]
    %v134 = vld [vmem:[%s0 + $0x8] sm:$0xf]
    %v135 = vld [vmem:[%s0 + $0xc] sm:$0xf]
    %v136 = vld [vmem:[%s0 + $0x10] sm:$0xf]
    %v137 = vld [vmem:[%s0 + $0x14] sm:$0xf]
    %v138 = vld [vmem:[%s0 + $0x18] sm:$0xf]
    %v139 = vld [vmem:[%s1] sm:$0xf]
    %v140 = vld [vmem:[%s1 + $0x4] sm:$0xf]
    %v141 = vld [vmem:[%s1 + $0x8] sm:$0xf]
    %v142 = vld [vmem:[%s1 + $0xc] sm:$0x3]
    %v147 = vunpack.c.l.b16 %v139
    %v148 = vunpack.c.l.b16 %v140
    %v149 = vunpack.c.l.b16 %v141
    %v150 = vunpack.c.l.b16 %v142
    %v151 = vpack.c.b16 %v148, %v147
    %v152 = vpack.c.b16 %v150, %v149
    %v160 = vunpack.c.l.b16 %v132
    %v161 = vunpack.c.l.b16 %v133
    %v162 = vunpack.c.l.b16 %v134
    %v163 = vunpack.c.l.b16 %v135
    %v164 = vunpack.c.l.b16 %v136
    %v165 = vunpack.c.l.b16 %v137
    %v166 = vunpack.c.l.b16 %v138
    %v167 = vpack.c.b16 %v161, %v160
    %v168 = vpack.c.b16 %v163, %v162
    %v169 = vpack.c.b16 %v165, %v164
    %v170 = vpack.c.b16 %v166, %v166
    %vm174 = vcmask 457728
    %v176 = vsel %vm174, %v151, 0
    %v179 = vsel %vm174, %v152, 0
    %vm181 = vcmask 1043456
    %v183 = vsel %vm181, %v170, 0
    %185 = vmatprep.subr.bf16.mxu0 0
    %186 = vmatpush1.bf16.msra.mxu0 %v167
    %187 = vmatprep.subr.bf16.mxu0 0
    %188 = vmatpush1.bf16.msra.mxu0 %v168
    %189 = vmatprep.subr.bf16.mxu0 0
    %190 = vmatpush1.bf16.msra.mxu0 %v169
    %191 = vmatprep.subr.bf16.mxu0 0
    %192 = vmatpush1.bf16.msra.mxu0 %v183
    %193 = vmatprep.subr.bf16.mxu0 0
    %194 = vmatpush1.bf16.msra.mxu0 0
    %195 = vmatprep.subr.bf16.mxu0 0
    %196 = vmatpush1.bf16.msra.mxu0 0
    %197 = vmatprep.subr.bf16.mxu0 0
    %198 = vmatpush1.bf16.msra.mxu0 0
    %199 = vmatprep.subr.bf16.mxu0 0
    %200 = vmatpush1.bf16.msra.mxu0 0
    %201 = vmatprep.subr.bf16.mxu0 0
    %202 = vmatpush1.bf16.msra.mxu0 0
    %203 = vmatprep.subr.bf16.mxu0 0
    %204 = vmatpush1.bf16.msra.mxu0 0
    %205 = vmatprep.subr.bf16.mxu0 0
    %206 = vmatpush1.bf16.msra.mxu0 0
    %207 = vmatprep.subr.bf16.mxu0 0
    %208 = vmatpush1.bf16.msra.mxu0 0
    %209 = vmatprep.subr.bf16.mxu0 0
    %210 = vmatpush1.bf16.msra.mxu0 0
    %211 = vmatprep.subr.bf16.mxu0 0
    %212 = vmatpush1.bf16.msra.mxu0 0
    %213 = vmatprep.subr.bf16.mxu0 0
    %214 = vmatpush1.bf16.msra.mxu0 0
    %215 = vmatprep.subr.bf16.mxu0 0
    %216 = vmatpush1.bf16.msra.mxu0 0
    %217 = vmatprep.mubr.bf16.mxu0 0
    %218 = vmatmul.mubr.bf16.gmra.mrb[0].mxu0 %v176
    %v219 = vpop.f32.mrb[0].mxu0
    %v220 = vadd.f32 0.0, %v219
    %v221 = vpop.f32.mrb[0].mxu0
    %v222 = vpop.f32.mrb[0].mxu0
    %v223 = vadd.f32 0.0, %v222
    %v224 = vpop.f32.mrb[0].mxu0
    %225 = vmatprep.mubr.bf16.mxu0 0
    %226 = vmatmul.mubr.bf16.gmra.mrb[0].mxu0 %v179
    %v227 = vpop.f32.mrb[0].mxu0
    %v228 = vadd.f32 0.0, %v227
    %v229 = vpop.f32.mrb[0].mxu0
    %v230 = vpop.f32.mrb[0].mxu0
    %v231 = vadd.f32 0.0, %v230
    %v232 = vpop.f32.mrb[0].mxu0
    %233 = vdwg.mxu0
    %v234 = vpack.c.bf16 %v223, %v220
    %v235 = vpack.c.bf16 %v231, %v228
    %v236 = vld [vmem:[%s2] sm:$0xf]
    %v237 = vld [vmem:[%s2 + $0x4] sm:$0xf]
    %v238 = vld [vmem:[%s2 + $0x8] sm:$0xf]
    %v239 = vld [vmem:[%s2 + $0xc] sm:$0xf]
    %v240 = vld [vmem:[%s2 + $0x10] sm:$0xf]
    %v241 = vld [vmem:[%s2 + $0x14] sm:$0xf]
    %v242 = vld [vmem:[%s2 + $0x18] sm:$0xf]
    %v243 = vld [vmem:[%s2 + $0x1c] sm:$0xf]
    %v244 = vld [vmem:[%s2 + $0x20] sm:$0xf]
    %v245 = vld [vmem:[%s2 + $0x24] sm:$0xf]
    %v246 = vld [vmem:[%s2 + $0x28] sm:$0x3]
    %s247 = scalar_lea.vmem %s1, 16
    %v248 = vld [vmem:[%s247] sm:$0xf]
    %v249 = vld [vmem:[%s247 + $0x4] sm:$0xf]
    %v250 = vld [vmem:[%s247 + $0x8] sm:$0xf]
    %v251 = vld [vmem:[%s247 + $0xc] sm:$0x3]
    %v256 = vunpack.c.l.b16 %v248
    %v257 = vunpack.c.l.b16 %v249
    %v258 = vunpack.c.l.b16 %v250
    %v259 = vunpack.c.l.b16 %v251
    %v260 = vpack.c.b16 %v257, %v256
    %v261 = vpack.c.b16 %v259, %v258
    %v263 = vsel %vm174, %v260, 0
    %v266 = vsel %vm174, %v261, 0
    %268 = vmatprep.subr.bf16.mxu0 0
    %269 = vmatpush1.bf16.msra.mxu0 %v167
    %270 = vmatprep.subr.bf16.mxu0 0
    %271 = vmatpush1.bf16.msra.mxu0 %v168
    %272 = vmatprep.subr.bf16.mxu0 0
    %273 = vmatpush1.bf16.msra.mxu0 %v169
    %274 = vmatprep.subr.bf16.mxu0 0
    %275 = vmatpush1.bf16.msra.mxu0 %v183
    %276 = vmatprep.subr.bf16.mxu0 0
    %277 = vmatpush1.bf16.msra.mxu0 0
    %278 = vmatprep.subr.bf16.mxu0 0
    %279 = vmatpush1.bf16.msra.mxu0 0
    %280 = vmatprep.subr.bf16.mxu0 0
    %281 = vmatpush1.bf16.msra.mxu0 0
    %282 = vmatprep.subr.bf16.mxu0 0
    %283 = vmatpush1.bf16.msra.mxu0 0
    %284 = vmatprep.subr.bf16.mxu0 0
    %285 = vmatpush1.bf16.msra.mxu0 0
    %286 = vmatprep.subr.bf16.mxu0 0
    %287 = vmatpush1.bf16.msra.mxu0 0
    %288 = vmatprep.subr.bf16.mxu0 0
    %289 = vmatpush1.bf16.msra.mxu0 0
    %290 = vmatprep.subr.bf16.mxu0 0
    %291 = vmatpush1.bf16.msra.mxu0 0
    %292 = vmatprep.subr.bf16.mxu0 0
    %293 = vmatpush1.bf16.msra.mxu0 0
    %294 = vmatprep.subr.bf16.mxu0 0
    %295 = vmatpush1.bf16.msra.mxu0 0
    %296 = vmatprep.subr.bf16.mxu0 0
    %297 = vmatpush1.bf16.msra.mxu0 0
    %298 = vmatprep.subr.bf16.mxu0 0
    %299 = vmatpush1.bf16.msra.mxu0 0
    %300 = vmatprep.mubr.bf16.mxu0 0
    %301 = vmatmul.mubr.bf16.gmra.mrb[0].mxu0 %v263
    %v302 = vpop.f32.mrb[0].mxu0
    %v303 = vadd.f32 0.0, %v302
    %v304 = vpop.f32.mrb[0].mxu0
    %v305 = vpop.f32.mrb[0].mxu0
    %v306 = vadd.f32 0.0, %v305
    %v307 = vpop.f32.mrb[0].mxu0
    %308 = vmatprep.mubr.bf16.mxu0 0
    %309 = vmatmul.mubr.bf16.gmra.mrb[0].mxu0 %v266
    %v310 = vpop.f32.mrb[0].mxu0
    %v311 = vadd.f32 0.0, %v310
    %v312 = vpop.f32.mrb[0].mxu0
    %v313 = vpop.f32.mrb[0].mxu0
    %v314 = vadd.f32 0.0, %v313
    %v315 = vpop.f32.mrb[0].mxu0
    %316 = vdwg.mxu0
    %v317 = vpack.c.bf16 %v306, %v303
    %v318 = vpack.c.bf16 %v314, %v311
    %s319 = scalar_lea.vmem %s2, 44
    %v320 = vld [vmem:[%s319] sm:$0xf]
    %v321 = vld [vmem:[%s319 + $0x4] sm:$0xf]
    %v322 = vld [vmem:[%s319 + $0x8] sm:$0xf]
    %v323 = vld [vmem:[%s319 + $0xc] sm:$0xf]
    %v324 = vld [vmem:[%s319 + $0x10] sm:$0xf]
    %v325 = vld [vmem:[%s319 + $0x14] sm:$0xf]
    %v326 = vld [vmem:[%s319 + $0x18] sm:$0xf]
    %v327 = vld [vmem:[%s319 + $0x1c] sm:$0xf]
    %v328 = vld [vmem:[%s319 + $0x20] sm:$0xf]
    %v329 = vld [vmem:[%s319 + $0x24] sm:$0xf]
    %v330 = vld [vmem:[%s319 + $0x28] sm:$0x3]
    %v342 = vunpack.c.l.b16 %v320
    %v343 = vunpack.c.l.b16 %v321
    %v344 = vunpack.c.l.b16 %v322
    %v345 = vunpack.c.l.b16 %v323
    %v346 = vunpack.c.l.b16 %v324
    %v347 = vunpack.c.l.b16 %v325
    %v348 = vunpack.c.l.b16 %v326
    %v349 = vunpack.c.l.b16 %v327
    %v350 = vunpack.c.l.b16 %v328
    %v351 = vunpack.c.l.b16 %v329
    %v352 = vunpack.c.l.b16 %v330
    %v353 = vpack.c.b16 %v343, %v342
    %v354 = vpack.c.b16 %v345, %v344
    %v355 = vpack.c.b16 %v347, %v346
    %v356 = vpack.c.b16 %v349, %v348
    %v357 = vpack.c.b16 %v351, %v350
    %v358 = vpack.c.b16 %v352, %v352
    %vm364 = vcmask 687104
    %v366 = vsel %vm364, %v317, 0
    %v369 = vsel %vm364, %v318, 0
    %vm371 = vcmask 1041408
    %v373 = vsel %vm371, %v358, 0
    %375 = vmatprep.subr.bf16.mxu0 0
    %376 = vmatpush1.bf16.msra.mxu0 %v353
    %377 = vmatprep.subr.bf16.mxu0 0
    %378 = vmatpush1.bf16.msra.mxu0 %v354
    %379 = vmatprep.subr.bf16.mxu0 0
    %380 = vmatpush1.bf16.msra.mxu0 %v355
    %381 = vmatprep.subr.bf16.mxu0 0
    %382 = vmatpush1.bf16.msra.mxu0 %v356
    %383 = vmatprep.subr.bf16.mxu0 0
    %384 = vmatpush1.bf16.msra.mxu0 %v357
    %385 = vmatprep.subr.bf16.mxu0 0
    %386 = vmatpush1.bf16.msra.mxu0 %v373
    %387 = vmatprep.subr.bf16.mxu0 0
    %388 = vmatpush1.bf16.msra.mxu0 0
    %389 = vmatprep.subr.bf16.mxu0 0
    %390 = vmatpush1.bf16.msra.mxu0 0
    %391 = vmatprep.subr.bf16.mxu0 0
    %392 = vmatpush1.bf16.msra.mxu0 0
    %393 = vmatprep.subr.bf16.mxu0 0
    %394 = vmatpush1.bf16.msra.mxu0 0
    %395 = vmatprep.subr.bf16.mxu0 0
    %396 = vmatpush1.bf16.msra.mxu0 0
    %397 = vmatprep.subr.bf16.mxu0 0
    %398 = vmatpush1.bf16.msra.mxu0 0
    %399 = vmatprep.subr.bf16.mxu0 0
    %400 = vmatpush1.bf16.msra.mxu0 0
    %401 = vmatprep.subr.bf16.mxu0 0
    %402 = vmatpush1.bf16.msra.mxu0 0
    %403 = vmatprep.subr.bf16.mxu0 0
    %404 = vmatpush1.bf16.msra.mxu0 0
    %405 = vmatprep.subr.bf16.mxu0 0
    %406 = vmatpush1.bf16.msra.mxu0 0
    %407 = vmatprep.mubr.bf16.mxu0 0
    %408 = vmatmul.mubr.bf16.gmra.mrb[0].mxu0 %v366
    %v409 = vpop.f32.mrb[0].mxu0
    %v410 = vadd.f32 0.0, %v409
    %v411 = vpop.f32.mrb[0].mxu0
    %v412 = vpop.f32.mrb[0].mxu0
    %v413 = vadd.f32 0.0, %v412
    %v414 = vpop.f32.mrb[0].mxu0
    %415 = vmatprep.mubr.bf16.mxu0 0
    %416 = vmatmul.mubr.bf16.gmra.mrb[0].mxu0 %v369
    %v417 = vpop.f32.mrb[0].mxu0
    %v418 = vadd.f32 0.0, %v417
    %v419 = vpop.f32.mrb[0].mxu0
    %v420 = vpop.f32.mrb[0].mxu0
    %v421 = vadd.f32 0.0, %v420
    %v422 = vpop.f32.mrb[0].mxu0
    %423 = vdwg.mxu0
    %v435 = vunpack.c.l.b16 %v236
    %v436 = vunpack.c.l.b16 %v237
    %v437 = vunpack.c.l.b16 %v238
    %v438 = vunpack.c.l.b16 %v239
    %v439 = vunpack.c.l.b16 %v240
    %v440 = vunpack.c.l.b16 %v241
    %v441 = vunpack.c.l.b16 %v242
    %v442 = vunpack.c.l.b16 %v243
    %v443 = vunpack.c.l.b16 %v244
    %v444 = vunpack.c.l.b16 %v245
    %v445 = vunpack.c.l.b16 %v246
    %v446 = vpack.c.b16 %v436, %v435
    %v447 = vpack.c.b16 %v438, %v437
    %v448 = vpack.c.b16 %v440, %v439
    %v449 = vpack.c.b16 %v442, %v441
    %v450 = vpack.c.b16 %v444, %v443
    %v451 = vpack.c.b16 %v445, %v445
    %v458 = vsel %vm364, %v234, 0
    %v461 = vsel %vm364, %v235, 0
    %v464 = vsel %vm371, %v451, 0
    %466 = vmatprep.subr.bf16.mxu0 0
    %467 = vmatpush1.bf16.msra.mxu0 %v446
    %468 = vmatprep.subr.bf16.mxu0 0
    %469 = vmatpush1.bf16.msra.mxu0 %v447
    %470 = vmatprep.subr.bf16.mxu0 0
    %471 = vmatpush1.bf16.msra.mxu0 %v448
    %472 = vmatprep.subr.bf16.mxu0 0
    %473 = vmatpush1.bf16.msra.mxu0 %v449
    %474 = vmatprep.subr.bf16.mxu0 0
    %475 = vmatpush1.bf16.msra.mxu0 %v450
    %476 = vmatprep.subr.bf16.mxu0 0
    %477 = vmatpush1.bf16.msra.mxu0 %v464
    %478 = vmatprep.subr.bf16.mxu0 0
    %479 = vmatpush1.bf16.msra.mxu0 0
    %480 = vmatprep.subr.bf16.mxu0 0
    %481 = vmatpush1.bf16.msra.mxu0 0
    %482 = vmatprep.subr.bf16.mxu0 0
    %483 = vmatpush1.bf16.msra.mxu0 0
    %484 = vmatprep.subr.bf16.mxu0 0
    %485 = vmatpush1.bf16.msra.mxu0 0
    %486 = vmatprep.subr.bf16.mxu0 0
    %487 = vmatpush1.bf16.msra.mxu0 0
    %488 = vmatprep.subr.bf16.mxu0 0
    %489 = vmatpush1.bf16.msra.mxu0 0
    %490 = vmatprep.subr.bf16.mxu0 0
    %491 = vmatpush1.bf16.msra.mxu0 0
    %492 = vmatprep.subr.bf16.mxu0 0
    %493 = vmatpush1.bf16.msra.mxu0 0
    %494 = vmatprep.subr.bf16.mxu0 0
    %495 = vmatpush1.bf16.msra.mxu0 0
    %496 = vmatprep.subr.bf16.mxu0 0
    %497 = vmatpush1.bf16.msra.mxu0 0
    %498 = vmatprep.mubr.bf16.mxu0 0
    %499 = vmatmul.mubr.bf16.gmra.mrb[0].mxu0 %v458
    %v500 = vpop.f32.mrb[0].mxu0
    %v501 = vadd.f32 %v410, %v500
    %v502 = vpop.f32.mrb[0].mxu0
    %v503 = vpop.f32.mrb[0].mxu0
    %v504 = vadd.f32 %v413, %v503
    %v505 = vpop.f32.mrb[0].mxu0
    %506 = vmatprep.mubr.bf16.mxu0 0
    %507 = vmatmul.mubr.bf16.gmra.mrb[0].mxu0 %v461
    %v508 = vpop.f32.mrb[0].mxu0
    %v509 = vadd.f32 %v418, %v508
    %v510 = vpop.f32.mrb[0].mxu0
    %v511 = vpop.f32.mrb[0].mxu0
    %v512 = vadd.f32 %v421, %v511
    %v513 = vpop.f32.mrb[0].mxu0
    %514 = vdwg.mxu0
    %s515 = scalar_lea.vmem %s1, 32
    %v516 = vld [vmem:[%s515] sm:$0xf]
    %v517 = vld [vmem:[%s515 + $0x4] sm:$0xf]
    %v518 = vld [vmem:[%s515 + $0x8] sm:$0xf]
    %v519 = vld [vmem:[%s515 + $0xc] sm:$0x3]
    %v524 = vunpack.c.l.b16 %v516
    %v525 = vunpack.c.l.b16 %v517
    %v526 = vunpack.c.l.b16 %v518
    %v527 = vunpack.c.l.b16 %v519
    %v528 = vpack.c.b16 %v525, %v524
    %v529 = vpack.c.b16 %v527, %v526
    %v531 = vsel %vm174, %v528, 0
    %v534 = vsel %vm174, %v529, 0
    %536 = vmatprep.subr.bf16.mxu0 0
    %537 = vmatpush1.bf16.msra.mxu0 %v167
    %538 = vmatprep.subr.bf16.mxu0 0
    %539 = vmatpush1.bf16.msra.mxu0 %v168
    %540 = vmatprep.subr.bf16.mxu0 0
    %541 = vmatpush1.bf16.msra.mxu0 %v169
    %542 = vmatprep.subr.bf16.mxu0 0
    %543 = vmatpush1.bf16.msra.mxu0 %v183
    %544 = vmatprep.subr.bf16.mxu0 0
    %545 = vmatpush1.bf16.msra.mxu0 0
    %546 = vmatprep.subr.bf16.mxu0 0
    %547 = vmatpush1.bf16.msra.mxu0 0
    %548 = vmatprep.subr.bf16.mxu0 0
    %549 = vmatpush1.bf16.msra.mxu0 0
    %550 = vmatprep.subr.bf16.mxu0 0
    %551 = vmatpush1.bf16.msra.mxu0 0
    %552 = vmatprep.subr.bf16.mxu0 0
    %553 = vmatpush1.bf16.msra.mxu0 0
    %554 = vmatprep.subr.bf16.mxu0 0
    %555 = vmatpush1.bf16.msra.mxu0 0
    %556 = vmatprep.subr.bf16.mxu0 0
    %557 = vmatpush1.bf16.msra.mxu0 0
    %558 = vmatprep.subr.bf16.mxu0 0
    %559 = vmatpush1.bf16.msra.mxu0 0
    %560 = vmatprep.subr.bf16.mxu0 0
    %561 = vmatpush1.bf16.msra.mxu0 0
    %562 = vmatprep.subr.bf16.mxu0 0
    %563 = vmatpush1.bf16.msra.mxu0 0
    %564 = vmatprep.subr.bf16.mxu0 0
    %565 = vmatpush1.bf16.msra.mxu0 0
    %566 = vmatprep.subr.bf16.mxu0 0
    %567 = vmatpush1.bf16.msra.mxu0 0
    %568 = vmatprep.mubr.bf16.mxu0 0
    %569 = vmatmul.mubr.bf16.gmra.mrb[0].mxu0 %v531
    %v570 = vpop.f32.mrb[0].mxu0
    %v571 = vadd.f32 0.0, %v570
    %v572 = vpop.f32.mrb[0].mxu0
    %v573 = vpop.f32.mrb[0].mxu0
    %v574 = vadd.f32 0.0, %v573
    %v575 = vpop.f32.mrb[0].mxu0
    %576 = vmatprep.mubr.bf16.mxu0 0
    %577 = vmatmul.mubr.bf16.gmra.mrb[0].mxu0 %v534
    %v578 = vpop.f32.mrb[0].mxu0
    %v579 = vadd.f32 0.0, %v578
    %v580 = vpop.f32.mrb[0].mxu0
    %v581 = vpop.f32.mrb[0].mxu0
    %v582 = vadd.f32 0.0, %v581
    %v583 = vpop.f32.mrb[0].mxu0
    %584 = vdwg.mxu0
    %v585 = vpack.c.bf16 %v574, %v571
    %v586 = vpack.c.bf16 %v582, %v579
    %s587 = scalar_lea.vmem %s2, 88
    %v588 = vld [vmem:[%s587] sm:$0xf]
    %v589 = vld [vmem:[%s587 + $0x4] sm:$0xf]
    %v590 = vld [vmem:[%s587 + $0x8] sm:$0xf]
    %v591 = vld [vmem:[%s587 + $0xc] sm:$0xf]
    %v592 = vld [vmem:[%s587 + $0x10] sm:$0xf]
    %v593 = vld [vmem:[%s587 + $0x14] sm:$0xf]
    %v594 = vld [vmem:[%s587 + $0x18] sm:$0xf]
    %v595 = vld [vmem:[%s587 + $0x1c] sm:$0xf]
    %v596 = vld [vmem:[%s587 + $0x20] sm:$0xf]
    %v597 = vld [vmem:[%s587 + $0x24] sm:$0xf]
    %v598 = vld [vmem:[%s587 + $0x28] sm:$0x3]
    %v610 = vunpack.c.l.b16 %v588
    %v611 = vunpack.c.l.b16 %v589
    %v612 = vunpack.c.l.b16 %v590
    %v613 = vunpack.c.l.b16 %v591
    %v614 = vunpack.c.l.b16 %v592
    %v615 = vunpack.c.l.b16 %v593
    %v616 = vunpack.c.l.b16 %v594
    %v617 = vunpack.c.l.b16 %v595
    %v618 = vunpack.c.l.b16 %v596
    %v619 = vunpack.c.l.b16 %v597
    %v620 = vunpack.c.l.b16 %v598
    %v621 = vpack.c.b16 %v611, %v610
    %v622 = vpack.c.b16 %v613, %v612
    %v623 = vpack.c.b16 %v615, %v614
    %v624 = vpack.c.b16 %v617, %v616
    %v625 = vpack.c.b16 %v619, %v618
    %v626 = vpack.c.b16 %v620, %v620
    %v633 = vsel %vm364, %v585, 0
    %v636 = vsel %vm364, %v586, 0
    %v639 = vsel %vm371, %v626, 0
    %641 = vmatprep.subr.bf16.mxu0 0
    %642 = vmatpush1.bf16.msra.mxu0 %v621
    %643 = vmatprep.subr.bf16.mxu0 0
    %644 = vmatpush1.bf16.msra.mxu0 %v622
    %645 = vmatprep.subr.bf16.mxu0 0
    %646 = vmatpush1.bf16.msra.mxu0 %v623
    %647 = vmatprep.subr.bf16.mxu0 0
    %648 = vmatpush1.bf16.msra.mxu0 %v624
    %649 = vmatprep.subr.bf16.mxu0 0
    %650 = vmatpush1.bf16.msra.mxu0 %v625
    %651 = vmatprep.subr.bf16.mxu0 0
    %652 = vmatpush1.bf16.msra.mxu0 %v639
    %653 = vmatprep.subr.bf16.mxu0 0
    %654 = vmatpush1.bf16.msra.mxu0 0
    %655 = vmatprep.subr.bf16.mxu0 0
    %656 = vmatpush1.bf16.msra.mxu0 0
    %657 = vmatprep.subr.bf16.mxu0 0
    %658 = vmatpush1.bf16.msra.mxu0 0
    %659 = vmatprep.subr.bf16.mxu0 0
    %660 = vmatpush1.bf16.msra.mxu0 0
    %661 = vmatprep.subr.bf16.mxu0 0
    %662 = vmatpush1.bf16.msra.mxu0 0
    %663 = vmatprep.subr.bf16.mxu0 0
    %664 = vmatpush1.bf16.msra.mxu0 0
    %665 = vmatprep.subr.bf16.mxu0 0
    %666 = vmatpush1.bf16.msra.mxu0 0
    %667 = vmatprep.subr.bf16.mxu0 0
    %668 = vmatpush1.bf16.msra.mxu0 0
    %669 = vmatprep.subr.bf16.mxu0 0
    %670 = vmatpush1.bf16.msra.mxu0 0
    %671 = vmatprep.subr.bf16.mxu0 0
    %672 = vmatpush1.bf16.msra.mxu0 0
    %673 = vmatprep.mubr.bf16.mxu0 0
    %674 = vmatmul.mubr.bf16.gmra.mrb[0].mxu0 %v633
    %v675 = vpop.f32.mrb[0].mxu0
    %v676 = vadd.f32 0.0, %v675
    %v677 = vpop.f32.mrb[0].mxu0
    %v678 = vpop.f32.mrb[0].mxu0
    %v679 = vadd.f32 0.0, %v678
    %v680 = vpop.f32.mrb[0].mxu0
    %681 = vmatprep.mubr.bf16.mxu0 0
    %682 = vmatmul.mubr.bf16.gmra.mrb[0].mxu0 %v636
    %v683 = vpop.f32.mrb[0].mxu0
    %v684 = vadd.f32 0.0, %v683
    %v685 = vpop.f32.mrb[0].mxu0
    %v686 = vpop.f32.mrb[0].mxu0
    %v687 = vadd.f32 0.0, %v686
    %v688 = vpop.f32.mrb[0].mxu0
    %689 = vdwg.mxu0
    %v690 = vadd.f32 %v501, %v676
    %v691 = vadd.f32 %v504, %v679
    %v692 = vadd.f32 %v509, %v684
    %v693 = vadd.f32 %v512, %v687
    %s694 = scalar_lea.vmem %s1, 48
    %v695 = vld [vmem:[%s694] sm:$0xf]
    %v696 = vld [vmem:[%s694 + $0x4] sm:$0xf]
    %v697 = vld [vmem:[%s694 + $0x8] sm:$0xf]
    %v698 = vld [vmem:[%s694 + $0xc] sm:$0x3]
    %v703 = vunpack.c.l.b16 %v695
    %v704 = vunpack.c.l.b16 %v696
    %v705 = vunpack.c.l.b16 %v697
    %v706 = vunpack.c.l.b16 %v698
    %v707 = vpack.c.b16 %v704, %v703
    %v708 = vpack.c.b16 %v706, %v705
    %v710 = vsel %vm174, %v707, 0
    %v713 = vsel %vm174, %v708, 0
    %715 = vmatprep.subr.bf16.mxu0 0
    %716 = vmatpush1.bf16.msra.mxu0 %v167
    %717 = vmatprep.subr.bf16.mxu0 0
    %718 = vmatpush1.bf16.msra.mxu0 %v168
    %719 = vmatprep.subr.bf16.mxu0 0
    %720 = vmatpush1.bf16.msra.mxu0 %v169
    %721 = vmatprep.subr.bf16.mxu0 0
    %722 = vmatpush1.bf16.msra.mxu0 %v183
    %723 = vmatprep.subr.bf16.mxu0 0
    %724 = vmatpush1.bf16.msra.mxu0 0
    %725 = vmatprep.subr.bf16.mxu0 0
    %726 = vmatpush1.bf16.msra.mxu0 0
    %727 = vmatprep.subr.bf16.mxu0 0
    %728 = vmatpush1.bf16.msra.mxu0 0
    %729 = vmatprep.subr.bf16.mxu0 0
    %730 = vmatpush1.bf16.msra.mxu0 0
    %731 = vmatprep.subr.bf16.mxu0 0
    %732 = vmatpush1.bf16.msra.mxu0 0
    %733 = vmatprep.subr.bf16.mxu0 0
    %734 = vmatpush1.bf16.msra.mxu0 0
    %735 = vmatprep.subr.bf16.mxu0 0
    %736 = vmatpush1.bf16.msra.mxu0 0
    %737 = vmatprep.subr.bf16.mxu0 0
    %738 = vmatpush1.bf16.msra.mxu0 0
    %739 = vmatprep.subr.bf16.mxu0 0
    %740 = vmatpush1.bf16.msra.mxu0 0
    %741 = vmatprep.subr.bf16.mxu0 0
    %742 = vmatpush1.bf16.msra.mxu0 0
    %743 = vmatprep.subr.bf16.mxu0 0
    %744 = vmatpush1.bf16.msra.mxu0 0
    %745 = vmatprep.subr.bf16.mxu0 0
    %746 = vmatpush1.bf16.msra.mxu0 0
    %747 = vmatprep.mubr.bf16.mxu0 0
    %748 = vmatmul.mubr.bf16.gmra.mrb[0].mxu0 %v710
    %v749 = vpop.f32.mrb[0].mxu0
    %v750 = vadd.f32 0.0, %v749
    %v751 = vpop.f32.mrb[0].mxu0
    %v752 = vpop.f32.mrb[0].mxu0
    %v753 = vadd.f32 0.0, %v752
    %v754 = vpop.f32.mrb[0].mxu0
    %755 = vmatprep.mubr.bf16.mxu0 0
    %756 = vmatmul.mubr.bf16.gmra.mrb[0].mxu0 %v713
    %v757 = vpop.f32.mrb[0].mxu0
    %v758 = vadd.f32 0.0, %v757
    %v759 = vpop.f32.mrb[0].mxu0
    %v760 = vpop.f32.mrb[0].mxu0
    %v761 = vadd.f32 0.0, %v760
    %v762 = vpop.f32.mrb[0].mxu0
    %763 = vdwg.mxu0
    %v764 = vpack.c.bf16 %v753, %v750
    %v765 = vpack.c.bf16 %v761, %v758
    %s766 = scalar_lea.vmem %s2, 132
    %v767 = vld [vmem:[%s766] sm:$0xf]
    %v768 = vld [vmem:[%s766 + $0x4] sm:$0xf]
    %v769 = vld [vmem:[%s766 + $0x8] sm:$0xf]
    %v770 = vld [vmem:[%s766 + $0xc] sm:$0xf]
    %v771 = vld [vmem:[%s766 + $0x10] sm:$0xf]
    %v772 = vld [vmem:[%s766 + $0x14] sm:$0xf]
    %v773 = vld [vmem:[%s766 + $0x18] sm:$0xf]
    %v774 = vld [vmem:[%s766 + $0x1c] sm:$0xf]
    %v775 = vld [vmem:[%s766 + $0x20] sm:$0xf]
    %v776 = vld [vmem:[%s766 + $0x24] sm:$0xf]
    %v777 = vld [vmem:[%s766 + $0x28] sm:$0x3]
    %v789 = vunpack.c.l.b16 %v767
    %v790 = vunpack.c.l.b16 %v768
    %v791 = vunpack.c.l.b16 %v769
    %v792 = vunpack.c.l.b16 %v770
    %v793 = vunpack.c.l.b16 %v771
    %v794 = vunpack.c.l.b16 %v772
    %v795 = vunpack.c.l.b16 %v773
    %v796 = vunpack.c.l.b16 %v774
    %v797 = vunpack.c.l.b16 %v775
    %v798 = vunpack.c.l.b16 %v776
    %v799 = vunpack.c.l.b16 %v777
    %v800 = vpack.c.b16 %v790, %v789
    %v801 = vpack.c.b16 %v792, %v791
    %v802 = vpack.c.b16 %v794, %v793
    %v803 = vpack.c.b16 %v796, %v795
    %v804 = vpack.c.b16 %v798, %v797
    %v805 = vpack.c.b16 %v799, %v799
    %v812 = vsel %vm364, %v764, 0
    %v815 = vsel %vm364, %v765, 0
    %v818 = vsel %vm371, %v805, 0
    %820 = vmatprep.subr.bf16.mxu0 0
    %821 = vmatpush1.bf16.msra.mxu0 %v800
    %822 = vmatprep.subr.bf16.mxu0 0
    %823 = vmatpush1.bf16.msra.mxu0 %v801
    %824 = vmatprep.subr.bf16.mxu0 0
    %825 = vmatpush1.bf16.msra.mxu0 %v802
    %826 = vmatprep.subr.bf16.mxu0 0
    %827 = vmatpush1.bf16.msra.mxu0 %v803
    %828 = vmatprep.subr.bf16.mxu0 0
    %829 = vmatpush1.bf16.msra.mxu0 %v804
    %830 = vmatprep.subr.bf16.mxu0 0
    %831 = vmatpush1.bf16.msra.mxu0 %v818
    %832 = vmatprep.subr.bf16.mxu0 0
    %833 = vmatpush1.bf16.msra.mxu0 0
    %834 = vmatprep.subr.bf16.mxu0 0
    %835 = vmatpush1.bf16.msra.mxu0 0
    %836 = vmatprep.subr.bf16.mxu0 0
    %837 = vmatpush1.bf16.msra.mxu0 0
    %838 = vmatprep.subr.bf16.mxu0 0
    %839 = vmatpush1.bf16.msra.mxu0 0
    %840 = vmatprep.subr.bf16.mxu0 0
    %841 = vmatpush1.bf16.msra.mxu0 0
    %842 = vmatprep.subr.bf16.mxu0 0
    %843 = vmatpush1.bf16.msra.mxu0 0
    %844 = vmatprep.subr.bf16.mxu0 0
    %845 = vmatpush1.bf16.msra.mxu0 0
    %846 = vmatprep.subr.bf16.mxu0 0
    %847 = vmatpush1.bf16.msra.mxu0 0
    %848 = vmatprep.subr.bf16.mxu0 0
    %849 = vmatpush1.bf16.msra.mxu0 0
    %850 = vmatprep.subr.bf16.mxu0 0
    %851 = vmatpush1.bf16.msra.mxu0 0
    %852 = vmatprep.mubr.bf16.mxu0 0
    %853 = vmatmul.mubr.bf16.gmra.mrb[0].mxu0 %v812
    %v854 = vpop.f32.mrb[0].mxu0
    %v855 = vadd.f32 0.0, %v854
    %v856 = vpop.f32.mrb[0].mxu0
    %v857 = vpop.f32.mrb[0].mxu0
    %v858 = vadd.f32 0.0, %v857
    %v859 = vpop.f32.mrb[0].mxu0
    %860 = vmatprep.mubr.bf16.mxu0 0
    %861 = vmatmul.mubr.bf16.gmra.mrb[0].mxu0 %v815
    %v862 = vpop.f32.mrb[0].mxu0
    %v863 = vadd.f32 0.0, %v862
    %v864 = vpop.f32.mrb[0].mxu0
    %v865 = vpop.f32.mrb[0].mxu0
    %v866 = vadd.f32 0.0, %v865
    %v867 = vpop.f32.mrb[0].mxu0
    %868 = vdwg.mxu0
    %v869 = vadd.f32 %v690, %v855
    %v870 = vadd.f32 %v691, %v858
    %v871 = vadd.f32 %v692, %v863
    %v872 = vadd.f32 %v693, %v866
    %v873 = vld [vmem:[#allocation2] sm:$0x1]
    %v875 = vlaneseq
    %v876 = vshrl.u32 %v875, 7
    %v877 = vsub.s32 0, %v876
    %v878 = vrot.slane %v873, %v877
    %v880 = vadd.f32 %v869, %v878
    %v881 = vadd.f32 %v870, %v878
    %v882 = vadd.f32 %v871, %v878
    %v883 = vadd.f32 %v872, %v878
    %v884 = vmax.f32 %v880, 0.0
    %v885 = vmax.f32 %v881, 0.0
    %v886 = vmax.f32 %v882, 0.0
    %v887 = vmax.f32 %v883, 0.0
    %v888 = vpack.c.bf16 %v885, %v884
    %v889 = vpack.c.bf16 %v887, %v886
    %v890 = vld [vmem:[%s4] sm:$0xf]
    %v891 = vld [vmem:[%s4 + $0x4] sm:$0x7]
    %v894 = vunpack.c.l.b16 %v890
    %v895 = vunpack.c.l.b16 %v891
    %v896 = vpack.c.b16 %v895, %v894
    %vm897 = vcmask 228352
    %v899 = vsel %vm897, %v896, 0
    %vm901 = vcmask 1045504
    %v903 = vsel %vm901, %v889, 0
    %905 = vmatprep.subr.bf16.mxu0 0
    %906 = vmatpush1.bf16.msra.mxu0 %v888
    %907 = vmatprep.subr.bf16.mxu0 0
    %908 = vmatpush1.bf16.msra.mxu0 %v903
    %909 = vmatprep.subr.bf16.mxu0 0
    %910 = vmatpush1.bf16.msra.mxu0 0
    %911 = vmatprep.subr.bf16.mxu0 0
    %912 = vmatpush1.bf16.msra.mxu0 0
    %913 = vmatprep.subr.bf16.mxu0 0
    %914 = vmatpush1.bf16.msra.mxu0 0
    %915 = vmatprep.subr.bf16.mxu0 0
    %916 = vmatpush1.bf16.msra.mxu0 0
    %917 = vmatprep.subr.bf16.mxu0 0
    %918 = vmatpush1.bf16.msra.mxu0 0
    %919 = vmatprep.subr.bf16.mxu0 0
    %920 = vmatpush1.bf16.msra.mxu0 0
    %921 = vmatprep.subr.bf16.mxu0 0
    %922 = vmatpush1.bf16.msra.mxu0 0
    %923 = vmatprep.subr.bf16.mxu0 0
    %924 = vmatpush1.bf16.msra.mxu0 0
    %925 = vmatprep.subr.bf16.mxu0 0
    %926 = vmatpush1.bf16.msra.mxu0 0
    %927 = vmatprep.subr.bf16.mxu0 0
    %928 = vmatpush1.bf16.msra.mxu0 0
    %929 = vmatprep.subr.bf16.mxu0 0
    %930 = vmatpush1.bf16.msra.mxu0 0
    %931 = vmatprep.subr.bf16.mxu0 0
    %932 = vmatpush1.bf16.msra.mxu0 0
    %933 = vmatprep.subr.bf16.mxu0 0
    %934 = vmatpush1.bf16.msra.mxu0 0
    %935 = vmatprep.subr.bf16.mxu0 0
    %936 = vmatpush1.bf16.msra.mxu0 0
    %937 = vmatprep.mubr.bf16.mxu0 0
    %938 = vmatmul.mubr.bf16.gmra.mrb[0].mxu0 %v899
    %v939 = vpop.f32.mrb[0].mxu0
    %v940 = vadd.f32 0.0, %v939
    %v941 = vpop.f32.mrb[0].mxu0
    %v942 = vpop.f32.mrb[0].mxu0
    %v943 = vadd.f32 0.0, %v942
    %v944 = vpop.f32.mrb[0].mxu0
    %945 = vdwg.mxu0
    %v946 = vpack.c.bf16 %v943, %v940
    %v947 = vld [vmem:[%s5] sm:$0xf]
    %v948 = vld [vmem:[%s5 + $0x4] sm:$0xf]
    %v949 = vld [vmem:[%s5 + $0x8] sm:$0xf]
    %v950 = vld [vmem:[%s5 + $0xc] sm:$0xf]
    %v951 = vld [vmem:[%s5 + $0x10] sm:$0xf]
    %v952 = vld [vmem:[%s5 + $0x14] sm:$0xf]
    %v953 = vld [vmem:[%s5 + $0x18] sm:$0xf]
    %v954 = vld [vmem:[%s5 + $0x1c] sm:$0xf]
    %v955 = vld [vmem:[%s5 + $0x20] sm:$0xf]
    %v956 = vld [vmem:[%s5 + $0x24] sm:$0xf]
    %v957 = vld [vmem:[%s5 + $0x28] sm:$0x3]
    %s958 = scalar_lea.vmem %s4, 8
    %v959 = vld [vmem:[%s958] sm:$0xf]
    %v960 = vld [vmem:[%s958 + $0x4] sm:$0x7]
    %v963 = vunpack.c.l.b16 %v959
    %v964 = vunpack.c.l.b16 %v960
    %v965 = vpack.c.b16 %v964, %v963
    %v967 = vsel %vm897, %v965, 0
    %969 = vmatprep.subr.bf16.mxu0 0
    %970 = vmatpush1.bf16.msra.mxu0 %v888
    %971 = vmatprep.subr.bf16.mxu0 0
    %972 = vmatpush1.bf16.msra.mxu0 %v903
    %973 = vmatprep.subr.bf16.mxu0 0
    %974 = vmatpush1.bf16.msra.mxu0 0
    %975 = vmatprep.subr.bf16.mxu0 0
    %976 = vmatpush1.bf16.msra.mxu0 0
    %977 = vmatprep.subr.bf16.mxu0 0
    %978 = vmatpush1.bf16.msra.mxu0 0
    %979 = vmatprep.subr.bf16.mxu0 0
    %980 = vmatpush1.bf16.msra.mxu0 0
    %981 = vmatprep.subr.bf16.mxu0 0
    %982 = vmatpush1.bf16.msra.mxu0 0
    %983 = vmatprep.subr.bf16.mxu0 0
    %984 = vmatpush1.bf16.msra.mxu0 0
    %985 = vmatprep.subr.bf16.mxu0 0
    %986 = vmatpush1.bf16.msra.mxu0 0
    %987 = vmatprep.subr.bf16.mxu0 0
    %988 = vmatpush1.bf16.msra.mxu0 0
    %989 = vmatprep.subr.bf16.mxu0 0
    %990 = vmatpush1.bf16.msra.mxu0 0
    %991 = vmatprep.subr.bf16.mxu0 0
    %992 = vmatpush1.bf16.msra.mxu0 0
    %993 = vmatprep.subr.bf16.mxu0 0
    %994 = vmatpush1.bf16.msra.mxu0 0
    %995 = vmatprep.subr.bf16.mxu0 0
    %996 = vmatpush1.bf16.msra.mxu0 0
    %997 = vmatprep.subr.bf16.mxu0 0
    %998 = vmatpush1.bf16.msra.mxu0 0
    %999 = vmatprep.subr.bf16.mxu0 0
    %1000 = vmatpush1.bf16.msra.mxu0 0
    %1001 = vmatprep.mubr.bf16.mxu0 0
    %1002 = vmatmul.mubr.bf16.gmra.mrb[0].mxu0 %v967
    %v1003 = vpop.f32.mrb[0].mxu0
    %v1004 = vadd.f32 0.0, %v1003
    %v1005 = vpop.f32.mrb[0].mxu0
    %v1006 = vpop.f32.mrb[0].mxu0
    %v1007 = vadd.f32 0.0, %v1006
    %v1008 = vpop.f32.mrb[0].mxu0
    %1009 = vdwg.mxu0
    %v1010 = vpack.c.bf16 %v1007, %v1004
    %s1011 = scalar_lea.vmem %s5, 44
    %v1012 = vld [vmem:[%s1011] sm:$0xf]
    %v1013 = vld [vmem:[%s1011 + $0x4] sm:$0xf]
    %v1014 = vld [vmem:[%s1011 + $0x8] sm:$0xf]
    %v1015 = vld [vmem:[%s1011 + $0xc] sm:$0xf]
    %v1016 = vld [vmem:[%s1011 + $0x10] sm:$0xf]
    %v1017 = vld [vmem:[%s1011 + $0x14] sm:$0xf]
    %v1018 = vld [vmem:[%s1011 + $0x18] sm:$0xf]
    %v1019 = vld [vmem:[%s1011 + $0x1c] sm:$0xf]
    %v1020 = vld [vmem:[%s1011 + $0x20] sm:$0xf]
    %v1021 = vld [vmem:[%s1011 + $0x24] sm:$0xf]
    %v1022 = vld [vmem:[%s1011 + $0x28] sm:$0x3]
    %v1034 = vunpack.c.l.b16 %v1012
    %v1035 = vunpack.c.l.b16 %v1013
    %v1036 = vunpack.c.l.b16 %v1014
    %v1037 = vunpack.c.l.b16 %v1015
    %v1038 = vunpack.c.l.b16 %v1016
    %v1039 = vunpack.c.l.b16 %v1017
    %v1040 = vunpack.c.l.b16 %v1018
    %v1041 = vunpack.c.l.b16 %v1019
    %v1042 = vunpack.c.l.b16 %v1020
    %v1043 = vunpack.c.l.b16 %v1021
    %v1044 = vunpack.c.l.b16 %v1022
    %v1045 = vpack.c.b16 %v1035, %v1034
    %v1046 = vpack.c.b16 %v1037, %v1036
    %v1047 = vpack.c.b16 %v1039, %v1038
    %v1048 = vpack.c.b16 %v1041, %v1040
    %v1049 = vpack.c.b16 %v1043, %v1042
    %v1050 = vpack.c.b16 %v1044, %v1044
    %v1057 = vsel %vm364, %v1010, 0
    %v1060 = vsel %vm371, %v1050, 0
    %1062 = vmatprep.subr.bf16.mxu0 0
    %1063 = vmatpush1.bf16.msra.mxu0 %v1045
    %1064 = vmatprep.subr.bf16.mxu0 0
    %1065 = vmatpush1.bf16.msra.mxu0 %v1046
    %1066 = vmatprep.subr.bf16.mxu0 0
    %1067 = vmatpush1.bf16.msra.mxu0 %v1047
    %1068 = vmatprep.subr.bf16.mxu0 0
    %1069 = vmatpush1.bf16.msra.mxu0 %v1048
    %1070 = vmatprep.subr.bf16.mxu0 0
    %1071 = vmatpush1.bf16.msra.mxu0 %v1049
    %1072 = vmatprep.subr.bf16.mxu0 0
    %1073 = vmatpush1.bf16.msra.mxu0 %v1060
    %1074 = vmatprep.subr.bf16.mxu0 0
    %1075 = vmatpush1.bf16.msra.mxu0 0
    %1076 = vmatprep.subr.bf16.mxu0 0
    %1077 = vmatpush1.bf16.msra.mxu0 0
    %1078 = vmatprep.subr.bf16.mxu0 0
    %1079 = vmatpush1.bf16.msra.mxu0 0
    %1080 = vmatprep.subr.bf16.mxu0 0
    %1081 = vmatpush1.bf16.msra.mxu0 0
    %1082 = vmatprep.subr.bf16.mxu0 0
    %1083 = vmatpush1.bf16.msra.mxu0 0
    %1084 = vmatprep.subr.bf16.mxu0 0
    %1085 = vmatpush1.bf16.msra.mxu0 0
    %1086 = vmatprep.subr.bf16.mxu0 0
    %1087 = vmatpush1.bf16.msra.mxu0 0
    %1088 = vmatprep.subr.bf16.mxu0 0
    %1089 = vmatpush1.bf16.msra.mxu0 0
    %1090 = vmatprep.subr.bf16.mxu0 0
    %1091 = vmatpush1.bf16.msra.mxu0 0
    %1092 = vmatprep.subr.bf16.mxu0 0
    %1093 = vmatpush1.bf16.msra.mxu0 0
    %1094 = vmatprep.mubr.bf16.mxu0 0
    %1095 = vmatmul.mubr.bf16.gmra.mrb[0].mxu0 %v1057
    %v1096 = vpop.f32.mrb[0].mxu0
    %v1097 = vadd.f32 0.0, %v1096
    %v1098 = vpop.f32.mrb[0].mxu0
    %v1099 = vpop.f32.mrb[0].mxu0
    %v1100 = vadd.f32 0.0, %v1099
    %v1101 = vpop.f32.mrb[0].mxu0
    %1102 = vdwg.mxu0
    %v1114 = vunpack.c.l.b16 %v947
    %v1115 = vunpack.c.l.b16 %v948
    %v1116 = vunpack.c.l.b16 %v949
    %v1117 = vunpack.c.l.b16 %v950
    %v1118 = vunpack.c.l.b16 %v951
    %v1119 = vunpack.c.l.b16 %v952
    %v1120 = vunpack.c.l.b16 %v953
    %v1121 = vunpack.c.l.b16 %v954
    %v1122 = vunpack.c.l.b16 %v955
    %v1123 = vunpack.c.l.b16 %v956
    %v1124 = vunpack.c.l.b16 %v957
    %v1125 = vpack.c.b16 %v1115, %v1114
    %v1126 = vpack.c.b16 %v1117, %v1116
    %v1127 = vpack.c.b16 %v1119, %v1118
    %v1128 = vpack.c.b16 %v1121, %v1120
    %v1129 = vpack.c.b16 %v1123, %v1122
    %v1130 = vpack.c.b16 %v1124, %v1124
    %v1137 = vsel %vm364, %v946, 0
    %v1140 = vsel %vm371, %v1130, 0
    %1142 = vmatprep.subr.bf16.mxu0 0
    %1143 = vmatpush1.bf16.msra.mxu0 %v1125
    %1144 = vmatprep.subr.bf16.mxu0 0
    %1145 = vmatpush1.bf16.msra.mxu0 %v1126
    %1146 = vmatprep.subr.bf16.mxu0 0
    %1147 = vmatpush1.bf16.msra.mxu0 %v1127
    %1148 = vmatprep.subr.bf16.mxu0 0
    %1149 = vmatpush1.bf16.msra.mxu0 %v1128
    %1150 = vmatprep.subr.bf16.mxu0 0
    %1151 = vmatpush1.bf16.msra.mxu0 %v1129
    %1152 = vmatprep.subr.bf16.mxu0 0
    %1153 = vmatpush1.bf16.msra.mxu0 %v1140
    %1154 = vmatprep.subr.bf16.mxu0 0
    %1155 = vmatpush1.bf16.msra.mxu0 0
    %1156 = vmatprep.subr.bf16.mxu0 0
    %1157 = vmatpush1.bf16.msra.mxu0 0
    %1158 = vmatprep.subr.bf16.mxu0 0
    %1159 = vmatpush1.bf16.msra.mxu0 0
    %1160 = vmatprep.subr.bf16.mxu0 0
    %1161 = vmatpush1.bf16.msra.mxu0 0
    %1162 = vmatprep.subr.bf16.mxu0 0
    %1163 = vmatpush1.bf16.msra.mxu0 0
    %1164 = vmatprep.subr.bf16.mxu0 0
    %1165 = vmatpush1.bf16.msra.mxu0 0
    %1166 = vmatprep.subr.bf16.mxu0 0
    %1167 = vmatpush1.bf16.msra.mxu0 0
    %1168 = vmatprep.subr.bf16.mxu0 0
    %1169 = vmatpush1.bf16.msra.mxu0 0
    %1170 = vmatprep.subr.bf16.mxu0 0
    %1171 = vmatpush1.bf16.msra.mxu0 0
    %1172 = vmatprep.subr.bf16.mxu0 0
    %1173 = vmatpush1.bf16.msra.mxu0 0
    %1174 = vmatprep.mubr.bf16.mxu0 0
    %1175 = vmatmul.mubr.bf16.gmra.mrb[0].mxu0 %v1137
    %v1176 = vpop.f32.mrb[0].mxu0
    %v1177 = vadd.f32 %v1097, %v1176
    %v1178 = vpop.f32.mrb[0].mxu0
    %v1179 = vpop.f32.mrb[0].mxu0
    %v1180 = vadd.f32 %v1100, %v1179
    %v1181 = vpop.f32.mrb[0].mxu0
    %1182 = vdwg.mxu0
    %s1183 = scalar_lea.vmem %s4, 16
    %v1184 = vld [vmem:[%s1183] sm:$0xf]
    %v1185 = vld [vmem:[%s1183 + $0x4] sm:$0x7]
    %v1188 = vunpack.c.l.b16 %v1184
    %v1189 = vunpack.c.l.b16 %v1185
    %v1190 = vpack.c.b16 %v1189, %v1188
    %v1192 = vsel %vm897, %v1190, 0
    %1194 = vmatprep.subr.bf16.mxu0 0
    %1195 = vmatpush1.bf16.msra.mxu0 %v888
    %1196 = vmatprep.subr.bf16.mxu0 0
    %1197 = vmatpush1.bf16.msra.mxu0 %v903
    %1198 = vmatprep.subr.bf16.mxu0 0
    %1199 = vmatpush1.bf16.msra.mxu0 0
    %1200 = vmatprep.subr.bf16.mxu0 0
    %1201 = vmatpush1.bf16.msra.mxu0 0
    %1202 = vmatprep.subr.bf16.mxu0 0
    %1203 = vmatpush1.bf16.msra.mxu0 0
    %1204 = vmatprep.subr.bf16.mxu0 0
    %1205 = vmatpush1.bf16.msra.mxu0 0
    %1206 = vmatprep.subr.bf16.mxu0 0
    %1207 = vmatpush1.bf16.msra.mxu0 0
    %1208 = vmatprep.subr.bf16.mxu0 0
    %1209 = vmatpush1.bf16.msra.mxu0 0
    %1210 = vmatprep.subr.bf16.mxu0 0
    %1211 = vmatpush1.bf16.msra.mxu0 0
    %1212 = vmatprep.subr.bf16.mxu0 0
    %1213 = vmatpush1.bf16.msra.mxu0 0
    %1214 = vmatprep.subr.bf16.mxu0 0
    %1215 = vmatpush1.bf16.msra.mxu0 0
    %1216 = vmatprep.subr.bf16.mxu0 0
    %1217 = vmatpush1.bf16.msra.mxu0 0
    %1218 = vmatprep.subr.bf16.mxu0 0
    %1219 = vmatpush1.bf16.msra.mxu0 0
    %1220 = vmatprep.subr.bf16.mxu0 0
    %1221 = vmatpush1.bf16.msra.mxu0 0
    %1222 = vmatprep.subr.bf16.mxu0 0
    %1223 = vmatpush1.bf16.msra.mxu0 0
    %1224 = vmatprep.subr.bf16.mxu0 0
    %1225 = vmatpush1.bf16.msra.mxu0 0
    %1226 = vmatprep.mubr.bf16.mxu0 0
    %1227 = vmatmul.mubr.bf16.gmra.mrb[0].mxu0 %v1192
    %v1228 = vpop.f32.mrb[0].mxu0
    %v1229 = vadd.f32 0.0, %v1228
    %v1230 = vpop.f32.mrb[0].mxu0
    %v1231 = vpop.f32.mrb[0].mxu0
    %v1232 = vadd.f32 0.0, %v1231
    %v1233 = vpop.f32.mrb[0].mxu0
    %1234 = vdwg.mxu0
    %v1235 = vpack.c.bf16 %v1232, %v1229
    %s1236 = scalar_lea.vmem %s5, 88
    %v1237 = vld [vmem:[%s1236] sm:$0xf]
    %v1238 = vld [vmem:[%s1236 + $0x4] sm:$0xf]
    %v1239 = vld [vmem:[%s1236 + $0x8] sm:$0xf]
    %v1240 = vld [vmem:[%s1236 + $0xc] sm:$0xf]
    %v1241 = vld [vmem:[%s1236 + $0x10] sm:$0xf]
    %v1242 = vld [vmem:[%s1236 + $0x14] sm:$0xf]
    %v1243 = vld [vmem:[%s1236 + $0x18] sm:$0xf]
    %v1244 = vld [vmem:[%s1236 + $0x1c] sm:$0xf]
    %v1245 = vld [vmem:[%s1236 + $0x20] sm:$0xf]
    %v1246 = vld [vmem:[%s1236 + $0x24] sm:$0xf]
    %v1247 = vld [vmem:[%s1236 + $0x28] sm:$0x3]
    %v1259 = vunpack.c.l.b16 %v1237
    %v1260 = vunpack.c.l.b16 %v1238
    %v1261 = vunpack.c.l.b16 %v1239
    %v1262 = vunpack.c.l.b16 %v1240
    %v1263 = vunpack.c.l.b16 %v1241
    %v1264 = vunpack.c.l.b16 %v1242
    %v1265 = vunpack.c.l.b16 %v1243
    %v1266 = vunpack.c.l.b16 %v1244
    %v1267 = vunpack.c.l.b16 %v1245
    %v1268 = vunpack.c.l.b16 %v1246
    %v1269 = vunpack.c.l.b16 %v1247
    %v1270 = vpack.c.b16 %v1260, %v1259
    %v1271 = vpack.c.b16 %v1262, %v1261
    %v1272 = vpack.c.b16 %v1264, %v1263
    %v1273 = vpack.c.b16 %v1266, %v1265
    %v1274 = vpack.c.b16 %v1268, %v1267
    %v1275 = vpack.c.b16 %v1269, %v1269
    %v1282 = vsel %vm364, %v1235, 0
    %v1285 = vsel %vm371, %v1275, 0
    %1287 = vmatprep.subr.bf16.mxu0 0
    %1288 = vmatpush1.bf16.msra.mxu0 %v1270
    %1289 = vmatprep.subr.bf16.mxu0 0
    %1290 = vmatpush1.bf16.msra.mxu0 %v1271
    %1291 = vmatprep.subr.bf16.mxu0 0
    %1292 = vmatpush1.bf16.msra.mxu0 %v1272
    %1293 = vmatprep.subr.bf16.mxu0 0
    %1294 = vmatpush1.bf16.msra.mxu0 %v1273
    %1295 = vmatprep.subr.bf16.mxu0 0
    %1296 = vmatpush1.bf16.msra.mxu0 %v1274
    %1297 = vmatprep.subr.bf16.mxu0 0
    %1298 = vmatpush1.bf16.msra.mxu0 %v1285
    %1299 = vmatprep.subr.bf16.mxu0 0
    %1300 = vmatpush1.bf16.msra.mxu0 0
    %1301 = vmatprep.subr.bf16.mxu0 0
    %1302 = vmatpush1.bf16.msra.mxu0 0
    %1303 = vmatprep.subr.bf16.mxu0 0
    %1304 = vmatpush1.bf16.msra.mxu0 0
    %1305 = vmatprep.subr.bf16.mxu0 0
    %1306 = vmatpush1.bf16.msra.mxu0 0
    %1307 = vmatprep.subr.bf16.mxu0 0
    %1308 = vmatpush1.bf16.msra.mxu0 0
    %1309 = vmatprep.subr.bf16.mxu0 0
    %1310 = vmatpush1.bf16.msra.mxu0 0
    %1311 = vmatprep.subr.bf16.mxu0 0
    %1312 = vmatpush1.bf16.msra.mxu0 0
    %1313 = vmatprep.subr.bf16.mxu0 0
    %1314 = vmatpush1.bf16.msra.mxu0 0
    %1315 = vmatprep.subr.bf16.mxu0 0
    %1316 = vmatpush1.bf16.msra.mxu0 0
    %1317 = vmatprep.subr.bf16.mxu0 0
    %1318 = vmatpush1.bf16.msra.mxu0 0
    %1319 = vmatprep.mubr.bf16.mxu0 0
    %1320 = vmatmul.mubr.bf16.gmra.mrb[0].mxu0 %v1282
    %v1321 = vpop.f32.mrb[0].mxu0
    %v1322 = vadd.f32 0.0, %v1321
    %v1323 = vpop.f32.mrb[0].mxu0
    %v1324 = vpop.f32.mrb[0].mxu0
    %v1325 = vadd.f32 0.0, %v1324
    %v1326 = vpop.f32.mrb[0].mxu0
    %1327 = vdwg.mxu0
    %v1328 = vadd.f32 %v1177, %v1322
    %v1329 = vadd.f32 %v1180, %v1325
    %s1330 = scalar_lea.vmem %s4, 24
    %v1331 = vld [vmem:[%s1330] sm:$0xf]
    %v1332 = vld [vmem:[%s1330 + $0x4] sm:$0x7]
    %v1335 = vunpack.c.l.b16 %v1331
    %v1336 = vunpack.c.l.b16 %v1332
    %v1337 = vpack.c.b16 %v1336, %v1335
    %v1339 = vsel %vm897, %v1337, 0
    %1341 = vmatprep.subr.bf16.mxu0 0
    %1342 = vmatpush1.bf16.msra.mxu0 %v888
    %1343 = vmatprep.subr.bf16.mxu0 0
    %1344 = vmatpush1.bf16.msra.mxu0 %v903
    %1345 = vmatprep.subr.bf16.mxu0 0
    %1346 = vmatpush1.bf16.msra.mxu0 0
    %1347 = vmatprep.subr.bf16.mxu0 0
    %1348 = vmatpush1.bf16.msra.mxu0 0
    %1349 = vmatprep.subr.bf16.mxu0 0
    %1350 = vmatpush1.bf16.msra.mxu0 0
    %1351 = vmatprep.subr.bf16.mxu0 0
    %1352 = vmatpush1.bf16.msra.mxu0 0
    %1353 = vmatprep.subr.bf16.mxu0 0
    %1354 = vmatpush1.bf16.msra.mxu0 0
    %1355 = vmatprep.subr.bf16.mxu0 0
    %1356 = vmatpush1.bf16.msra.mxu0 0
    %1357 = vmatprep.subr.bf16.mxu0 0
    %1358 = vmatpush1.bf16.msra.mxu0 0
    %1359 = vmatprep.subr.bf16.mxu0 0
    %1360 = vmatpush1.bf16.msra.mxu0 0
    %1361 = vmatprep.subr.bf16.mxu0 0
    %1362 = vmatpush1.bf16.msra.mxu0 0
    %1363 = vmatprep.subr.bf16.mxu0 0
    %1364 = vmatpush1.bf16.msra.mxu0 0
    %1365 = vmatprep.subr.bf16.mxu0 0
    %1366 = vmatpush1.bf16.msra.mxu0 0
    %1367 = vmatprep.subr.bf16.mxu0 0
    %1368 = vmatpush1.bf16.msra.mxu0 0
    %1369 = vmatprep.subr.bf16.mxu0 0
    %1370 = vmatpush1.bf16.msra.mxu0 0
    %1371 = vmatprep.subr.bf16.mxu0 0
    %1372 = vmatpush1.bf16.msra.mxu0 0
    %1373 = vmatprep.mubr.bf16.mxu0 0
    %1374 = vmatmul.mubr.bf16.gmra.mrb[0].mxu0 %v1339
    %v1375 = vpop.f32.mrb[0].mxu0
    %v1376 = vadd.f32 0.0, %v1375
    %v1377 = vpop.f32.mrb[0].mxu0
    %v1378 = vpop.f32.mrb[0].mxu0
    %v1379 = vadd.f32 0.0, %v1378
    %v1380 = vpop.f32.mrb[0].mxu0
    %1381 = vdwg.mxu0
    %v1382 = vpack.c.bf16 %v1379, %v1376
    %s1383 = scalar_lea.vmem %s5, 132
    %v1384 = vld [vmem:[%s1383] sm:$0xf]
    %v1385 = vld [vmem:[%s1383 + $0x4] sm:$0xf]
    %v1386 = vld [vmem:[%s1383 + $0x8] sm:$0xf]
    %v1387 = vld [vmem:[%s1383 + $0xc] sm:$0xf]
    %v1388 = vld [vmem:[%s1383 + $0x10] sm:$0xf]
    %v1389 = vld [vmem:[%s1383 + $0x14] sm:$0xf]
    %v1390 = vld [vmem:[%s1383 + $0x18] sm:$0xf]
    %v1391 = vld [vmem:[%s1383 + $0x1c] sm:$0xf]
    %v1392 = vld [vmem:[%s1383 + $0x20] sm:$0xf]
    %v1393 = vld [vmem:[%s1383 + $0x24] sm:$0xf]
    %v1394 = vld [vmem:[%s1383 + $0x28] sm:$0x3]
    %v1406 = vunpack.c.l.b16 %v1384
    %v1407 = vunpack.c.l.b16 %v1385
    %v1408 = vunpack.c.l.b16 %v1386
    %v1409 = vunpack.c.l.b16 %v1387
    %v1410 = vunpack.c.l.b16 %v1388
    %v1411 = vunpack.c.l.b16 %v1389
    %v1412 = vunpack.c.l.b16 %v1390
    %v1413 = vunpack.c.l.b16 %v1391
    %v1414 = vunpack.c.l.b16 %v1392
    %v1415 = vunpack.c.l.b16 %v1393
    %v1416 = vunpack.c.l.b16 %v1394
    %v1417 = vpack.c.b16 %v1407, %v1406
    %v1418 = vpack.c.b16 %v1409, %v1408
    %v1419 = vpack.c.b16 %v1411, %v1410
    %v1420 = vpack.c.b16 %v1413, %v1412
    %v1421 = vpack.c.b16 %v1415, %v1414
    %v1422 = vpack.c.b16 %v1416, %v1416
    %v1429 = vsel %vm364, %v1382, 0
    %v1432 = vsel %vm371, %v1422, 0
    %1434 = vmatprep.subr.bf16.mxu0 0
    %1435 = vmatpush1.bf16.msra.mxu0 %v1417
    %1436 = vmatprep.subr.bf16.mxu0 0
    %1437 = vmatpush1.bf16.msra.mxu0 %v1418
    %1438 = vmatprep.subr.bf16.mxu0 0
    %1439 = vmatpush1.bf16.msra.mxu0 %v1419
    %1440 = vmatprep.subr.bf16.mxu0 0
    %1441 = vmatpush1.bf16.msra.mxu0 %v1420
    %1442 = vmatprep.subr.bf16.mxu0 0
    %1443 = vmatpush1.bf16.msra.mxu0 %v1421
    %1444 = vmatprep.subr.bf16.mxu0 0
    %1445 = vmatpush1.bf16.msra.mxu0 %v1432
    %1446 = vmatprep.subr.bf16.mxu0 0
    %1447 = vmatpush1.bf16.msra.mxu0 0
    %1448 = vmatprep.subr.bf16.mxu0 0
    %1449 = vmatpush1.bf16.msra.mxu0 0
    %1450 = vmatprep.subr.bf16.mxu0 0
    %1451 = vmatpush1.bf16.msra.mxu0 0
    %1452 = vmatprep.subr.bf16.mxu0 0
    %1453 = vmatpush1.bf16.msra.mxu0 0
    %1454 = vmatprep.subr.bf16.mxu0 0
    %1455 = vmatpush1.bf16.msra.mxu0 0
    %1456 = vmatprep.subr.bf16.mxu0 0
    %1457 = vmatpush1.bf16.msra.mxu0 0
    %1458 = vmatprep.subr.bf16.mxu0 0
    %1459 = vmatpush1.bf16.msra.mxu0 0
    %1460 = vmatprep.subr.bf16.mxu0 0
    %1461 = vmatpush1.bf16.msra.mxu0 0
    %1462 = vmatprep.subr.bf16.mxu0 0
    %1463 = vmatpush1.bf16.msra.mxu0 0
    %1464 = vmatprep.subr.bf16.mxu0 0
    %1465 = vmatpush1.bf16.msra.mxu0 0
    %1466 = vmatprep.mubr.bf16.mxu0 0
    %1467 = vmatmul.mubr.bf16.gmra.mrb[0].mxu0 %v1429
    %v1468 = vpop.f32.mrb[0].mxu0
    %v1469 = vadd.f32 0.0, %v1468
    %v1470 = vpop.f32.mrb[0].mxu0
    %v1471 = vpop.f32.mrb[0].mxu0
    %v1472 = vadd.f32 0.0, %v1471
    %v1473 = vpop.f32.mrb[0].mxu0
    %1474 = vdwg.mxu0
    %v1475 = vadd.f32 %v1328, %v1469
    %v1476 = vadd.f32 %v1329, %v1472
    %v1477 = vld [vmem:[#allocation4] sm:$0x1]
    %v1479 = vlaneseq
    %v1480 = vshrl.u32 %v1479, 7
    %v1481 = vsub.s32 0, %v1480
    %v1482 = vrot.slane %v1477, %v1481
    %v1484 = vadd.f32 %v1475, %v1482
    %v1485 = vadd.f32 %v1476, %v1482
    %v1486 = vmax.f32 %v1484, 0.0
    %v1487 = vmax.f32 %v1485, 0.0
    %v1488 = vpack.c.bf16 %v1487, %v1486
    %v1489 = vld [vmem:[%s7] sm:$0xf]
    %v1490 = vld [vmem:[%s7 + $0x4] sm:$0x1]
    %v1493 = vunpack.c.l.b16 %v1489
    %v1494 = vunpack.c.l.b16 %v1490
    %v1495 = vpack.c.b16 %v1494, %v1493
    %vm1496 = vcmask 113664
    %v1498 = vsel %vm1496, %v1495, 0
    %vm1500 = vcmask 1046528
    %v1502 = vsel %vm1500, %v1488, 0
    %1504 = vmatprep.subr.bf16.mxu0 0
    %1505 = vmatpush1.bf16.msra.mxu0 %v1502
    %1506 = vmatprep.subr.bf16.mxu0 0
    %1507 = vmatpush1.bf16.msra.mxu0 0
    %1508 = vmatprep.subr.bf16.mxu0 0
    %1509 = vmatpush1.bf16.msra.mxu0 0
    %1510 = vmatprep.subr.bf16.mxu0 0
    %1511 = vmatpush1.bf16.msra.mxu0 0
    %1512 = vmatprep.subr.bf16.mxu0 0
    %1513 = vmatpush1.bf16.msra.mxu0 0
    %1514 = vmatprep.subr.bf16.mxu0 0
    %1515 = vmatpush1.bf16.msra.mxu0 0
    %1516 = vmatprep.subr.bf16.mxu0 0
    %1517 = vmatpush1.bf16.msra.mxu0 0
    %1518 = vmatprep.subr.bf16.mxu0 0
    %1519 = vmatpush1.bf16.msra.mxu0 0
    %1520 = vmatprep.subr.bf16.mxu0 0
    %1521 = vmatpush1.bf16.msra.mxu0 0
    %1522 = vmatprep.subr.bf16.mxu0 0
    %1523 = vmatpush1.bf16.msra.mxu0 0
    %1524 = vmatprep.subr.bf16.mxu0 0
    %1525 = vmatpush1.bf16.msra.mxu0 0
    %1526 = vmatprep.subr.bf16.mxu0 0
    %1527 = vmatpush1.bf16.msra.mxu0 0
    %1528 = vmatprep.subr.bf16.mxu0 0
    %1529 = vmatpush1.bf16.msra.mxu0 0
    %1530 = vmatprep.subr.bf16.mxu0 0
    %1531 = vmatpush1.bf16.msra.mxu0 0
    %1532 = vmatprep.subr.bf16.mxu0 0
    %1533 = vmatpush1.bf16.msra.mxu0 0
    %1534 = vmatprep.subr.bf16.mxu0 0
    %1535 = vmatpush1.bf16.msra.mxu0 0
    %1536 = vmatprep.mubr.bf16.mxu0 0
    %1537 = vmatmul.mubr.bf16.gmra.mrb[0].mxu0 %v1498
    %v1538 = vpop.f32.mrb[0].mxu0
    %v1539 = vadd.f32 0.0, %v1538
    %v1540 = vpop.f32.mrb[0].mxu0
    %v1541 = vpop.f32.mrb[0].mxu0
    %v1542 = vadd.f32 0.0, %v1541
    %v1543 = vpop.f32.mrb[0].mxu0
    %1544 = vdwg.mxu0
    %v1545 = vpack.c.bf16 %v1542, %v1539
    %v1546 = vld [vmem:[#allocation6] sm:$0xf]
    %v1547 = vld [vmem:[#allocation6 + $0x4] sm:$0xf]
    %v1548 = vld [vmem:[#allocation6 + $0x8] sm:$0xf]
    %v1549 = vld [vmem:[#allocation6 + $0xc] sm:$0xf]
    %v1550 = vld [vmem:[#allocation6 + $0x10] sm:$0xf]
    %v1551 = vld [vmem:[#allocation6 + $0x14] sm:$0xf]
    %v1552 = vld [vmem:[#allocation6 + $0x18] sm:$0xf]
    %v1553 = vld [vmem:[#allocation6 + $0x1c] sm:$0xf]
    %v1554 = vld [vmem:[#allocation6 + $0x20] sm:$0xf]
    %v1555 = vld [vmem:[#allocation6 + $0x24] sm:$0xf]
    %v1556 = vld [vmem:[#allocation6 + $0x28] sm:$0x3]
    %s1557 = scalar_lea.vmem %s7, 8
    %v1558 = vld [vmem:[%s1557] sm:$0xf]
    %v1559 = vld [vmem:[%s1557 + $0x4] sm:$0x1]
    %v1562 = vunpack.c.l.b16 %v1558
    %v1563 = vunpack.c.l.b16 %v1559
    %v1564 = vpack.c.b16 %v1563, %v1562
    %v1566 = vsel %vm1496, %v1564, 0
    %1568 = vmatprep.subr.bf16.mxu0 0
    %1569 = vmatpush1.bf16.msra.mxu0 %v1502
    %1570 = vmatprep.subr.bf16.mxu0 0
    %1571 = vmatpush1.bf16.msra.mxu0 0
    %1572 = vmatprep.subr.bf16.mxu0 0
    %1573 = vmatpush1.bf16.msra.mxu0 0
    %1574 = vmatprep.subr.bf16.mxu0 0
    %1575 = vmatpush1.bf16.msra.mxu0 0
    %1576 = vmatprep.subr.bf16.mxu0 0
    %1577 = vmatpush1.bf16.msra.mxu0 0
    %1578 = vmatprep.subr.bf16.mxu0 0
    %1579 = vmatpush1.bf16.msra.mxu0 0
    %1580 = vmatprep.subr.bf16.mxu0 0
    %1581 = vmatpush1.bf16.msra.mxu0 0
    %1582 = vmatprep.subr.bf16.mxu0 0
    %1583 = vmatpush1.bf16.msra.mxu0 0
    %1584 = vmatprep.subr.bf16.mxu0 0
    %1585 = vmatpush1.bf16.msra.mxu0 0
    %1586 = vmatprep.subr.bf16.mxu0 0
    %1587 = vmatpush1.bf16.msra.mxu0 0
    %1588 = vmatprep.subr.bf16.mxu0 0
    %1589 = vmatpush1.bf16.msra.mxu0 0
    %1590 = vmatprep.subr.bf16.mxu0 0
    %1591 = vmatpush1.bf16.msra.mxu0 0
    %1592 = vmatprep.subr.bf16.mxu0 0
    %1593 = vmatpush1.bf16.msra.mxu0 0
    %1594 = vmatprep.subr.bf16.mxu0 0
    %1595 = vmatpush1.bf16.msra.mxu0 0
    %1596 = vmatprep.subr.bf16.mxu0 0
    %1597 = vmatpush1.bf16.msra.mxu0 0
    %1598 = vmatprep.subr.bf16.mxu0 0
    %1599 = vmatpush1.bf16.msra.mxu0 0
    %1600 = vmatprep.mubr.bf16.mxu0 0
    %1601 = vmatmul.mubr.bf16.gmra.mrb[0].mxu0 %v1566
    %v1602 = vpop.f32.mrb[0].mxu0
    %v1603 = vadd.f32 0.0, %v1602
    %v1604 = vpop.f32.mrb[0].mxu0
    %v1605 = vpop.f32.mrb[0].mxu0
    %v1606 = vadd.f32 0.0, %v1605
    %v1607 = vpop.f32.mrb[0].mxu0
    %1608 = vdwg.mxu0
    %v1609 = vpack.c.bf16 %v1606, %v1603
    %s1610 = scalar_lea.vmem [#allocation6], 44
    %v1611 = vld [vmem:[%s1610] sm:$0xf]
    %v1612 = vld [vmem:[%s1610 + $0x4] sm:$0xf]
    %v1613 = vld [vmem:[%s1610 + $0x8] sm:$0xf]
    %v1614 = vld [vmem:[%s1610 + $0xc] sm:$0xf]
    %v1615 = vld [vmem:[%s1610 + $0x10] sm:$0xf]
    %v1616 = vld [vmem:[%s1610 + $0x14] sm:$0xf]
    %v1617 = vld [vmem:[%s1610 + $0x18] sm:$0xf]
    %v1618 = vld [vmem:[%s1610 + $0x1c] sm:$0xf]
    %v1619 = vld [vmem:[%s1610 + $0x20] sm:$0xf]
    %v1620 = vld [vmem:[%s1610 + $0x24] sm:$0xf]
    %v1621 = vld [vmem:[%s1610 + $0x28] sm:$0x3]
    %v1633 = vunpack.c.l.b16 %v1611
    %v1634 = vunpack.c.l.b16 %v1612
    %v1635 = vunpack.c.l.b16 %v1613
    %v1636 = vunpack.c.l.b16 %v1614
    %v1637 = vunpack.c.l.b16 %v1615
    %v1638 = vunpack.c.l.b16 %v1616
    %v1639 = vunpack.c.l.b16 %v1617
    %v1640 = vunpack.c.l.b16 %v1618
    %v1641 = vunpack.c.l.b16 %v1619
    %v1642 = vunpack.c.l.b16 %v1620
    %v1643 = vunpack.c.l.b16 %v1621
    %v1644 = vpack.c.b16 %v1634, %v1633
    %v1645 = vpack.c.b16 %v1636, %v1635
    %v1646 = vpack.c.b16 %v1638, %v1637
    %v1647 = vpack.c.b16 %v1640, %v1639
    %v1648 = vpack.c.b16 %v1642, %v1641
    %v1649 = vpack.c.b16 %v1643, %v1643
    %v1656 = vsel %vm364, %v1609, 0
    %v1659 = vsel %vm371, %v1649, 0
    %1661 = vmatprep.subr.bf16.mxu0 0
    %1662 = vmatpush1.bf16.msra.mxu0 %v1644
    %1663 = vmatprep.subr.bf16.mxu0 0
    %1664 = vmatpush1.bf16.msra.mxu0 %v1645
    %1665 = vmatprep.subr.bf16.mxu0 0
    %1666 = vmatpush1.bf16.msra.mxu0 %v1646
    %1667 = vmatprep.subr.bf16.mxu0 0
    %1668 = vmatpush1.bf16.msra.mxu0 %v1647
    %1669 = vmatprep.subr.bf16.mxu0 0
    %1670 = vmatpush1.bf16.msra.mxu0 %v1648
    %1671 = vmatprep.subr.bf16.mxu0 0
    %1672 = vmatpush1.bf16.msra.mxu0 %v1659
    %1673 = vmatprep.subr.bf16.mxu0 0
    %1674 = vmatpush1.bf16.msra.mxu0 0
    %1675 = vmatprep.subr.bf16.mxu0 0
    %1676 = vmatpush1.bf16.msra.mxu0 0
    %1677 = vmatprep.subr.bf16.mxu0 0
    %1678 = vmatpush1.bf16.msra.mxu0 0
    %1679 = vmatprep.subr.bf16.mxu0 0
    %1680 = vmatpush1.bf16.msra.mxu0 0
    %1681 = vmatprep.subr.bf16.mxu0 0
    %1682 = vmatpush1.bf16.msra.mxu0 0
    %1683 = vmatprep.subr.bf16.mxu0 0
    %1684 = vmatpush1.bf16.msra.mxu0 0
    %1685 = vmatprep.subr.bf16.mxu0 0
    %1686 = vmatpush1.bf16.msra.mxu0 0
    %1687 = vmatprep.subr.bf16.mxu0 0
    %1688 = vmatpush1.bf16.msra.mxu0 0
    %1689 = vmatprep.subr.bf16.mxu0 0
    %1690 = vmatpush1.bf16.msra.mxu0 0
    %1691 = vmatprep.subr.bf16.mxu0 0
    %1692 = vmatpush1.bf16.msra.mxu0 0
    %1693 = vmatprep.mubr.bf16.mxu0 0
    %1694 = vmatmul.mubr.bf16.gmra.mrb[0].mxu0 %v1656
    %v1695 = vpop.f32.mrb[0].mxu0
    %v1696 = vadd.f32 0.0, %v1695
    %v1697 = vpop.f32.mrb[0].mxu0
    %v1698 = vpop.f32.mrb[0].mxu0
    %v1699 = vadd.f32 0.0, %v1698
    %v1700 = vpop.f32.mrb[0].mxu0
    %1701 = vdwg.mxu0
    %v1713 = vunpack.c.l.b16 %v1546
    %v1714 = vunpack.c.l.b16 %v1547
    %v1715 = vunpack.c.l.b16 %v1548
    %v1716 = vunpack.c.l.b16 %v1549
    %v1717 = vunpack.c.l.b16 %v1550
    %v1718 = vunpack.c.l.b16 %v1551
    %v1719 = vunpack.c.l.b16 %v1552
    %v1720 = vunpack.c.l.b16 %v1553
    %v1721 = vunpack.c.l.b16 %v1554
    %v1722 = vunpack.c.l.b16 %v1555
    %v1723 = vunpack.c.l.b16 %v1556
    %v1724 = vpack.c.b16 %v1714, %v1713
    %v1725 = vpack.c.b16 %v1716, %v1715
    %v1726 = vpack.c.b16 %v1718, %v1717
    %v1727 = vpack.c.b16 %v1720, %v1719
    %v1728 = vpack.c.b16 %v1722, %v1721
    %v1729 = vpack.c.b16 %v1723, %v1723
    %v1736 = vsel %vm364, %v1545, 0
    %v1739 = vsel %vm371, %v1729, 0
    %1741 = vmatprep.subr.bf16.mxu0 0
    %1742 = vmatpush1.bf16.msra.mxu0 %v1724
    %1743 = vmatprep.subr.bf16.mxu0 0
    %1744 = vmatpush1.bf16.msra.mxu0 %v1725
    %1745 = vmatprep.subr.bf16.mxu0 0
    %1746 = vmatpush1.bf16.msra.mxu0 %v1726
    %1747 = vmatprep.subr.bf16.mxu0 0
    %1748 = vmatpush1.bf16.msra.mxu0 %v1727
    %1749 = vmatprep.subr.bf16.mxu0 0
    %1750 = vmatpush1.bf16.msra.mxu0 %v1728
    %1751 = vmatprep.subr.bf16.mxu0 0
    %1752 = vmatpush1.bf16.msra.mxu0 %v1739
    %1753 = vmatprep.subr.bf16.mxu0 0
    %1754 = vmatpush1.bf16.msra.mxu0 0
    %1755 = vmatprep.subr.bf16.mxu0 0
    %1756 = vmatpush1.bf16.msra.mxu0 0
    %1757 = vmatprep.subr.bf16.mxu0 0
    %1758 = vmatpush1.bf16.msra.mxu0 0
    %1759 = vmatprep.subr.bf16.mxu0 0
    %1760 = vmatpush1.bf16.msra.mxu0 0
    %1761 = vmatprep.subr.bf16.mxu0 0
    %1762 = vmatpush1.bf16.msra.mxu0 0
    %1763 = vmatprep.subr.bf16.mxu0 0
    %1764 = vmatpush1.bf16.msra.mxu0 0
    %1765 = vmatprep.subr.bf16.mxu0 0
    %1766 = vmatpush1.bf16.msra.mxu0 0
    %1767 = vmatprep.subr.bf16.mxu0 0
    %1768 = vmatpush1.bf16.msra.mxu0 0
    %1769 = vmatprep.subr.bf16.mxu0 0
    %1770 = vmatpush1.bf16.msra.mxu0 0
    %1771 = vmatprep.subr.bf16.mxu0 0
    %1772 = vmatpush1.bf16.msra.mxu0 0
    %1773 = vmatprep.mubr.bf16.mxu0 0
    %1774 = vmatmul.mubr.bf16.gmra.mrb[0].mxu0 %v1736
    %v1775 = vpop.f32.mrb[0].mxu0
    %v1776 = vadd.f32 %v1696, %v1775
    %v1777 = vpop.f32.mrb[0].mxu0
    %v1778 = vpop.f32.mrb[0].mxu0
    %v1779 = vadd.f32 %v1699, %v1778
    %v1780 = vpop.f32.mrb[0].mxu0
    %1781 = vdwg.mxu0
    %s1782 = scalar_lea.vmem %s7, 16
    %v1783 = vld [vmem:[%s1782] sm:$0xf]
    %v1784 = vld [vmem:[%s1782 + $0x4] sm:$0x1]
    %v1787 = vunpack.c.l.b16 %v1783
    %v1788 = vunpack.c.l.b16 %v1784
    %v1789 = vpack.c.b16 %v1788, %v1787
    %v1791 = vsel %vm1496, %v1789, 0
    %1793 = vmatprep.subr.bf16.mxu0 0
    %1794 = vmatpush1.bf16.msra.mxu0 %v1502
    %1795 = vmatprep.subr.bf16.mxu0 0
    %1796 = vmatpush1.bf16.msra.mxu0 0
    %1797 = vmatprep.subr.bf16.mxu0 0
    %1798 = vmatpush1.bf16.msra.mxu0 0
    %1799 = vmatprep.subr.bf16.mxu0 0
    %1800 = vmatpush1.bf16.msra.mxu0 0
    %1801 = vmatprep.subr.bf16.mxu0 0
    %1802 = vmatpush1.bf16.msra.mxu0 0
    %1803 = vmatprep.subr.bf16.mxu0 0
    %1804 = vmatpush1.bf16.msra.mxu0 0
    %1805 = vmatprep.subr.bf16.mxu0 0
    %1806 = vmatpush1.bf16.msra.mxu0 0
    %1807 = vmatprep.subr.bf16.mxu0 0
    %1808 = vmatpush1.bf16.msra.mxu0 0
    %1809 = vmatprep.subr.bf16.mxu0 0
    %1810 = vmatpush1.bf16.msra.mxu0 0
    %1811 = vmatprep.subr.bf16.mxu0 0
    %1812 = vmatpush1.bf16.msra.mxu0 0
    %1813 = vmatprep.subr.bf16.mxu0 0
    %1814 = vmatpush1.bf16.msra.mxu0 0
    %1815 = vmatprep.subr.bf16.mxu0 0
    %1816 = vmatpush1.bf16.msra.mxu0 0
    %1817 = vmatprep.subr.bf16.mxu0 0
    %1818 = vmatpush1.bf16.msra.mxu0 0
    %1819 = vmatprep.subr.bf16.mxu0 0
    %1820 = vmatpush1.bf16.msra.mxu0 0
    %1821 = vmatprep.subr.bf16.mxu0 0
    %1822 = vmatpush1.bf16.msra.mxu0 0
    %1823 = vmatprep.subr.bf16.mxu0 0
    %1824 = vmatpush1.bf16.msra.mxu0 0
    %1825 = vmatprep.mubr.bf16.mxu0 0
    %1826 = vmatmul.mubr.bf16.gmra.mrb[0].mxu0 %v1791
    %v1827 = vpop.f32.mrb[0].mxu0
    %v1828 = vadd.f32 0.0, %v1827
    %v1829 = vpop.f32.mrb[0].mxu0
    %v1830 = vpop.f32.mrb[0].mxu0
    %v1831 = vadd.f32 0.0, %v1830
    %v1832 = vpop.f32.mrb[0].mxu0
    %1833 = vdwg.mxu0
    %v1834 = vpack.c.bf16 %v1831, %v1828
    %s1835 = scalar_lea.vmem [#allocation6], 88
    %v1836 = vld [vmem:[%s1835] sm:$0xf]
    %v1837 = vld [vmem:[%s1835 + $0x4] sm:$0xf]
    %v1838 = vld [vmem:[%s1835 + $0x8] sm:$0xf]
    %v1839 = vld [vmem:[%s1835 + $0xc] sm:$0xf]
    %v1840 = vld [vmem:[%s1835 + $0x10] sm:$0xf]
    %v1841 = vld [vmem:[%s1835 + $0x14] sm:$0xf]
    %v1842 = vld [vmem:[%s1835 + $0x18] sm:$0xf]
    %v1843 = vld [vmem:[%s1835 + $0x1c] sm:$0xf]
    %v1844 = vld [vmem:[%s1835 + $0x20] sm:$0xf]
    %v1845 = vld [vmem:[%s1835 + $0x24] sm:$0xf]
    %v1846 = vld [vmem:[%s1835 + $0x28] sm:$0x3]
    %v1858 = vunpack.c.l.b16 %v1836
    %v1859 = vunpack.c.l.b16 %v1837
    %v1860 = vunpack.c.l.b16 %v1838
    %v1861 = vunpack.c.l.b16 %v1839
    %v1862 = vunpack.c.l.b16 %v1840
    %v1863 = vunpack.c.l.b16 %v1841
    %v1864 = vunpack.c.l.b16 %v1842
    %v1865 = vunpack.c.l.b16 %v1843
    %v1866 = vunpack.c.l.b16 %v1844
    %v1867 = vunpack.c.l.b16 %v1845
    %v1868 = vunpack.c.l.b16 %v1846
    %v1869 = vpack.c.b16 %v1859, %v1858
    %v1870 = vpack.c.b16 %v1861, %v1860
    %v1871 = vpack.c.b16 %v1863, %v1862
    %v1872 = vpack.c.b16 %v1865, %v1864
    %v1873 = vpack.c.b16 %v1867, %v1866
    %v1874 = vpack.c.b16 %v1868, %v1868
    %v1881 = vsel %vm364, %v1834, 0
    %v1884 = vsel %vm371, %v1874, 0
    %1886 = vmatprep.subr.bf16.mxu0 0
    %1887 = vmatpush1.bf16.msra.mxu0 %v1869
    %1888 = vmatprep.subr.bf16.mxu0 0
    %1889 = vmatpush1.bf16.msra.mxu0 %v1870
    %1890 = vmatprep.subr.bf16.mxu0 0
    %1891 = vmatpush1.bf16.msra.mxu0 %v1871
    %1892 = vmatprep.subr.bf16.mxu0 0
    %1893 = vmatpush1.bf16.msra.mxu0 %v1872
    %1894 = vmatprep.subr.bf16.mxu0 0
    %1895 = vmatpush1.bf16.msra.mxu0 %v1873
    %1896 = vmatprep.subr.bf16.mxu0 0
    %1897 = vmatpush1.bf16.msra.mxu0 %v1884
    %1898 = vmatprep.subr.bf16.mxu0 0
    %1899 = vmatpush1.bf16.msra.mxu0 0
    %1900 = vmatprep.subr.bf16.mxu0 0
    %1901 = vmatpush1.bf16.msra.mxu0 0
    %1902 = vmatprep.subr.bf16.mxu0 0
    %1903 = vmatpush1.bf16.msra.mxu0 0
    %1904 = vmatprep.subr.bf16.mxu0 0
    %1905 = vmatpush1.bf16.msra.mxu0 0
    %1906 = vmatprep.subr.bf16.mxu0 0
    %1907 = vmatpush1.bf16.msra.mxu0 0
    %1908 = vmatprep.subr.bf16.mxu0 0
    %1909 = vmatpush1.bf16.msra.mxu0 0
    %1910 = vmatprep.subr.bf16.mxu0 0
    %1911 = vmatpush1.bf16.msra.mxu0 0
    %1912 = vmatprep.subr.bf16.mxu0 0
    %1913 = vmatpush1.bf16.msra.mxu0 0
    %1914 = vmatprep.subr.bf16.mxu0 0
    %1915 = vmatpush1.bf16.msra.mxu0 0
    %1916 = vmatprep.subr.bf16.mxu0 0
    %1917 = vmatpush1.bf16.msra.mxu0 0
    %1918 = vmatprep.mubr.bf16.mxu0 0
    %1919 = vmatmul.mubr.bf16.gmra.mrb[0].mxu0 %v1881
    %v1920 = vpop.f32.mrb[0].mxu0
    %v1921 = vadd.f32 0.0, %v1920
    %v1922 = vpop.f32.mrb[0].mxu0
    %v1923 = vpop.f32.mrb[0].mxu0
    %v1924 = vadd.f32 0.0, %v1923
    %v1925 = vpop.f32.mrb[0].mxu0
    %1926 = vdwg.mxu0
    %v1927 = vadd.f32 %v1776, %v1921
    %v1928 = vadd.f32 %v1779, %v1924
    %v1929 = vld [vmem:[#allocation7] sm:$0x1]
    %v1931 = vlaneseq
    %v1932 = vshrl.u32 %v1931, 7
    %v1933 = vsub.s32 0, %v1932
    %v1934 = vrot.slane %v1929, %v1933
    %v1936 = vadd.f32 %v1927, %v1934
    %v1937 = vadd.f32 %v1928, %v1934
    %v1938 = vmax.f32 %v1936, 0.0
    %v1939 = vmax.f32 %v1937, 0.0
    %v1940 = vpack.c.bf16 %v1939, %v1938
    %v1941 = vld [vmem:[#allocation9] sm:$0x1]
    %vm1942 = vcmask 80896
    %v1944 = vsel %vm1942, %v1941, 0
    %vm1946 = vcmask 1044480
    %v1948 = vsel %vm1946, %v1940, 0
    %1950 = vmatprep.subr.bf16.mxu0 0
    %1951 = vmatpush1.bf16.msra.mxu0 %v1948
    %1952 = vmatprep.subr.bf16.mxu0 0
    %1953 = vmatpush1.bf16.msra.mxu0 0
    %1954 = vmatprep.subr.bf16.mxu0 0
    %1955 = vmatpush1.bf16.msra.mxu0 0
    %1956 = vmatprep.subr.bf16.mxu0 0
    %1957 = vmatpush1.bf16.msra.mxu0 0
    %1958 = vmatprep.subr.bf16.mxu0 0
    %1959 = vmatpush1.bf16.msra.mxu0 0
    %1960 = vmatprep.subr.bf16.mxu0 0
    %1961 = vmatpush1.bf16.msra.mxu0 0
    %1962 = vmatprep.subr.bf16.mxu0 0
    %1963 = vmatpush1.bf16.msra.mxu0 0
    %1964 = vmatprep.subr.bf16.mxu0 0
    %1965 = vmatpush1.bf16.msra.mxu0 0
    %1966 = vmatprep.subr.bf16.mxu0 0
    %1967 = vmatpush1.bf16.msra.mxu0 0
    %1968 = vmatprep.subr.bf16.mxu0 0
    %1969 = vmatpush1.bf16.msra.mxu0 0
    %1970 = vmatprep.subr.bf16.mxu0 0
    %1971 = vmatpush1.bf16.msra.mxu0 0
    %1972 = vmatprep.subr.bf16.mxu0 0
    %1973 = vmatpush1.bf16.msra.mxu0 0
    %1974 = vmatprep.subr.bf16.mxu0 0
    %1975 = vmatpush1.bf16.msra.mxu0 0
    %1976 = vmatprep.subr.bf16.mxu0 0
    %1977 = vmatpush1.bf16.msra.mxu0 0
    %1978 = vmatprep.subr.bf16.mxu0 0
    %1979 = vmatpush1.bf16.msra.mxu0 0
    %1980 = vmatprep.subr.bf16.mxu0 0
    %1981 = vmatpush1.bf16.msra.mxu0 0
    %1982 = vmatprep.mubr.bf16.mxu0 0
    %1983 = vmatmul.mubr.bf16.gmra.mrb[0].mxu0 %v1944
    %v1984 = vpop.f32.mrb[0].mxu0
    %v1985 = vadd.f32 0.0, %v1984
    %v1986 = vpop.f32.mrb[0].mxu0
    %v1987 = vpop.f32.mrb[0].mxu0
    %v1988 = vpop.f32.mrb[0].mxu0
    %1989 = vdwg.mxu0
    %v1990 = vpack.c.bf16 %v1985, %v1985
    %v1991 = vld [vmem:[#allocation10] sm:$0xff]
    %v1992 = vld [vmem:[#allocation10 + $0x8] sm:$0xff]
    %v1993 = vld [vmem:[#allocation10 + $0x10] sm:$0xff]
    %v1994 = vld [vmem:[#allocation10 + $0x18] sm:$0xff]
    %v1995 = vld [vmem:[#allocation10 + $0x20] sm:$0xff]
    %v1996 = vld [vmem:[#allocation10 + $0x28] sm:$0xff]
    %v1997 = vld [vmem:[#allocation10 + $0x30] sm:$0xff]
    %v1998 = vld [vmem:[#allocation10 + $0x38] sm:$0xff]
    %v1999 = vld [vmem:[#allocation10 + $0x40] sm:$0xff]
    %v2000 = vld [vmem:[#allocation10 + $0x48] sm:$0xff]
    %v2001 = vld [vmem:[#allocation10 + $0x50] sm:$0xff]
    %v2002 = vld [vmem:[#allocation10 + $0x58] sm:$0xff]
    %v2003 = vld [vmem:[#allocation10 + $0x60] sm:$0xff]
    %v2004 = vld [vmem:[#allocation10 + $0x68] sm:$0xff]
    %v2005 = vld [vmem:[#allocation10 + $0x70] sm:$0xff]
    %v2006 = vld [vmem:[#allocation10 + $0x78] sm:$0xff]
    %v2007 = vld [vmem:[#allocation10 + $0x80] sm:$0xff]
    %v2008 = vld [vmem:[#allocation10 + $0x88] sm:$0xff]
    %v2009 = vld [vmem:[#allocation10 + $0x90] sm:$0xff]
    %v2010 = vld [vmem:[#allocation10 + $0x98] sm:$0xff]
    %v2011 = vld [vmem:[#allocation10 + $0xa0] sm:$0xff]
    %v2012 = vld [vmem:[#allocation10 + $0xa8] sm:$0xff]
    %v2013 = vld [vmem:[#allocation10 + $0xb0] sm:$0xff]
    %v2014 = vld [vmem:[#allocation10 + $0xb8] sm:$0xff]
    %v2015 = vld [vmem:[#allocation10 + $0xc0] sm:$0xff]
    %v2016 = vld [vmem:[#allocation10 + $0xc8] sm:$0xff]
    %v2017 = vld [vmem:[#allocation10 + $0xd0] sm:$0xff]
    %v2018 = vld [vmem:[#allocation10 + $0xd8] sm:$0xff]
    %v2019 = vld [vmem:[#allocation10 + $0xe0] sm:$0xff]
    %v2020 = vld [vmem:[#allocation10 + $0xe8] sm:$0xff]
    %v2021 = vld [vmem:[#allocation10 + $0xf0] sm:$0xff]
    %v2022 = vld [vmem:[#allocation10 + $0xf8] sm:$0xff]
    %v2023 = vld [vmem:[#allocation10 + $0x100] sm:$0xff]
    %v2024 = vld [vmem:[#allocation10 + $0x108] sm:$0xff]
    %v2025 = vld [vmem:[#allocation10 + $0x110] sm:$0xff]
    %v2026 = vld [vmem:[#allocation10 + $0x118] sm:$0xff]
    %v2027 = vld [vmem:[#allocation10 + $0x120] sm:$0xff]
    %v2028 = vld [vmem:[#allocation10 + $0x128] sm:$0xff]
    %v2029 = vld [vmem:[#allocation10 + $0x130] sm:$0xff]
    %v2030 = vld [vmem:[#allocation10 + $0x138] sm:$0xff]
    %v2031 = vld [vmem:[#allocation10 + $0x140] sm:$0xff]
    %v2032 = vld [vmem:[#allocation10 + $0x148] sm:$0xff]
    %v2033 = vld [vmem:[#allocation10 + $0x150] sm:$0xff]
    %v2034 = vld [vmem:[#allocation10 + $0x158] sm:$0xff]
    %v2035 = vld [vmem:[#allocation10 + $0x160] sm:$0xff]
    %v2036 = vld [vmem:[#allocation10 + $0x168] sm:$0xff]
    %v2037 = vld [vmem:[#allocation10 + $0x170] sm:$0xff]
    %v2038 = vld [vmem:[#allocation10 + $0x178] sm:$0xff]
    %v2039 = vld [vmem:[#allocation10 + $0x180] sm:$0xff]
    %v2040 = vld [vmem:[#allocation10 + $0x188] sm:$0xff]
    %v2041 = vld [vmem:[#allocation10 + $0x190] sm:$0xff]
    %v2042 = vld [vmem:[#allocation10 + $0x198] sm:$0xff]
    %v2043 = vld [vmem:[#allocation10 + $0x1a0] sm:$0xff]
    %v2044 = vld [vmem:[#allocation10 + $0x1a8] sm:$0xff]
    %v2045 = vld [vmem:[#allocation10 + $0x1b0] sm:$0xff]
    %v2046 = vld [vmem:[#allocation10 + $0x1b8] sm:$0xff]
    %v2047 = vld [vmem:[#allocation10 + $0x1c0] sm:$0xff]
    %v2048 = vld [vmem:[#allocation10 + $0x1c8] sm:$0xff]
    %v2049 = vld [vmem:[#allocation10 + $0x1d0] sm:$0xff]
    %v2050 = vld [vmem:[#allocation10 + $0x1d8] sm:$0xff]
    %s2051 = scalar_lea.vmem [#allocation9], 1
    %v2052 = vld [vmem:[%s2051] sm:$0x1]
    %v2054 = vsel %vm1942, %v2052, 0
    %2056 = vmatprep.subr.bf16.mxu0 0
    %2057 = vmatpush1.bf16.msra.mxu0 %v1948
    %2058 = vmatprep.subr.bf16.mxu0 0
    %2059 = vmatpush1.bf16.msra.mxu0 0
    %2060 = vmatprep.subr.bf16.mxu0 0
    %2061 = vmatpush1.bf16.msra.mxu0 0
    %2062 = vmatprep.subr.bf16.mxu0 0
    %2063 = vmatpush1.bf16.msra.mxu0 0
    %2064 = vmatprep.subr.bf16.mxu0 0
    %2065 = vmatpush1.bf16.msra.mxu0 0
    %2066 = vmatprep.subr.bf16.mxu0 0
    %2067 = vmatpush1.bf16.msra.mxu0 0
    %2068 = vmatprep.subr.bf16.mxu0 0
    %2069 = vmatpush1.bf16.msra.mxu0 0
    %2070 = vmatprep.subr.bf16.mxu0 0
    %2071 = vmatpush1.bf16.msra.mxu0 0
    %2072 = vmatprep.subr.bf16.mxu0 0
    %2073 = vmatpush1.bf16.msra.mxu0 0
    %2074 = vmatprep.subr.bf16.mxu0 0
    %2075 = vmatpush1.bf16.msra.mxu0 0
    %2076 = vmatprep.subr.bf16.mxu0 0
    %2077 = vmatpush1.bf16.msra.mxu0 0
    %2078 = vmatprep.subr.bf16.mxu0 0
    %2079 = vmatpush1.bf16.msra.mxu0 0
    %2080 = vmatprep.subr.bf16.mxu0 0
    %2081 = vmatpush1.bf16.msra.mxu0 0
    %2082 = vmatprep.subr.bf16.mxu0 0
    %2083 = vmatpush1.bf16.msra.mxu0 0
    %2084 = vmatprep.subr.bf16.mxu0 0
    %2085 = vmatpush1.bf16.msra.mxu0 0
    %2086 = vmatprep.subr.bf16.mxu0 0
    %2087 = vmatpush1.bf16.msra.mxu0 0
    %2088 = vmatprep.mubr.bf16.mxu0 0
    %2089 = vmatmul.mubr.bf16.gmra.mrb[0].mxu0 %v2054
    %v2090 = vpop.f32.mrb[0].mxu0
    %v2091 = vadd.f32 0.0, %v2090
    %v2092 = vpop.f32.mrb[0].mxu0
    %v2093 = vpop.f32.mrb[0].mxu0
    %v2094 = vpop.f32.mrb[0].mxu0
    %2095 = vdwg.mxu0
    %v2096 = vpack.c.bf16 %v2091, %v2091
    %s2097 = scalar_lea.vmem [#allocation10], 480
    %v2098 = vld [vmem:[%s2097] sm:$0xff]
    %v2099 = vld [vmem:[%s2097 + $0x8] sm:$0xff]
    %v2100 = vld [vmem:[%s2097 + $0x10] sm:$0xff]
    %v2101 = vld [vmem:[%s2097 + $0x18] sm:$0xff]
    %v2102 = vld [vmem:[%s2097 + $0x20] sm:$0xff]
    %v2103 = vld [vmem:[%s2097 + $0x28] sm:$0xff]
    %v2104 = vld [vmem:[%s2097 + $0x30] sm:$0xff]
    %v2105 = vld [vmem:[%s2097 + $0x38] sm:$0xff]
    %v2106 = vld [vmem:[%s2097 + $0x40] sm:$0xff]
    %v2107 = vld [vmem:[%s2097 + $0x48] sm:$0xff]
    %v2108 = vld [vmem:[%s2097 + $0x50] sm:$0xff]
    %v2109 = vld [vmem:[%s2097 + $0x58] sm:$0xff]
    %v2110 = vld [vmem:[%s2097 + $0x60] sm:$0xff]
    %v2111 = vld [vmem:[%s2097 + $0x68] sm:$0xff]
    %v2112 = vld [vmem:[%s2097 + $0x70] sm:$0xff]
    %v2113 = vld [vmem:[%s2097 + $0x78] sm:$0xff]
    %v2114 = vld [vmem:[%s2097 + $0x80] sm:$0xff]
    %v2115 = vld [vmem:[%s2097 + $0x88] sm:$0xff]
    %v2116 = vld [vmem:[%s2097 + $0x90] sm:$0xff]
    %v2117 = vld [vmem:[%s2097 + $0x98] sm:$0xff]
    %v2118 = vld [vmem:[%s2097 + $0xa0] sm:$0xff]
    %v2119 = vld [vmem:[%s2097 + $0xa8] sm:$0xff]
    %v2120 = vld [vmem:[%s2097 + $0xb0] sm:$0xff]
    %v2121 = vld [vmem:[%s2097 + $0xb8] sm:$0xff]
    %v2122 = vld [vmem:[%s2097 + $0xc0] sm:$0xff]
    %v2123 = vld [vmem:[%s2097 + $0xc8] sm:$0xff]
    %v2124 = vld [vmem:[%s2097 + $0xd0] sm:$0xff]
    %v2125 = vld [vmem:[%s2097 + $0xd8] sm:$0xff]
    %v2126 = vld [vmem:[%s2097 + $0xe0] sm:$0xff]
    %v2127 = vld [vmem:[%s2097 + $0xe8] sm:$0xff]
    %v2128 = vld [vmem:[%s2097 + $0xf0] sm:$0xff]
    %v2129 = vld [vmem:[%s2097 + $0xf8] sm:$0xff]
    %v2130 = vld [vmem:[%s2097 + $0x100] sm:$0xff]
    %v2131 = vld [vmem:[%s2097 + $0x108] sm:$0xff]
    %v2132 = vld [vmem:[%s2097 + $0x110] sm:$0xff]
    %v2133 = vld [vmem:[%s2097 + $0x118] sm:$0xff]
    %v2134 = vld [vmem:[%s2097 + $0x120] sm:$0xff]
    %v2135 = vld [vmem:[%s2097 + $0x128] sm:$0xff]
    %v2136 = vld [vmem:[%s2097 + $0x130] sm:$0xff]
    %v2137 = vld [vmem:[%s2097 + $0x138] sm:$0xff]
    %v2138 = vld [vmem:[%s2097 + $0x140] sm:$0xff]
    %v2139 = vld [vmem:[%s2097 + $0x148] sm:$0xff]
    %v2140 = vld [vmem:[%s2097 + $0x150] sm:$0xff]
    %v2141 = vld [vmem:[%s2097 + $0x158] sm:$0xff]
    %v2142 = vld [vmem:[%s2097 + $0x160] sm:$0xff]
    %v2143 = vld [vmem:[%s2097 + $0x168] sm:$0xff]
    %v2144 = vld [vmem:[%s2097 + $0x170] sm:$0xff]
    %v2145 = vld [vmem:[%s2097 + $0x178] sm:$0xff]
    %v2146 = vld [vmem:[%s2097 + $0x180] sm:$0xff]
    %v2147 = vld [vmem:[%s2097 + $0x188] sm:$0xff]
    %v2148 = vld [vmem:[%s2097 + $0x190] sm:$0xff]
    %v2149 = vld [vmem:[%s2097 + $0x198] sm:$0xff]
    %v2150 = vld [vmem:[%s2097 + $0x1a0] sm:$0xff]
    %v2151 = vld [vmem:[%s2097 + $0x1a8] sm:$0xff]
    %v2152 = vld [vmem:[%s2097 + $0x1b0] sm:$0xff]
    %v2153 = vld [vmem:[%s2097 + $0x1b8] sm:$0xff]
    %v2154 = vld [vmem:[%s2097 + $0x1c0] sm:$0xff]
    %v2155 = vld [vmem:[%s2097 + $0x1c8] sm:$0xff]
    %v2156 = vld [vmem:[%s2097 + $0x1d0] sm:$0xff]
    %v2157 = vld [vmem:[%s2097 + $0x1d8] sm:$0xff]
    %v2218 = vunpack.c.l.b16 %v2098
    %v2219 = vunpack.c.h.b16 %v2098
    %v2220 = vunpack.c.l.b16 %v2099
    %v2221 = vunpack.c.h.b16 %v2099
    %v2222 = vunpack.c.l.b16 %v2100
    %v2223 = vunpack.c.h.b16 %v2100
    %v2224 = vunpack.c.l.b16 %v2101
    %v2225 = vunpack.c.h.b16 %v2101
    %v2226 = vunpack.c.l.b16 %v2102
    %v2227 = vunpack.c.h.b16 %v2102
    %v2228 = vunpack.c.l.b16 %v2103
    %v2229 = vunpack.c.h.b16 %v2103
    %v2230 = vunpack.c.l.b16 %v2104
    %v2231 = vunpack.c.h.b16 %v2104
    %v2232 = vunpack.c.l.b16 %v2105
    %v2233 = vunpack.c.h.b16 %v2105
    %v2234 = vunpack.c.l.b16 %v2106
    %v2235 = vunpack.c.h.b16 %v2106
    %v2236 = vunpack.c.l.b16 %v2107
    %v2237 = vunpack.c.h.b16 %v2107
    %v2238 = vunpack.c.l.b16 %v2108
    %v2239 = vunpack.c.h.b16 %v2108
    %v2240 = vunpack.c.l.b16 %v2109
    %v2241 = vunpack.c.h.b16 %v2109
    %v2242 = vunpack.c.l.b16 %v2110
    %v2243 = vunpack.c.h.b16 %v2110
    %v2244 = vunpack.c.l.b16 %v2111
    %v2245 = vunpack.c.h.b16 %v2111
    %v2246 = vunpack.c.l.b16 %v2112
    %v2247 = vunpack.c.h.b16 %v2112
    %v2248 = vunpack.c.l.b16 %v2113
    %v2249 = vunpack.c.h.b16 %v2113
    %v2250 = vunpack.c.l.b16 %v2114
    %v2251 = vunpack.c.h.b16 %v2114
    %v2252 = vunpack.c.l.b16 %v2115
    %v2253 = vunpack.c.h.b16 %v2115
    %v2254 = vunpack.c.l.b16 %v2116
    %v2255 = vunpack.c.h.b16 %v2116
    %v2256 = vunpack.c.l.b16 %v2117
    %v2257 = vunpack.c.h.b16 %v2117
    %v2258 = vunpack.c.l.b16 %v2118
    %v2259 = vunpack.c.h.b16 %v2118
    %v2260 = vunpack.c.l.b16 %v2119
    %v2261 = vunpack.c.h.b16 %v2119
    %v2262 = vunpack.c.l.b16 %v2120
    %v2263 = vunpack.c.h.b16 %v2120
    %v2264 = vunpack.c.l.b16 %v2121
    %v2265 = vunpack.c.h.b16 %v2121
    %v2266 = vunpack.c.l.b16 %v2122
    %v2267 = vunpack.c.h.b16 %v2122
    %v2268 = vunpack.c.l.b16 %v2123
    %v2269 = vunpack.c.h.b16 %v2123
    %v2270 = vunpack.c.l.b16 %v2124
    %v2271 = vunpack.c.h.b16 %v2124
    %v2272 = vunpack.c.l.b16 %v2125
    %v2273 = vunpack.c.h.b16 %v2125
    %v2274 = vunpack.c.l.b16 %v2126
    %v2275 = vunpack.c.h.b16 %v2126
    %v2276 = vunpack.c.l.b16 %v2127
    %v2277 = vunpack.c.h.b16 %v2127
    %v2278 = vunpack.c.l.b16 %v2128
    %v2279 = vunpack.c.h.b16 %v2128
    %v2280 = vunpack.c.l.b16 %v2129
    %v2281 = vunpack.c.h.b16 %v2129
    %v2282 = vunpack.c.l.b16 %v2130
    %v2283 = vunpack.c.h.b16 %v2130
    %v2284 = vunpack.c.l.b16 %v2131
    %v2285 = vunpack.c.h.b16 %v2131
    %v2286 = vunpack.c.l.b16 %v2132
    %v2287 = vunpack.c.h.b16 %v2132
    %v2288 = vunpack.c.l.b16 %v2133
    %v2289 = vunpack.c.h.b16 %v2133
    %v2290 = vunpack.c.l.b16 %v2134
    %v2291 = vunpack.c.h.b16 %v2134
    %v2292 = vunpack.c.l.b16 %v2135
    %v2293 = vunpack.c.h.b16 %v2135
    %v2294 = vunpack.c.l.b16 %v2136
    %v2295 = vunpack.c.h.b16 %v2136
    %v2296 = vunpack.c.l.b16 %v2137
    %v2297 = vunpack.c.h.b16 %v2137
    %v2298 = vunpack.c.l.b16 %v2138
    %v2299 = vunpack.c.h.b16 %v2138
    %v2300 = vunpack.c.l.b16 %v2139
    %v2301 = vunpack.c.h.b16 %v2139
    %v2302 = vunpack.c.l.b16 %v2140
    %v2303 = vunpack.c.h.b16 %v2140
    %v2304 = vunpack.c.l.b16 %v2141
    %v2305 = vunpack.c.h.b16 %v2141
    %v2306 = vunpack.c.l.b16 %v2142
    %v2307 = vunpack.c.h.b16 %v2142
    %v2308 = vunpack.c.l.b16 %v2143
    %v2309 = vunpack.c.h.b16 %v2143
    %v2310 = vunpack.c.l.b16 %v2144
    %v2311 = vunpack.c.h.b16 %v2144
    %v2312 = vunpack.c.l.b16 %v2145
    %v2313 = vunpack.c.h.b16 %v2145
    %v2314 = vunpack.c.l.b16 %v2146
    %v2315 = vunpack.c.h.b16 %v2146
    %v2316 = vunpack.c.l.b16 %v2147
    %v2317 = vunpack.c.h.b16 %v2147
    %v2318 = vunpack.c.l.b16 %v2148
    %v2319 = vunpack.c.h.b16 %v2148
    %v2320 = vunpack.c.l.b16 %v2149
    %v2321 = vunpack.c.h.b16 %v2149
    %v2322 = vunpack.c.l.b16 %v2150
    %v2323 = vunpack.c.h.b16 %v2150
    %v2324 = vunpack.c.l.b16 %v2151
    %v2325 = vunpack.c.h.b16 %v2151
    %v2326 = vunpack.c.l.b16 %v2152
    %v2327 = vunpack.c.h.b16 %v2152
    %v2328 = vunpack.c.l.b16 %v2153
    %v2329 = vunpack.c.h.b16 %v2153
    %v2330 = vunpack.c.l.b16 %v2154
    %v2331 = vunpack.c.h.b16 %v2154
    %v2332 = vunpack.c.l.b16 %v2155
    %v2333 = vunpack.c.h.b16 %v2155
    %v2334 = vunpack.c.l.b16 %v2156
    %v2335 = vunpack.c.h.b16 %v2156
    %v2336 = vunpack.c.l.b16 %v2157
    %v2337 = vunpack.c.h.b16 %v2157
    %v2338 = vpack.c.b16 %v2226, %v2218
    %v2339 = vpack.c.b16 %v2227, %v2219
    %v2340 = vpack.c.b16 %v2228, %v2220
    %v2341 = vpack.c.b16 %v2229, %v2221
    %v2342 = vpack.c.b16 %v2230, %v2222
    %v2343 = vpack.c.b16 %v2231, %v2223
    %v2344 = vpack.c.b16 %v2232, %v2224
    %v2345 = vpack.c.b16 %v2233, %v2225
    %v2346 = vpack.c.b16 %v2242, %v2234
    %v2347 = vpack.c.b16 %v2243, %v2235
    %v2348 = vpack.c.b16 %v2244, %v2236
    %v2349 = vpack.c.b16 %v2245, %v2237
    %v2350 = vpack.c.b16 %v2246, %v2238
    %v2351 = vpack.c.b16 %v2247, %v2239
    %v2352 = vpack.c.b16 %v2248, %v2240
    %v2353 = vpack.c.b16 %v2249, %v2241
    %v2354 = vpack.c.b16 %v2258, %v2250
    %v2355 = vpack.c.b16 %v2259, %v2251
    %v2356 = vpack.c.b16 %v2260, %v2252
    %v2357 = vpack.c.b16 %v2261, %v2253
    %v2358 = vpack.c.b16 %v2262, %v2254
    %v2359 = vpack.c.b16 %v2263, %v2255
    %v2360 = vpack.c.b16 %v2264, %v2256
    %v2361 = vpack.c.b16 %v2265, %v2257
    %v2362 = vpack.c.b16 %v2274, %v2266
    %v2363 = vpack.c.b16 %v2275, %v2267
    %v2364 = vpack.c.b16 %v2276, %v2268
    %v2365 = vpack.c.b16 %v2277, %v2269
    %v2366 = vpack.c.b16 %v2278, %v2270
    %v2367 = vpack.c.b16 %v2279, %v2271
    %v2368 = vpack.c.b16 %v2280, %v2272
    %v2369 = vpack.c.b16 %v2281, %v2273
    %v2370 = vpack.c.b16 %v2290, %v2282
    %v2371 = vpack.c.b16 %v2291, %v2283
    %v2372 = vpack.c.b16 %v2292, %v2284
    %v2373 = vpack.c.b16 %v2293, %v2285
    %v2374 = vpack.c.b16 %v2294, %v2286
    %v2375 = vpack.c.b16 %v2295, %v2287
    %v2376 = vpack.c.b16 %v2296, %v2288
    %v2377 = vpack.c.b16 %v2297, %v2289
    %v2378 = vpack.c.b16 %v2306, %v2298
    %v2379 = vpack.c.b16 %v2307, %v2299
    %v2380 = vpack.c.b16 %v2308, %v2300
    %v2381 = vpack.c.b16 %v2309, %v2301
    %v2382 = vpack.c.b16 %v2310, %v2302
    %v2383 = vpack.c.b16 %v2311, %v2303
    %v2384 = vpack.c.b16 %v2312, %v2304
    %v2385 = vpack.c.b16 %v2313, %v2305
    %v2386 = vpack.c.b16 %v2322, %v2314
    %v2387 = vpack.c.b16 %v2323, %v2315
    %v2388 = vpack.c.b16 %v2324, %v2316
    %v2389 = vpack.c.b16 %v2325, %v2317
    %v2390 = vpack.c.b16 %v2326, %v2318
    %v2391 = vpack.c.b16 %v2327, %v2319
    %v2392 = vpack.c.b16 %v2328, %v2320
    %v2393 = vpack.c.b16 %v2329, %v2321
    %v2394 = vpack.c.b16 %v2330, %v2330
    %v2395 = vpack.c.b16 %v2331, %v2331
    %v2396 = vpack.c.b16 %v2332, %v2332
    %v2397 = vpack.c.b16 %v2333, %v2333
    %v2398 = vpack.c.b16 %v2334, %v2334
    %v2399 = vpack.c.b16 %v2335, %v2335
    %v2400 = vpack.c.b16 %v2336, %v2336
    %v2401 = vpack.c.b16 %v2337, %v2337
    %vm2458 = vcmask 982016
    %v2460 = vsel %vm2458, %v2096, 0
    %v2463 = vsel %vm181, %v2394, 0
    %v2466 = vsel %vm181, %v2395, 0
    %v2469 = vsel %vm181, %v2396, 0
    %v2472 = vsel %vm181, %v2397, 0
    %v2475 = vsel %vm181, %v2398, 0
    %v2478 = vsel %vm181, %v2399, 0
    %v2481 = vsel %vm181, %v2400, 0
    %v2484 = vsel %vm181, %v2401, 0
    %2486 = vmatprep.subr.bf16.mxu0 %v2339
    %2487 = vmatpush1.bf16.msra.mxu0 %v2338
    %2488 = vmatprep.subr.bf16.mxu0 %v2347
    %2489 = vmatpush1.bf16.msra.mxu0 %v2346
    %2490 = vmatprep.subr.bf16.mxu0 %v2355
    %2491 = vmatpush1.bf16.msra.mxu0 %v2354
    %2492 = vmatprep.subr.bf16.mxu0 %v2363
    %2493 = vmatpush1.bf16.msra.mxu0 %v2362
    %2494 = vmatprep.subr.bf16.mxu0 %v2371
    %2495 = vmatpush1.bf16.msra.mxu0 %v2370
    %2496 = vmatprep.subr.bf16.mxu0 %v2379
    %2497 = vmatpush1.bf16.msra.mxu0 %v2378
    %2498 = vmatprep.subr.bf16.mxu0 %v2387
    %2499 = vmatpush1.bf16.msra.mxu0 %v2386
    %2500 = vmatprep.subr.bf16.mxu0 %v2466
    %2501 = vmatpush1.bf16.msra.mxu0 %v2463
    %2502 = vmatprep.subr.bf16.mxu0 0
    %2503 = vmatpush1.bf16.msra.mxu0 0
    %2504 = vmatprep.subr.bf16.mxu0 0
    %2505 = vmatpush1.bf16.msra.mxu0 0
    %2506 = vmatprep.subr.bf16.mxu0 0
    %2507 = vmatpush1.bf16.msra.mxu0 0
    %2508 = vmatprep.subr.bf16.mxu0 0
    %2509 = vmatpush1.bf16.msra.mxu0 0
    %2510 = vmatprep.subr.bf16.mxu0 0
    %2511 = vmatpush1.bf16.msra.mxu0 0
    %2512 = vmatprep.subr.bf16.mxu0 0
    %2513 = vmatpush1.bf16.msra.mxu0 0
    %2514 = vmatprep.subr.bf16.mxu0 0
    %2515 = vmatpush1.bf16.msra.mxu0 0
    %2516 = vmatprep.subr.bf16.mxu0 0
    %2517 = vmatpush1.bf16.msra.mxu0 0
    %2518 = vmatprep.mubr.bf16.mxu0 0
    %2519 = vmatmul.mubr.bf16.gmra.mrb[0].mxu0 %v2460
    %v2520 = vpop.f32.mrb[0].mxu0
    %v2521 = vadd.f32 0.0, %v2520
    %v2522 = vpop.f32.mrb[0].mxu0
    %v2523 = vadd.f32 0.0, %v2522
    %v2524 = vpop.f32.mrb[0].mxu0
    %v2525 = vpop.f32.mrb[0].mxu0
    %2526 = vdwg.mxu0
    %2527 = vmatprep.subr.bf16.mxu0 %v2341
    %2528 = vmatpush1.bf16.msra.mxu0 %v2340
    %2529 = vmatprep.subr.bf16.mxu0 %v2349
    %2530 = vmatpush1.bf16.msra.mxu0 %v2348
    %2531 = vmatprep.subr.bf16.mxu0 %v2357
    %2532 = vmatpush1.bf16.msra.mxu0 %v2356
    %2533 = vmatprep.subr.bf16.mxu0 %v2365
    %2534 = vmatpush1.bf16.msra.mxu0 %v2364
    %2535 = vmatprep.subr.bf16.mxu0 %v2373
    %2536 = vmatpush1.bf16.msra.mxu0 %v2372
    %2537 = vmatprep.subr.bf16.mxu0 %v2381
    %2538 = vmatpush1.bf16.msra.mxu0 %v2380
    %2539 = vmatprep.subr.bf16.mxu0 %v2389
    %2540 = vmatpush1.bf16.msra.mxu0 %v2388
    %2541 = vmatprep.subr.bf16.mxu0 %v2472
    %2542 = vmatpush1.bf16.msra.mxu0 %v2469
    %2543 = vmatprep.subr.bf16.mxu0 0
    %2544 = vmatpush1.bf16.msra.mxu0 0
    %2545 = vmatprep.subr.bf16.mxu0 0
    %2546 = vmatpush1.bf16.msra.mxu0 0
    %2547 = vmatprep.subr.bf16.mxu0 0
    %2548 = vmatpush1.bf16.msra.mxu0 0
    %2549 = vmatprep.subr.bf16.mxu0 0
    %2550 = vmatpush1.bf16.msra.mxu0 0
    %2551 = vmatprep.subr.bf16.mxu0 0
    %2552 = vmatpush1.bf16.msra.mxu0 0
    %2553 = vmatprep.subr.bf16.mxu0 0
    %2554 = vmatpush1.bf16.msra.mxu0 0
    %2555 = vmatprep.subr.bf16.mxu0 0
    %2556 = vmatpush1.bf16.msra.mxu0 0
    %2557 = vmatprep.subr.bf16.mxu0 0
    %2558 = vmatpush1.bf16.msra.mxu0 0
    %2559 = vmatprep.mubr.bf16.mxu0 0
    %2560 = vmatmul.mubr.bf16.gmra.mrb[0].mxu0 %v2460
    %v2561 = vpop.f32.mrb[0].mxu0
    %v2562 = vadd.f32 0.0, %v2561
    %v2563 = vpop.f32.mrb[0].mxu0
    %v2564 = vadd.f32 0.0, %v2563
    %v2565 = vpop.f32.mrb[0].mxu0
    %v2566 = vpop.f32.mrb[0].mxu0
    %2567 = vdwg.mxu0
    %2568 = vmatprep.subr.bf16.mxu0 %v2343
    %2569 = vmatpush1.bf16.msra.mxu0 %v2342
    %2570 = vmatprep.subr.bf16.mxu0 %v2351
    %2571 = vmatpush1.bf16.msra.mxu0 %v2350
    %2572 = vmatprep.subr.bf16.mxu0 %v2359
    %2573 = vmatpush1.bf16.msra.mxu0 %v2358
    %2574 = vmatprep.subr.bf16.mxu0 %v2367
    %2575 = vmatpush1.bf16.msra.mxu0 %v2366
    %2576 = vmatprep.subr.bf16.mxu0 %v2375
    %2577 = vmatpush1.bf16.msra.mxu0 %v2374
    %2578 = vmatprep.subr.bf16.mxu0 %v2383
    %2579 = vmatpush1.bf16.msra.mxu0 %v2382
    %2580 = vmatprep.subr.bf16.mxu0 %v2391
    %2581 = vmatpush1.bf16.msra.mxu0 %v2390
    %2582 = vmatprep.subr.bf16.mxu0 %v2478
    %2583 = vmatpush1.bf16.msra.mxu0 %v2475
    %2584 = vmatprep.subr.bf16.mxu0 0
    %2585 = vmatpush1.bf16.msra.mxu0 0
    %2586 = vmatprep.subr.bf16.mxu0 0
    %2587 = vmatpush1.bf16.msra.mxu0 0
    %2588 = vmatprep.subr.bf16.mxu0 0
    %2589 = vmatpush1.bf16.msra.mxu0 0
    %2590 = vmatprep.subr.bf16.mxu0 0
    %2591 = vmatpush1.bf16.msra.mxu0 0
    %2592 = vmatprep.subr.bf16.mxu0 0
    %2593 = vmatpush1.bf16.msra.mxu0 0
    %2594 = vmatprep.subr.bf16.mxu0 0
    %2595 = vmatpush1.bf16.msra.mxu0 0
    %2596 = vmatprep.subr.bf16.mxu0 0
    %2597 = vmatpush1.bf16.msra.mxu0 0
    %2598 = vmatprep.subr.bf16.mxu0 0
    %2599 = vmatpush1.bf16.msra.mxu0 0
    %2600 = vmatprep.mubr.bf16.mxu0 0
    %2601 = vmatmul.mubr.bf16.gmra.mrb[0].mxu0 %v2460
    %v2602 = vpop.f32.mrb[0].mxu0
    %v2603 = vadd.f32 0.0, %v2602
    %v2604 = vpop.f32.mrb[0].mxu0
    %v2605 = vadd.f32 0.0, %v2604
    %v2606 = vpop.f32.mrb[0].mxu0
    %v2607 = vpop.f32.mrb[0].mxu0
    %2608 = vdwg.mxu0
    %2609 = vmatprep.subr.bf16.mxu0 %v2345
    %2610 = vmatpush1.bf16.msra.mxu0 %v2344
    %2611 = vmatprep.subr.bf16.mxu0 %v2353
    %2612 = vmatpush1.bf16.msra.mxu0 %v2352
    %2613 = vmatprep.subr.bf16.mxu0 %v2361
    %2614 = vmatpush1.bf16.msra.mxu0 %v2360
    %2615 = vmatprep.subr.bf16.mxu0 %v2369
    %2616 = vmatpush1.bf16.msra.mxu0 %v2368
    %2617 = vmatprep.subr.bf16.mxu0 %v2377
    %2618 = vmatpush1.bf16.msra.mxu0 %v2376
    %2619 = vmatprep.subr.bf16.mxu0 %v2385
    %2620 = vmatpush1.bf16.msra.mxu0 %v2384
    %2621 = vmatprep.subr.bf16.mxu0 %v2393
    %2622 = vmatpush1.bf16.msra.mxu0 %v2392
    %2623 = vmatprep.subr.bf16.mxu0 %v2484
    %2624 = vmatpush1.bf16.msra.mxu0 %v2481
    %2625 = vmatprep.subr.bf16.mxu0 0
    %2626 = vmatpush1.bf16.msra.mxu0 0
    %2627 = vmatprep.subr.bf16.mxu0 0
    %2628 = vmatpush1.bf16.msra.mxu0 0
    %2629 = vmatprep.subr.bf16.mxu0 0
    %2630 = vmatpush1.bf16.msra.mxu0 0
    %2631 = vmatprep.subr.bf16.mxu0 0
    %2632 = vmatpush1.bf16.msra.mxu0 0
    %2633 = vmatprep.subr.bf16.mxu0 0
    %2634 = vmatpush1.bf16.msra.mxu0 0
    %2635 = vmatprep.subr.bf16.mxu0 0
    %2636 = vmatpush1.bf16.msra.mxu0 0
    %2637 = vmatprep.subr.bf16.mxu0 0
    %2638 = vmatpush1.bf16.msra.mxu0 0
    %2639 = vmatprep.subr.bf16.mxu0 0
    %2640 = vmatpush1.bf16.msra.mxu0 0
    %2641 = vmatprep.mubr.bf16.mxu0 0
    %2642 = vmatmul.mubr.bf16.gmra.mrb[0].mxu0 %v2460
    %v2643 = vpop.f32.mrb[0].mxu0
    %v2644 = vadd.f32 0.0, %v2643
    %v2645 = vpop.f32.mrb[0].mxu0
    %v2646 = vadd.f32 0.0, %v2645
    %v2647 = vpop.f32.mrb[0].mxu0
    %v2648 = vpop.f32.mrb[0].mxu0
    %2649 = vdwg.mxu0
    %v2710 = vunpack.c.l.b16 %v1991
    %v2711 = vunpack.c.h.b16 %v1991
    %v2712 = vunpack.c.l.b16 %v1992
    %v2713 = vunpack.c.h.b16 %v1992
    %v2714 = vunpack.c.l.b16 %v1993
    %v2715 = vunpack.c.h.b16 %v1993
    %v2716 = vunpack.c.l.b16 %v1994
    %v2717 = vunpack.c.h.b16 %v1994
    %v2718 = vunpack.c.l.b16 %v1995
    %v2719 = vunpack.c.h.b16 %v1995
    %v2720 = vunpack.c.l.b16 %v1996
    %v2721 = vunpack.c.h.b16 %v1996
    %v2722 = vunpack.c.l.b16 %v1997
    %v2723 = vunpack.c.h.b16 %v1997
    %v2724 = vunpack.c.l.b16 %v1998
    %v2725 = vunpack.c.h.b16 %v1998
    %v2726 = vunpack.c.l.b16 %v1999
    %v2727 = vunpack.c.h.b16 %v1999
    %v2728 = vunpack.c.l.b16 %v2000
    %v2729 = vunpack.c.h.b16 %v2000
    %v2730 = vunpack.c.l.b16 %v2001
    %v2731 = vunpack.c.h.b16 %v2001
    %v2732 = vunpack.c.l.b16 %v2002
    %v2733 = vunpack.c.h.b16 %v2002
    %v2734 = vunpack.c.l.b16 %v2003
    %v2735 = vunpack.c.h.b16 %v2003
    %v2736 = vunpack.c.l.b16 %v2004
    %v2737 = vunpack.c.h.b16 %v2004
    %v2738 = vunpack.c.l.b16 %v2005
    %v2739 = vunpack.c.h.b16 %v2005
    %v2740 = vunpack.c.l.b16 %v2006
    %v2741 = vunpack.c.h.b16 %v2006
    %v2742 = vunpack.c.l.b16 %v2007
    %v2743 = vunpack.c.h.b16 %v2007
    %v2744 = vunpack.c.l.b16 %v2008
    %v2745 = vunpack.c.h.b16 %v2008
    %v2746 = vunpack.c.l.b16 %v2009
    %v2747 = vunpack.c.h.b16 %v2009
    %v2748 = vunpack.c.l.b16 %v2010
    %v2749 = vunpack.c.h.b16 %v2010
    %v2750 = vunpack.c.l.b16 %v2011
    %v2751 = vunpack.c.h.b16 %v2011
    %v2752 = vunpack.c.l.b16 %v2012
    %v2753 = vunpack.c.h.b16 %v2012
    %v2754 = vunpack.c.l.b16 %v2013
    %v2755 = vunpack.c.h.b16 %v2013
    %v2756 = vunpack.c.l.b16 %v2014
    %v2757 = vunpack.c.h.b16 %v2014
    %v2758 = vunpack.c.l.b16 %v2015
    %v2759 = vunpack.c.h.b16 %v2015
    %v2760 = vunpack.c.l.b16 %v2016
    %v2761 = vunpack.c.h.b16 %v2016
    %v2762 = vunpack.c.l.b16 %v2017
    %v2763 = vunpack.c.h.b16 %v2017
    %v2764 = vunpack.c.l.b16 %v2018
    %v2765 = vunpack.c.h.b16 %v2018
    %v2766 = vunpack.c.l.b16 %v2019
    %v2767 = vunpack.c.h.b16 %v2019
    %v2768 = vunpack.c.l.b16 %v2020
    %v2769 = vunpack.c.h.b16 %v2020
    %v2770 = vunpack.c.l.b16 %v2021
    %v2771 = vunpack.c.h.b16 %v2021
    %v2772 = vunpack.c.l.b16 %v2022
    %v2773 = vunpack.c.h.b16 %v2022
    %v2774 = vunpack.c.l.b16 %v2023
    %v2775 = vunpack.c.h.b16 %v2023
    %v2776 = vunpack.c.l.b16 %v2024
    %v2777 = vunpack.c.h.b16 %v2024
    %v2778 = vunpack.c.l.b16 %v2025
    %v2779 = vunpack.c.h.b16 %v2025
    %v2780 = vunpack.c.l.b16 %v2026
    %v2781 = vunpack.c.h.b16 %v2026
    %v2782 = vunpack.c.l.b16 %v2027
    %v2783 = vunpack.c.h.b16 %v2027
    %v2784 = vunpack.c.l.b16 %v2028
    %v2785 = vunpack.c.h.b16 %v2028
    %v2786 = vunpack.c.l.b16 %v2029
    %v2787 = vunpack.c.h.b16 %v2029
    %v2788 = vunpack.c.l.b16 %v2030
    %v2789 = vunpack.c.h.b16 %v2030
    %v2790 = vunpack.c.l.b16 %v2031
    %v2791 = vunpack.c.h.b16 %v2031
    %v2792 = vunpack.c.l.b16 %v2032
    %v2793 = vunpack.c.h.b16 %v2032
    %v2794 = vunpack.c.l.b16 %v2033
    %v2795 = vunpack.c.h.b16 %v2033
    %v2796 = vunpack.c.l.b16 %v2034
    %v2797 = vunpack.c.h.b16 %v2034
    %v2798 = vunpack.c.l.b16 %v2035
    %v2799 = vunpack.c.h.b16 %v2035
    %v2800 = vunpack.c.l.b16 %v2036
    %v2801 = vunpack.c.h.b16 %v2036
    %v2802 = vunpack.c.l.b16 %v2037
    %v2803 = vunpack.c.h.b16 %v2037
    %v2804 = vunpack.c.l.b16 %v2038
    %v2805 = vunpack.c.h.b16 %v2038
    %v2806 = vunpack.c.l.b16 %v2039
    %v2807 = vunpack.c.h.b16 %v2039
    %v2808 = vunpack.c.l.b16 %v2040
    %v2809 = vunpack.c.h.b16 %v2040
    %v2810 = vunpack.c.l.b16 %v2041
    %v2811 = vunpack.c.h.b16 %v2041
    %v2812 = vunpack.c.l.b16 %v2042
    %v2813 = vunpack.c.h.b16 %v2042
    %v2814 = vunpack.c.l.b16 %v2043
    %v2815 = vunpack.c.h.b16 %v2043
    %v2816 = vunpack.c.l.b16 %v2044
    %v2817 = vunpack.c.h.b16 %v2044
    %v2818 = vunpack.c.l.b16 %v2045
    %v2819 = vunpack.c.h.b16 %v2045
    %v2820 = vunpack.c.l.b16 %v2046
    %v2821 = vunpack.c.h.b16 %v2046
    %v2822 = vunpack.c.l.b16 %v2047
    %v2823 = vunpack.c.h.b16 %v2047
    %v2824 = vunpack.c.l.b16 %v2048
    %v2825 = vunpack.c.h.b16 %v2048
    %v2826 = vunpack.c.l.b16 %v2049
    %v2827 = vunpack.c.h.b16 %v2049
    %v2828 = vunpack.c.l.b16 %v2050
    %v2829 = vunpack.c.h.b16 %v2050
    %v2830 = vpack.c.b16 %v2718, %v2710
    %v2831 = vpack.c.b16 %v2719, %v2711
    %v2832 = vpack.c.b16 %v2720, %v2712
    %v2833 = vpack.c.b16 %v2721, %v2713
    %v2834 = vpack.c.b16 %v2722, %v2714
    %v2835 = vpack.c.b16 %v2723, %v2715
    %v2836 = vpack.c.b16 %v2724, %v2716
    %v2837 = vpack.c.b16 %v2725, %v2717
    %v2838 = vpack.c.b16 %v2734, %v2726
    %v2839 = vpack.c.b16 %v2735, %v2727
    %v2840 = vpack.c.b16 %v2736, %v2728
    %v2841 = vpack.c.b16 %v2737, %v2729
    %v2842 = vpack.c.b16 %v2738, %v2730
    %v2843 = vpack.c.b16 %v2739, %v2731
    %v2844 = vpack.c.b16 %v2740, %v2732
    %v2845 = vpack.c.b16 %v2741, %v2733
    %v2846 = vpack.c.b16 %v2750, %v2742
    %v2847 = vpack.c.b16 %v2751, %v2743
    %v2848 = vpack.c.b16 %v2752, %v2744
    %v2849 = vpack.c.b16 %v2753, %v2745
    %v2850 = vpack.c.b16 %v2754, %v2746
    %v2851 = vpack.c.b16 %v2755, %v2747
    %v2852 = vpack.c.b16 %v2756, %v2748
    %v2853 = vpack.c.b16 %v2757, %v2749
    %v2854 = vpack.c.b16 %v2766, %v2758
    %v2855 = vpack.c.b16 %v2767, %v2759
    %v2856 = vpack.c.b16 %v2768, %v2760
    %v2857 = vpack.c.b16 %v2769, %v2761
    %v2858 = vpack.c.b16 %v2770, %v2762
    %v2859 = vpack.c.b16 %v2771, %v2763
    %v2860 = vpack.c.b16 %v2772, %v2764
    %v2861 = vpack.c.b16 %v2773, %v2765
    %v2862 = vpack.c.b16 %v2782, %v2774
    %v2863 = vpack.c.b16 %v2783, %v2775
    %v2864 = vpack.c.b16 %v2784, %v2776
    %v2865 = vpack.c.b16 %v2785, %v2777
    %v2866 = vpack.c.b16 %v2786, %v2778
    %v2867 = vpack.c.b16 %v2787, %v2779
    %v2868 = vpack.c.b16 %v2788, %v2780
    %v2869 = vpack.c.b16 %v2789, %v2781
    %v2870 = vpack.c.b16 %v2798, %v2790
    %v2871 = vpack.c.b16 %v2799, %v2791
    %v2872 = vpack.c.b16 %v2800, %v2792
    %v2873 = vpack.c.b16 %v2801, %v2793
    %v2874 = vpack.c.b16 %v2802, %v2794
    %v2875 = vpack.c.b16 %v2803, %v2795
    %v2876 = vpack.c.b16 %v2804, %v2796
    %v2877 = vpack.c.b16 %v2805, %v2797
    %v2878 = vpack.c.b16 %v2814, %v2806
    %v2879 = vpack.c.b16 %v2815, %v2807
    %v2880 = vpack.c.b16 %v2816, %v2808
    %v2881 = vpack.c.b16 %v2817, %v2809
    %v2882 = vpack.c.b16 %v2818, %v2810
    %v2883 = vpack.c.b16 %v2819, %v2811
    %v2884 = vpack.c.b16 %v2820, %v2812
    %v2885 = vpack.c.b16 %v2821, %v2813
    %v2886 = vpack.c.b16 %v2822, %v2822
    %v2887 = vpack.c.b16 %v2823, %v2823
    %v2888 = vpack.c.b16 %v2824, %v2824
    %v2889 = vpack.c.b16 %v2825, %v2825
    %v2890 = vpack.c.b16 %v2826, %v2826
    %v2891 = vpack.c.b16 %v2827, %v2827
    %v2892 = vpack.c.b16 %v2828, %v2828
    %v2893 = vpack.c.b16 %v2829, %v2829
    %v2951 = vsel %vm2458, %v1990, 0
    %v2954 = vsel %vm181, %v2886, 0
    %v2957 = vsel %vm181, %v2887, 0
    %v2960 = vsel %vm181, %v2888, 0
    %v2963 = vsel %vm181, %v2889, 0
    %v2966 = vsel %vm181, %v2890, 0
    %v2969 = vsel %vm181, %v2891, 0
    %v2972 = vsel %vm181, %v2892, 0
    %v2975 = vsel %vm181, %v2893, 0
    %2977 = vmatprep.subr.bf16.mxu0 %v2831
    %2978 = vmatpush1.bf16.msra.mxu0 %v2830
    %2979 = vmatprep.subr.bf16.mxu0 %v2839
    %2980 = vmatpush1.bf16.msra.mxu0 %v2838
    %2981 = vmatprep.subr.bf16.mxu0 %v2847
    %2982 = vmatpush1.bf16.msra.mxu0 %v2846
    %2983 = vmatprep.subr.bf16.mxu0 %v2855
    %2984 = vmatpush1.bf16.msra.mxu0 %v2854
    %2985 = vmatprep.subr.bf16.mxu0 %v2863
    %2986 = vmatpush1.bf16.msra.mxu0 %v2862
    %2987 = vmatprep.subr.bf16.mxu0 %v2871
    %2988 = vmatpush1.bf16.msra.mxu0 %v2870
    %2989 = vmatprep.subr.bf16.mxu0 %v2879
    %2990 = vmatpush1.bf16.msra.mxu0 %v2878
    %2991 = vmatprep.subr.bf16.mxu0 %v2957
    %2992 = vmatpush1.bf16.msra.mxu0 %v2954
    %2993 = vmatprep.subr.bf16.mxu0 0
    %2994 = vmatpush1.bf16.msra.mxu0 0
    %2995 = vmatprep.subr.bf16.mxu0 0
    %2996 = vmatpush1.bf16.msra.mxu0 0
    %2997 = vmatprep.subr.bf16.mxu0 0
    %2998 = vmatpush1.bf16.msra.mxu0 0
    %2999 = vmatprep.subr.bf16.mxu0 0
    %3000 = vmatpush1.bf16.msra.mxu0 0
    %3001 = vmatprep.subr.bf16.mxu0 0
    %3002 = vmatpush1.bf16.msra.mxu0 0
    %3003 = vmatprep.subr.bf16.mxu0 0
    %3004 = vmatpush1.bf16.msra.mxu0 0
    %3005 = vmatprep.subr.bf16.mxu0 0
    %3006 = vmatpush1.bf16.msra.mxu0 0
    %3007 = vmatprep.subr.bf16.mxu0 0
    %3008 = vmatpush1.bf16.msra.mxu0 0
    %3009 = vmatprep.mubr.bf16.mxu0 0
    %3010 = vmatmul.mubr.bf16.gmra.mrb[0].mxu0 %v2951
    %v3011 = vpop.f32.mrb[0].mxu0
    %v3012 = vadd.f32 %v2521, %v3011
    %v3013 = vpop.f32.mrb[0].mxu0
    %v3014 = vadd.f32 %v2523, %v3013
    %v3015 = vpop.f32.mrb[0].mxu0
    %v3016 = vpop.f32.mrb[0].mxu0
    %3017 = vdwg.mxu0
    %3018 = vmatprep.subr.bf16.mxu0 %v2833
    %3019 = vmatpush1.bf16.msra.mxu0 %v2832
    %3020 = vmatprep.subr.bf16.mxu0 %v2841
    %3021 = vmatpush1.bf16.msra.mxu0 %v2840
    %3022 = vmatprep.subr.bf16.mxu0 %v2849
    %3023 = vmatpush1.bf16.msra.mxu0 %v2848
    %3024 = vmatprep.subr.bf16.mxu0 %v2857
    %3025 = vmatpush1.bf16.msra.mxu0 %v2856
    %3026 = vmatprep.subr.bf16.mxu0 %v2865
    %3027 = vmatpush1.bf16.msra.mxu0 %v2864
    %3028 = vmatprep.subr.bf16.mxu0 %v2873
    %3029 = vmatpush1.bf16.msra.mxu0 %v2872
    %3030 = vmatprep.subr.bf16.mxu0 %v2881
    %3031 = vmatpush1.bf16.msra.mxu0 %v2880
    %3032 = vmatprep.subr.bf16.mxu0 %v2963
    %3033 = vmatpush1.bf16.msra.mxu0 %v2960
    %3034 = vmatprep.subr.bf16.mxu0 0
    %3035 = vmatpush1.bf16.msra.mxu0 0
    %3036 = vmatprep.subr.bf16.mxu0 0
    %3037 = vmatpush1.bf16.msra.mxu0 0
    %3038 = vmatprep.subr.bf16.mxu0 0
    %3039 = vmatpush1.bf16.msra.mxu0 0
    %3040 = vmatprep.subr.bf16.mxu0 0
    %3041 = vmatpush1.bf16.msra.mxu0 0
    %3042 = vmatprep.subr.bf16.mxu0 0
    %3043 = vmatpush1.bf16.msra.mxu0 0
    %3044 = vmatprep.subr.bf16.mxu0 0
    %3045 = vmatpush1.bf16.msra.mxu0 0
    %3046 = vmatprep.subr.bf16.mxu0 0
    %3047 = vmatpush1.bf16.msra.mxu0 0
    %3048 = vmatprep.subr.bf16.mxu0 0
    %3049 = vmatpush1.bf16.msra.mxu0 0
    %3050 = vmatprep.mubr.bf16.mxu0 0
    %3051 = vmatmul.mubr.bf16.gmra.mrb[0].mxu0 %v2951
    %v3052 = vpop.f32.mrb[0].mxu0
    %v3053 = vadd.f32 %v2562, %v3052
    %v3054 = vpop.f32.mrb[0].mxu0
    %v3055 = vadd.f32 %v2564, %v3054
    %v3056 = vpop.f32.mrb[0].mxu0
    %v3057 = vpop.f32.mrb[0].mxu0
    %3058 = vdwg.mxu0
    %3059 = vmatprep.subr.bf16.mxu0 %v2835
    %3060 = vmatpush1.bf16.msra.mxu0 %v2834
    %3061 = vmatprep.subr.bf16.mxu0 %v2843
    %3062 = vmatpush1.bf16.msra.mxu0 %v2842
    %3063 = vmatprep.subr.bf16.mxu0 %v2851
    %3064 = vmatpush1.bf16.msra.mxu0 %v2850
    %3065 = vmatprep.subr.bf16.mxu0 %v2859
    %3066 = vmatpush1.bf16.msra.mxu0 %v2858
    %3067 = vmatprep.subr.bf16.mxu0 %v2867
    %3068 = vmatpush1.bf16.msra.mxu0 %v2866
    %3069 = vmatprep.subr.bf16.mxu0 %v2875
    %3070 = vmatpush1.bf16.msra.mxu0 %v2874
    %3071 = vmatprep.subr.bf16.mxu0 %v2883
    %3072 = vmatpush1.bf16.msra.mxu0 %v2882
    %3073 = vmatprep.subr.bf16.mxu0 %v2969
    %3074 = vmatpush1.bf16.msra.mxu0 %v2966
    %3075 = vmatprep.subr.bf16.mxu0 0
    %3076 = vmatpush1.bf16.msra.mxu0 0
    %3077 = vmatprep.subr.bf16.mxu0 0
    %3078 = vmatpush1.bf16.msra.mxu0 0
    %3079 = vmatprep.subr.bf16.mxu0 0
    %3080 = vmatpush1.bf16.msra.mxu0 0
    %3081 = vmatprep.subr.bf16.mxu0 0
    %3082 = vmatpush1.bf16.msra.mxu0 0
    %3083 = vmatprep.subr.bf16.mxu0 0
    %3084 = vmatpush1.bf16.msra.mxu0 0
    %3085 = vmatprep.subr.bf16.mxu0 0
    %3086 = vmatpush1.bf16.msra.mxu0 0
    %3087 = vmatprep.subr.bf16.mxu0 0
    %3088 = vmatpush1.bf16.msra.mxu0 0
    %3089 = vmatprep.subr.bf16.mxu0 0
    %3090 = vmatpush1.bf16.msra.mxu0 0
    %3091 = vmatprep.mubr.bf16.mxu0 0
    %3092 = vmatmul.mubr.bf16.gmra.mrb[0].mxu0 %v2951
    %v3093 = vpop.f32.mrb[0].mxu0
    %v3094 = vadd.f32 %v2603, %v3093
    %v3095 = vpop.f32.mrb[0].mxu0
    %v3096 = vadd.f32 %v2605, %v3095
    %v3097 = vpop.f32.mrb[0].mxu0
    %v3098 = vpop.f32.mrb[0].mxu0
    %3099 = vdwg.mxu0
    %3100 = vmatprep.subr.bf16.mxu0 %v2837
    %3101 = vmatpush1.bf16.msra.mxu0 %v2836
    %3102 = vmatprep.subr.bf16.mxu0 %v2845
    %3103 = vmatpush1.bf16.msra.mxu0 %v2844
    %3104 = vmatprep.subr.bf16.mxu0 %v2853
    %3105 = vmatpush1.bf16.msra.mxu0 %v2852
    %3106 = vmatprep.subr.bf16.mxu0 %v2861
    %3107 = vmatpush1.bf16.msra.mxu0 %v2860
    %3108 = vmatprep.subr.bf16.mxu0 %v2869
    %3109 = vmatpush1.bf16.msra.mxu0 %v2868
    %3110 = vmatprep.subr.bf16.mxu0 %v2877
    %3111 = vmatpush1.bf16.msra.mxu0 %v2876
    %3112 = vmatprep.subr.bf16.mxu0 %v2885
    %3113 = vmatpush1.bf16.msra.mxu0 %v2884
    %3114 = vmatprep.subr.bf16.mxu0 %v2975
    %3115 = vmatpush1.bf16.msra.mxu0 %v2972
    %3116 = vmatprep.subr.bf16.mxu0 0
    %3117 = vmatpush1.bf16.msra.mxu0 0
    %3118 = vmatprep.subr.bf16.mxu0 0
    %3119 = vmatpush1.bf16.msra.mxu0 0
    %3120 = vmatprep.subr.bf16.mxu0 0
    %3121 = vmatpush1.bf16.msra.mxu0 0
    %3122 = vmatprep.subr.bf16.mxu0 0
    %3123 = vmatpush1.bf16.msra.mxu0 0
    %3124 = vmatprep.subr.bf16.mxu0 0
    %3125 = vmatpush1.bf16.msra.mxu0 0
    %3126 = vmatprep.subr.bf16.mxu0 0
    %3127 = vmatpush1.bf16.msra.mxu0 0
    %3128 = vmatprep.subr.bf16.mxu0 0
    %3129 = vmatpush1.bf16.msra.mxu0 0
    %3130 = vmatprep.subr.bf16.mxu0 0
    %3131 = vmatpush1.bf16.msra.mxu0 0
    %3132 = vmatprep.mubr.bf16.mxu0 0
    %3133 = vmatmul.mubr.bf16.gmra.mrb[0].mxu0 %v2951
    %v3134 = vpop.f32.mrb[0].mxu0
    %v3135 = vadd.f32 %v2644, %v3134
    %v3136 = vpop.f32.mrb[0].mxu0
    %v3137 = vadd.f32 %v2646, %v3136
    %v3138 = vpop.f32.mrb[0].mxu0
    %v3139 = vpop.f32.mrb[0].mxu0
    %3140 = vdwg.mxu0
    %s3141 = scalar_lea.vmem [#allocation9], 2
    %v3142 = vld [vmem:[%s3141] sm:$0x1]
    %v3144 = vsel %vm1942, %v3142, 0
    %3146 = vmatprep.subr.bf16.mxu0 0
    %3147 = vmatpush1.bf16.msra.mxu0 %v1948
    %3148 = vmatprep.subr.bf16.mxu0 0
    %3149 = vmatpush1.bf16.msra.mxu0 0
    %3150 = vmatprep.subr.bf16.mxu0 0
    %3151 = vmatpush1.bf16.msra.mxu0 0
    %3152 = vmatprep.subr.bf16.mxu0 0
    %3153 = vmatpush1.bf16.msra.mxu0 0
    %3154 = vmatprep.subr.bf16.mxu0 0
    %3155 = vmatpush1.bf16.msra.mxu0 0
    %3156 = vmatprep.subr.bf16.mxu0 0
    %3157 = vmatpush1.bf16.msra.mxu0 0
    %3158 = vmatprep.subr.bf16.mxu0 0
    %3159 = vmatpush1.bf16.msra.mxu0 0
    %3160 = vmatprep.subr.bf16.mxu0 0
    %3161 = vmatpush1.bf16.msra.mxu0 0
    %3162 = vmatprep.subr.bf16.mxu0 0
    %3163 = vmatpush1.bf16.msra.mxu0 0
    %3164 = vmatprep.subr.bf16.mxu0 0
    %3165 = vmatpush1.bf16.msra.mxu0 0
    %3166 = vmatprep.subr.bf16.mxu0 0
    %3167 = vmatpush1.bf16.msra.mxu0 0
    %3168 = vmatprep.subr.bf16.mxu0 0
    %3169 = vmatpush1.bf16.msra.mxu0 0
    %3170 = vmatprep.subr.bf16.mxu0 0
    %3171 = vmatpush1.bf16.msra.mxu0 0
    %3172 = vmatprep.subr.bf16.mxu0 0
    %3173 = vmatpush1.bf16.msra.mxu0 0
    %3174 = vmatprep.subr.bf16.mxu0 0
    %3175 = vmatpush1.bf16.msra.mxu0 0
    %3176 = vmatprep.subr.bf16.mxu0 0
    %3177 = vmatpush1.bf16.msra.mxu0 0
    %3178 = vmatprep.mubr.bf16.mxu0 0
    %3179 = vmatmul.mubr.bf16.gmra.mrb[0].mxu0 %v3144
    %v3180 = vpop.f32.mrb[0].mxu0
    %v3181 = vadd.f32 0.0, %v3180
    %v3182 = vpop.f32.mrb[0].mxu0
    %v3183 = vpop.f32.mrb[0].mxu0
    %v3184 = vpop.f32.mrb[0].mxu0
    %3185 = vdwg.mxu0
    %v3186 = vpack.c.bf16 %v3181, %v3181
    %s3187 = scalar_lea.vmem [#allocation10], 960
    %v3188 = vld [vmem:[%s3187] sm:$0xff]
    %v3189 = vld [vmem:[%s3187 + $0x8] sm:$0xff]
    %v3190 = vld [vmem:[%s3187 + $0x10] sm:$0xff]
    %v3191 = vld [vmem:[%s3187 + $0x18] sm:$0xff]
    %v3192 = vld [vmem:[%s3187 + $0x20] sm:$0xff]
    %v3193 = vld [vmem:[%s3187 + $0x28] sm:$0xff]
    %v3194 = vld [vmem:[%s3187 + $0x30] sm:$0xff]
    %v3195 = vld [vmem:[%s3187 + $0x38] sm:$0xff]
    %v3196 = vld [vmem:[%s3187 + $0x40] sm:$0xff]
    %v3197 = vld [vmem:[%s3187 + $0x48] sm:$0xff]
    %v3198 = vld [vmem:[%s3187 + $0x50] sm:$0xff]
    %v3199 = vld [vmem:[%s3187 + $0x58] sm:$0xff]
    %v3200 = vld [vmem:[%s3187 + $0x60] sm:$0xff]
    %v3201 = vld [vmem:[%s3187 + $0x68] sm:$0xff]
    %v3202 = vld [vmem:[%s3187 + $0x70] sm:$0xff]
    %v3203 = vld [vmem:[%s3187 + $0x78] sm:$0xff]
    %v3204 = vld [vmem:[%s3187 + $0x80] sm:$0xff]
    %v3205 = vld [vmem:[%s3187 + $0x88] sm:$0xff]
    %v3206 = vld [vmem:[%s3187 + $0x90] sm:$0xff]
    %v3207 = vld [vmem:[%s3187 + $0x98] sm:$0xff]
    %v3208 = vld [vmem:[%s3187 + $0xa0] sm:$0xff]
    %v3209 = vld [vmem:[%s3187 + $0xa8] sm:$0xff]
    %v3210 = vld [vmem:[%s3187 + $0xb0] sm:$0xff]
    %v3211 = vld [vmem:[%s3187 + $0xb8] sm:$0xff]
    %v3212 = vld [vmem:[%s3187 + $0xc0] sm:$0xff]
    %v3213 = vld [vmem:[%s3187 + $0xc8] sm:$0xff]
    %v3214 = vld [vmem:[%s3187 + $0xd0] sm:$0xff]
    %v3215 = vld [vmem:[%s3187 + $0xd8] sm:$0xff]
    %v3216 = vld [vmem:[%s3187 + $0xe0] sm:$0xff]
    %v3217 = vld [vmem:[%s3187 + $0xe8] sm:$0xff]
    %v3218 = vld [vmem:[%s3187 + $0xf0] sm:$0xff]
    %v3219 = vld [vmem:[%s3187 + $0xf8] sm:$0xff]
    %v3220 = vld [vmem:[%s3187 + $0x100] sm:$0xff]
    %v3221 = vld [vmem:[%s3187 + $0x108] sm:$0xff]
    %v3222 = vld [vmem:[%s3187 + $0x110] sm:$0xff]
    %v3223 = vld [vmem:[%s3187 + $0x118] sm:$0xff]
    %v3224 = vld [vmem:[%s3187 + $0x120] sm:$0xff]
    %v3225 = vld [vmem:[%s3187 + $0x128] sm:$0xff]
    %v3226 = vld [vmem:[%s3187 + $0x130] sm:$0xff]
    %v3227 = vld [vmem:[%s3187 + $0x138] sm:$0xff]
    %v3228 = vld [vmem:[%s3187 + $0x140] sm:$0xff]
    %v3229 = vld [vmem:[%s3187 + $0x148] sm:$0xff]
    %v3230 = vld [vmem:[%s3187 + $0x150] sm:$0xff]
    %v3231 = vld [vmem:[%s3187 + $0x158] sm:$0xff]
    %v3232 = vld [vmem:[%s3187 + $0x160] sm:$0xff]
    %v3233 = vld [vmem:[%s3187 + $0x168] sm:$0xff]
    %v3234 = vld [vmem:[%s3187 + $0x170] sm:$0xff]
    %v3235 = vld [vmem:[%s3187 + $0x178] sm:$0xff]
    %v3236 = vld [vmem:[%s3187 + $0x180] sm:$0xff]
    %v3237 = vld [vmem:[%s3187 + $0x188] sm:$0xff]
    %v3238 = vld [vmem:[%s3187 + $0x190] sm:$0xff]
    %v3239 = vld [vmem:[%s3187 + $0x198] sm:$0xff]
    %v3240 = vld [vmem:[%s3187 + $0x1a0] sm:$0xff]
    %v3241 = vld [vmem:[%s3187 + $0x1a8] sm:$0xff]
    %v3242 = vld [vmem:[%s3187 + $0x1b0] sm:$0xff]
    %v3243 = vld [vmem:[%s3187 + $0x1b8] sm:$0xff]
    %v3244 = vld [vmem:[%s3187 + $0x1c0] sm:$0xff]
    %v3245 = vld [vmem:[%s3187 + $0x1c8] sm:$0xff]
    %v3246 = vld [vmem:[%s3187 + $0x1d0] sm:$0xff]
    %v3247 = vld [vmem:[%s3187 + $0x1d8] sm:$0xff]
    %v3308 = vunpack.c.l.b16 %v3188
    %v3309 = vunpack.c.h.b16 %v3188
    %v3310 = vunpack.c.l.b16 %v3189
    %v3311 = vunpack.c.h.b16 %v3189
    %v3312 = vunpack.c.l.b16 %v3190
    %v3313 = vunpack.c.h.b16 %v3190
    %v3314 = vunpack.c.l.b16 %v3191
    %v3315 = vunpack.c.h.b16 %v3191
    %v3316 = vunpack.c.l.b16 %v3192
    %v3317 = vunpack.c.h.b16 %v3192
    %v3318 = vunpack.c.l.b16 %v3193
    %v3319 = vunpack.c.h.b16 %v3193
    %v3320 = vunpack.c.l.b16 %v3194
    %v3321 = vunpack.c.h.b16 %v3194
    %v3322 = vunpack.c.l.b16 %v3195
    %v3323 = vunpack.c.h.b16 %v3195
    %v3324 = vunpack.c.l.b16 %v3196
    %v3325 = vunpack.c.h.b16 %v3196
    %v3326 = vunpack.c.l.b16 %v3197
    %v3327 = vunpack.c.h.b16 %v3197
    %v3328 = vunpack.c.l.b16 %v3198
    %v3329 = vunpack.c.h.b16 %v3198
    %v3330 = vunpack.c.l.b16 %v3199
    %v3331 = vunpack.c.h.b16 %v3199
    %v3332 = vunpack.c.l.b16 %v3200
    %v3333 = vunpack.c.h.b16 %v3200
    %v3334 = vunpack.c.l.b16 %v3201
    %v3335 = vunpack.c.h.b16 %v3201
    %v3336 = vunpack.c.l.b16 %v3202
    %v3337 = vunpack.c.h.b16 %v3202
    %v3338 = vunpack.c.l.b16 %v3203
    %v3339 = vunpack.c.h.b16 %v3203
    %v3340 = vunpack.c.l.b16 %v3204
    %v3341 = vunpack.c.h.b16 %v3204
    %v3342 = vunpack.c.l.b16 %v3205
    %v3343 = vunpack.c.h.b16 %v3205
    %v3344 = vunpack.c.l.b16 %v3206
    %v3345 = vunpack.c.h.b16 %v3206
    %v3346 = vunpack.c.l.b16 %v3207
    %v3347 = vunpack.c.h.b16 %v3207
    %v3348 = vunpack.c.l.b16 %v3208
    %v3349 = vunpack.c.h.b16 %v3208
    %v3350 = vunpack.c.l.b16 %v3209
    %v3351 = vunpack.c.h.b16 %v3209
    %v3352 = vunpack.c.l.b16 %v3210
    %v3353 = vunpack.c.h.b16 %v3210
    %v3354 = vunpack.c.l.b16 %v3211
    %v3355 = vunpack.c.h.b16 %v3211
    %v3356 = vunpack.c.l.b16 %v3212
    %v3357 = vunpack.c.h.b16 %v3212
    %v3358 = vunpack.c.l.b16 %v3213
    %v3359 = vunpack.c.h.b16 %v3213
    %v3360 = vunpack.c.l.b16 %v3214
    %v3361 = vunpack.c.h.b16 %v3214
    %v3362 = vunpack.c.l.b16 %v3215
    %v3363 = vunpack.c.h.b16 %v3215
    %v3364 = vunpack.c.l.b16 %v3216
    %v3365 = vunpack.c.h.b16 %v3216
    %v3366 = vunpack.c.l.b16 %v3217
    %v3367 = vunpack.c.h.b16 %v3217
    %v3368 = vunpack.c.l.b16 %v3218
    %v3369 = vunpack.c.h.b16 %v3218
    %v3370 = vunpack.c.l.b16 %v3219
    %v3371 = vunpack.c.h.b16 %v3219
    %v3372 = vunpack.c.l.b16 %v3220
    %v3373 = vunpack.c.h.b16 %v3220
    %v3374 = vunpack.c.l.b16 %v3221
    %v3375 = vunpack.c.h.b16 %v3221
    %v3376 = vunpack.c.l.b16 %v3222
    %v3377 = vunpack.c.h.b16 %v3222
    %v3378 = vunpack.c.l.b16 %v3223
    %v3379 = vunpack.c.h.b16 %v3223
    %v3380 = vunpack.c.l.b16 %v3224
    %v3381 = vunpack.c.h.b16 %v3224
    %v3382 = vunpack.c.l.b16 %v3225
    %v3383 = vunpack.c.h.b16 %v3225
    %v3384 = vunpack.c.l.b16 %v3226
    %v3385 = vunpack.c.h.b16 %v3226
    %v3386 = vunpack.c.l.b16 %v3227
    %v3387 = vunpack.c.h.b16 %v3227
    %v3388 = vunpack.c.l.b16 %v3228
    %v3389 = vunpack.c.h.b16 %v3228
    %v3390 = vunpack.c.l.b16 %v3229
    %v3391 = vunpack.c.h.b16 %v3229
    %v3392 = vunpack.c.l.b16 %v3230
    %v3393 = vunpack.c.h.b16 %v3230
    %v3394 = vunpack.c.l.b16 %v3231
    %v3395 = vunpack.c.h.b16 %v3231
    %v3396 = vunpack.c.l.b16 %v3232
    %v3397 = vunpack.c.h.b16 %v3232
    %v3398 = vunpack.c.l.b16 %v3233
    %v3399 = vunpack.c.h.b16 %v3233
    %v3400 = vunpack.c.l.b16 %v3234
    %v3401 = vunpack.c.h.b16 %v3234
    %v3402 = vunpack.c.l.b16 %v3235
    %v3403 = vunpack.c.h.b16 %v3235
    %v3404 = vunpack.c.l.b16 %v3236
    %v3405 = vunpack.c.h.b16 %v3236
    %v3406 = vunpack.c.l.b16 %v3237
    %v3407 = vunpack.c.h.b16 %v3237
    %v3408 = vunpack.c.l.b16 %v3238
    %v3409 = vunpack.c.h.b16 %v3238
    %v3410 = vunpack.c.l.b16 %v3239
    %v3411 = vunpack.c.h.b16 %v3239
    %v3412 = vunpack.c.l.b16 %v3240
    %v3413 = vunpack.c.h.b16 %v3240
    %v3414 = vunpack.c.l.b16 %v3241
    %v3415 = vunpack.c.h.b16 %v3241
    %v3416 = vunpack.c.l.b16 %v3242
    %v3417 = vunpack.c.h.b16 %v3242
    %v3418 = vunpack.c.l.b16 %v3243
    %v3419 = vunpack.c.h.b16 %v3243
    %v3420 = vunpack.c.l.b16 %v3244
    %v3421 = vunpack.c.h.b16 %v3244
    %v3422 = vunpack.c.l.b16 %v3245
    %v3423 = vunpack.c.h.b16 %v3245
    %v3424 = vunpack.c.l.b16 %v3246
    %v3425 = vunpack.c.h.b16 %v3246
    %v3426 = vunpack.c.l.b16 %v3247
    %v3427 = vunpack.c.h.b16 %v3247
    %v3428 = vpack.c.b16 %v3316, %v3308
    %v3429 = vpack.c.b16 %v3317, %v3309
    %v3430 = vpack.c.b16 %v3318, %v3310
    %v3431 = vpack.c.b16 %v3319, %v3311
    %v3432 = vpack.c.b16 %v3320, %v3312
    %v3433 = vpack.c.b16 %v3321, %v3313
    %v3434 = vpack.c.b16 %v3322, %v3314
    %v3435 = vpack.c.b16 %v3323, %v3315
    %v3436 = vpack.c.b16 %v3332, %v3324
    %v3437 = vpack.c.b16 %v3333, %v3325
    %v3438 = vpack.c.b16 %v3334, %v3326
    %v3439 = vpack.c.b16 %v3335, %v3327
    %v3440 = vpack.c.b16 %v3336, %v3328
    %v3441 = vpack.c.b16 %v3337, %v3329
    %v3442 = vpack.c.b16 %v3338, %v3330
    %v3443 = vpack.c.b16 %v3339, %v3331
    %v3444 = vpack.c.b16 %v3348, %v3340
    %v3445 = vpack.c.b16 %v3349, %v3341
    %v3446 = vpack.c.b16 %v3350, %v3342
    %v3447 = vpack.c.b16 %v3351, %v3343
    %v3448 = vpack.c.b16 %v3352, %v3344
    %v3449 = vpack.c.b16 %v3353, %v3345
    %v3450 = vpack.c.b16 %v3354, %v3346
    %v3451 = vpack.c.b16 %v3355, %v3347
    %v3452 = vpack.c.b16 %v3364, %v3356
    %v3453 = vpack.c.b16 %v3365, %v3357
    %v3454 = vpack.c.b16 %v3366, %v3358
    %v3455 = vpack.c.b16 %v3367, %v3359
    %v3456 = vpack.c.b16 %v3368, %v3360
    %v3457 = vpack.c.b16 %v3369, %v3361
    %v3458 = vpack.c.b16 %v3370, %v3362
    %v3459 = vpack.c.b16 %v3371, %v3363
    %v3460 = vpack.c.b16 %v3380, %v3372
    %v3461 = vpack.c.b16 %v3381, %v3373
    %v3462 = vpack.c.b16 %v3382, %v3374
    %v3463 = vpack.c.b16 %v3383, %v3375
    %v3464 = vpack.c.b16 %v3384, %v3376
    %v3465 = vpack.c.b16 %v3385, %v3377
    %v3466 = vpack.c.b16 %v3386, %v3378
    %v3467 = vpack.c.b16 %v3387, %v3379
    %v3468 = vpack.c.b16 %v3396, %v3388
    %v3469 = vpack.c.b16 %v3397, %v3389
    %v3470 = vpack.c.b16 %v3398, %v3390
    %v3471 = vpack.c.b16 %v3399, %v3391
    %v3472 = vpack.c.b16 %v3400, %v3392
    %v3473 = vpack.c.b16 %v3401, %v3393
    %v3474 = vpack.c.b16 %v3402, %v3394
    %v3475 = vpack.c.b16 %v3403, %v3395
    %v3476 = vpack.c.b16 %v3412, %v3404
    %v3477 = vpack.c.b16 %v3413, %v3405
    %v3478 = vpack.c.b16 %v3414, %v3406
    %v3479 = vpack.c.b16 %v3415, %v3407
    %v3480 = vpack.c.b16 %v3416, %v3408
    %v3481 = vpack.c.b16 %v3417, %v3409
    %v3482 = vpack.c.b16 %v3418, %v3410
    %v3483 = vpack.c.b16 %v3419, %v3411
    %v3484 = vpack.c.b16 %v3420, %v3420
    %v3485 = vpack.c.b16 %v3421, %v3421
    %v3486 = vpack.c.b16 %v3422, %v3422
    %v3487 = vpack.c.b16 %v3423, %v3423
    %v3488 = vpack.c.b16 %v3424, %v3424
    %v3489 = vpack.c.b16 %v3425, %v3425
    %v3490 = vpack.c.b16 %v3426, %v3426
    %v3491 = vpack.c.b16 %v3427, %v3427
    %v3549 = vsel %vm2458, %v3186, 0
    %v3552 = vsel %vm181, %v3484, 0
    %v3555 = vsel %vm181, %v3485, 0
    %v3558 = vsel %vm181, %v3486, 0
    %v3561 = vsel %vm181, %v3487, 0
    %v3564 = vsel %vm181, %v3488, 0
    %v3567 = vsel %vm181, %v3489, 0
    %v3570 = vsel %vm181, %v3490, 0
    %v3573 = vsel %vm181, %v3491, 0
    %3575 = vmatprep.subr.bf16.mxu0 %v3429
    %3576 = vmatpush1.bf16.msra.mxu0 %v3428
    %3577 = vmatprep.subr.bf16.mxu0 %v3437
    %3578 = vmatpush1.bf16.msra.mxu0 %v3436
    %3579 = vmatprep.subr.bf16.mxu0 %v3445
    %3580 = vmatpush1.bf16.msra.mxu0 %v3444
    %3581 = vmatprep.subr.bf16.mxu0 %v3453
    %3582 = vmatpush1.bf16.msra.mxu0 %v3452
    %3583 = vmatprep.subr.bf16.mxu0 %v3461
    %3584 = vmatpush1.bf16.msra.mxu0 %v3460
    %3585 = vmatprep.subr.bf16.mxu0 %v3469
    %3586 = vmatpush1.bf16.msra.mxu0 %v3468
    %3587 = vmatprep.subr.bf16.mxu0 %v3477
    %3588 = vmatpush1.bf16.msra.mxu0 %v3476
    %3589 = vmatprep.subr.bf16.mxu0 %v3555
    %3590 = vmatpush1.bf16.msra.mxu0 %v3552
    %3591 = vmatprep.subr.bf16.mxu0 0
    %3592 = vmatpush1.bf16.msra.mxu0 0
    %3593 = vmatprep.subr.bf16.mxu0 0
    %3594 = vmatpush1.bf16.msra.mxu0 0
    %3595 = vmatprep.subr.bf16.mxu0 0
    %3596 = vmatpush1.bf16.msra.mxu0 0
    %3597 = vmatprep.subr.bf16.mxu0 0
    %3598 = vmatpush1.bf16.msra.mxu0 0
    %3599 = vmatprep.subr.bf16.mxu0 0
    %3600 = vmatpush1.bf16.msra.mxu0 0
    %3601 = vmatprep.subr.bf16.mxu0 0
    %3602 = vmatpush1.bf16.msra.mxu0 0
    %3603 = vmatprep.subr.bf16.mxu0 0
    %3604 = vmatpush1.bf16.msra.mxu0 0
    %3605 = vmatprep.subr.bf16.mxu0 0
    %3606 = vmatpush1.bf16.msra.mxu0 0
    %3607 = vmatprep.mubr.bf16.mxu0 0
    %3608 = vmatmul.mubr.bf16.gmra.mrb[0].mxu0 %v3549
    %v3609 = vpop.f32.mrb[0].mxu0
    %v3610 = vadd.f32 0.0, %v3609
    %v3611 = vpop.f32.mrb[0].mxu0
    %v3612 = vadd.f32 0.0, %v3611
    %v3613 = vpop.f32.mrb[0].mxu0
    %v3614 = vpop.f32.mrb[0].mxu0
    %3615 = vdwg.mxu0
    %3616 = vmatprep.subr.bf16.mxu0 %v3431
    %3617 = vmatpush1.bf16.msra.mxu0 %v3430
    %3618 = vmatprep.subr.bf16.mxu0 %v3439
    %3619 = vmatpush1.bf16.msra.mxu0 %v3438
    %3620 = vmatprep.subr.bf16.mxu0 %v3447
    %3621 = vmatpush1.bf16.msra.mxu0 %v3446
    %3622 = vmatprep.subr.bf16.mxu0 %v3455
    %3623 = vmatpush1.bf16.msra.mxu0 %v3454
    %3624 = vmatprep.subr.bf16.mxu0 %v3463
    %3625 = vmatpush1.bf16.msra.mxu0 %v3462
    %3626 = vmatprep.subr.bf16.mxu0 %v3471
    %3627 = vmatpush1.bf16.msra.mxu0 %v3470
    %3628 = vmatprep.subr.bf16.mxu0 %v3479
    %3629 = vmatpush1.bf16.msra.mxu0 %v3478
    %3630 = vmatprep.subr.bf16.mxu0 %v3561
    %3631 = vmatpush1.bf16.msra.mxu0 %v3558
    %3632 = vmatprep.subr.bf16.mxu0 0
    %3633 = vmatpush1.bf16.msra.mxu0 0
    %3634 = vmatprep.subr.bf16.mxu0 0
    %3635 = vmatpush1.bf16.msra.mxu0 0
    %3636 = vmatprep.subr.bf16.mxu0 0
    %3637 = vmatpush1.bf16.msra.mxu0 0
    %3638 = vmatprep.subr.bf16.mxu0 0
    %3639 = vmatpush1.bf16.msra.mxu0 0
    %3640 = vmatprep.subr.bf16.mxu0 0
    %3641 = vmatpush1.bf16.msra.mxu0 0
    %3642 = vmatprep.subr.bf16.mxu0 0
    %3643 = vmatpush1.bf16.msra.mxu0 0
    %3644 = vmatprep.subr.bf16.mxu0 0
    %3645 = vmatpush1.bf16.msra.mxu0 0
    %3646 = vmatprep.subr.bf16.mxu0 0
    %3647 = vmatpush1.bf16.msra.mxu0 0
    %3648 = vmatprep.mubr.bf16.mxu0 0
    %3649 = vmatmul.mubr.bf16.gmra.mrb[0].mxu0 %v3549
    %v3650 = vpop.f32.mrb[0].mxu0
    %v3651 = vadd.f32 0.0, %v3650
    %v3652 = vpop.f32.mrb[0].mxu0
    %v3653 = vadd.f32 0.0, %v3652
    %v3654 = vpop.f32.mrb[0].mxu0
    %v3655 = vpop.f32.mrb[0].mxu0
    %3656 = vdwg.mxu0
    %3657 = vmatprep.subr.bf16.mxu0 %v3433
    %3658 = vmatpush1.bf16.msra.mxu0 %v3432
    %3659 = vmatprep.subr.bf16.mxu0 %v3441
    %3660 = vmatpush1.bf16.msra.mxu0 %v3440
    %3661 = vmatprep.subr.bf16.mxu0 %v3449
    %3662 = vmatpush1.bf16.msra.mxu0 %v3448
    %3663 = vmatprep.subr.bf16.mxu0 %v3457
    %3664 = vmatpush1.bf16.msra.mxu0 %v3456
    %3665 = vmatprep.subr.bf16.mxu0 %v3465
    %3666 = vmatpush1.bf16.msra.mxu0 %v3464
    %3667 = vmatprep.subr.bf16.mxu0 %v3473
    %3668 = vmatpush1.bf16.msra.mxu0 %v3472
    %3669 = vmatprep.subr.bf16.mxu0 %v3481
    %3670 = vmatpush1.bf16.msra.mxu0 %v3480
    %3671 = vmatprep.subr.bf16.mxu0 %v3567
    %3672 = vmatpush1.bf16.msra.mxu0 %v3564
    %3673 = vmatprep.subr.bf16.mxu0 0
    %3674 = vmatpush1.bf16.msra.mxu0 0
    %3675 = vmatprep.subr.bf16.mxu0 0
    %3676 = vmatpush1.bf16.msra.mxu0 0
    %3677 = vmatprep.subr.bf16.mxu0 0
    %3678 = vmatpush1.bf16.msra.mxu0 0
    %3679 = vmatprep.subr.bf16.mxu0 0
    %3680 = vmatpush1.bf16.msra.mxu0 0
    %3681 = vmatprep.subr.bf16.mxu0 0
    %3682 = vmatpush1.bf16.msra.mxu0 0
    %3683 = vmatprep.subr.bf16.mxu0 0
    %3684 = vmatpush1.bf16.msra.mxu0 0
    %3685 = vmatprep.subr.bf16.mxu0 0
    %3686 = vmatpush1.bf16.msra.mxu0 0
    %3687 = vmatprep.subr.bf16.mxu0 0
    %3688 = vmatpush1.bf16.msra.mxu0 0
    %3689 = vmatprep.mubr.bf16.mxu0 0
    %3690 = vmatmul.mubr.bf16.gmra.mrb[0].mxu0 %v3549
    %v3691 = vpop.f32.mrb[0].mxu0
    %v3692 = vadd.f32 0.0, %v3691
    %v3693 = vpop.f32.mrb[0].mxu0
    %v3694 = vadd.f32 0.0, %v3693
    %v3695 = vpop.f32.mrb[0].mxu0
    %v3696 = vpop.f32.mrb[0].mxu0
    %3697 = vdwg.mxu0
    %3698 = vmatprep.subr.bf16.mxu0 %v3435
    %3699 = vmatpush1.bf16.msra.mxu0 %v3434
    %3700 = vmatprep.subr.bf16.mxu0 %v3443
    %3701 = vmatpush1.bf16.msra.mxu0 %v3442
    %3702 = vmatprep.subr.bf16.mxu0 %v3451
    %3703 = vmatpush1.bf16.msra.mxu0 %v3450
    %3704 = vmatprep.subr.bf16.mxu0 %v3459
    %3705 = vmatpush1.bf16.msra.mxu0 %v3458
    %3706 = vmatprep.subr.bf16.mxu0 %v3467
    %3707 = vmatpush1.bf16.msra.mxu0 %v3466
    %3708 = vmatprep.subr.bf16.mxu0 %v3475
    %3709 = vmatpush1.bf16.msra.mxu0 %v3474
    %3710 = vmatprep.subr.bf16.mxu0 %v3483
    %3711 = vmatpush1.bf16.msra.mxu0 %v3482
    %3712 = vmatprep.subr.bf16.mxu0 %v3573
    %3713 = vmatpush1.bf16.msra.mxu0 %v3570
    %3714 = vmatprep.subr.bf16.mxu0 0
    %3715 = vmatpush1.bf16.msra.mxu0 0
    %3716 = vmatprep.subr.bf16.mxu0 0
    %3717 = vmatpush1.bf16.msra.mxu0 0
    %3718 = vmatprep.subr.bf16.mxu0 0
    %3719 = vmatpush1.bf16.msra.mxu0 0
    %3720 = vmatprep.subr.bf16.mxu0 0
    %3721 = vmatpush1.bf16.msra.mxu0 0
    %3722 = vmatprep.subr.bf16.mxu0 0
    %3723 = vmatpush1.bf16.msra.mxu0 0
    %3724 = vmatprep.subr.bf16.mxu0 0
    %3725 = vmatpush1.bf16.msra.mxu0 0
    %3726 = vmatprep.subr.bf16.mxu0 0
    %3727 = vmatpush1.bf16.msra.mxu0 0
    %3728 = vmatprep.subr.bf16.mxu0 0
    %3729 = vmatpush1.bf16.msra.mxu0 0
    %3730 = vmatprep.mubr.bf16.mxu0 0
    %3731 = vmatmul.mubr.bf16.gmra.mrb[0].mxu0 %v3549
    %v3732 = vpop.f32.mrb[0].mxu0
    %v3733 = vadd.f32 0.0, %v3732
    %v3734 = vpop.f32.mrb[0].mxu0
    %v3735 = vadd.f32 0.0, %v3734
    %v3736 = vpop.f32.mrb[0].mxu0
    %v3737 = vpop.f32.mrb[0].mxu0
    %3738 = vdwg.mxu0
    %v3739 = vadd.f32 %v3012, %v3610
    %v3740 = vadd.f32 %v3014, %v3612
    %v3741 = vadd.f32 %v3053, %v3651
    %v3742 = vadd.f32 %v3055, %v3653
    %v3743 = vadd.f32 %v3094, %v3692
    %v3744 = vadd.f32 %v3096, %v3694
    %v3745 = vadd.f32 %v3135, %v3733
    %v3746 = vadd.f32 %v3137, %v3735
    %s3747 = scalar_lea.vmem [#allocation9], 3
    %v3748 = vld [vmem:[%s3747] sm:$0x1]
    %v3750 = vsel %vm1942, %v3748, 0
    %3752 = vmatprep.subr.bf16.mxu0 0
    %3753 = vmatpush1.bf16.msra.mxu0 %v1948
    %3754 = vmatprep.subr.bf16.mxu0 0
    %3755 = vmatpush1.bf16.msra.mxu0 0
    %3756 = vmatprep.subr.bf16.mxu0 0
    %3757 = vmatpush1.bf16.msra.mxu0 0
    %3758 = vmatprep.subr.bf16.mxu0 0
    %3759 = vmatpush1.bf16.msra.mxu0 0
    %3760 = vmatprep.subr.bf16.mxu0 0
    %3761 = vmatpush1.bf16.msra.mxu0 0
    %3762 = vmatprep.subr.bf16.mxu0 0
    %3763 = vmatpush1.bf16.msra.mxu0 0
    %3764 = vmatprep.subr.bf16.mxu0 0
    %3765 = vmatpush1.bf16.msra.mxu0 0
    %3766 = vmatprep.subr.bf16.mxu0 0
    %3767 = vmatpush1.bf16.msra.mxu0 0
    %3768 = vmatprep.subr.bf16.mxu0 0
    %3769 = vmatpush1.bf16.msra.mxu0 0
    %3770 = vmatprep.subr.bf16.mxu0 0
    %3771 = vmatpush1.bf16.msra.mxu0 0
    %3772 = vmatprep.subr.bf16.mxu0 0
    %3773 = vmatpush1.bf16.msra.mxu0 0
    %3774 = vmatprep.subr.bf16.mxu0 0
    %3775 = vmatpush1.bf16.msra.mxu0 0
    %3776 = vmatprep.subr.bf16.mxu0 0
    %3777 = vmatpush1.bf16.msra.mxu0 0
    %3778 = vmatprep.subr.bf16.mxu0 0
    %3779 = vmatpush1.bf16.msra.mxu0 0
    %3780 = vmatprep.subr.bf16.mxu0 0
    %3781 = vmatpush1.bf16.msra.mxu0 0
    %3782 = vmatprep.subr.bf16.mxu0 0
    %3783 = vmatpush1.bf16.msra.mxu0 0
    %3784 = vmatprep.mubr.bf16.mxu0 0
    %3785 = vmatmul.mubr.bf16.gmra.mrb[0].mxu0 %v3750
    %v3786 = vpop.f32.mrb[0].mxu0
    %v3787 = vadd.f32 0.0, %v3786
    %v3788 = vpop.f32.mrb[0].mxu0
    %v3789 = vpop.f32.mrb[0].mxu0
    %v3790 = vpop.f32.mrb[0].mxu0
    %3791 = vdwg.mxu0
    %v3792 = vpack.c.bf16 %v3787, %v3787
    %s3793 = scalar_lea.vmem [#allocation10], 1440
    %v3794 = vld [vmem:[%s3793] sm:$0xff]
    %v3795 = vld [vmem:[%s3793 + $0x8] sm:$0xff]
    %v3796 = vld [vmem:[%s3793 + $0x10] sm:$0xff]
    %v3797 = vld [vmem:[%s3793 + $0x18] sm:$0xff]
    %v3798 = vld [vmem:[%s3793 + $0x20] sm:$0xff]
    %v3799 = vld [vmem:[%s3793 + $0x28] sm:$0xff]
    %v3800 = vld [vmem:[%s3793 + $0x30] sm:$0xff]
    %v3801 = vld [vmem:[%s3793 + $0x38] sm:$0xff]
    %v3802 = vld [vmem:[%s3793 + $0x40] sm:$0xff]
    %v3803 = vld [vmem:[%s3793 + $0x48] sm:$0xff]
    %v3804 = vld [vmem:[%s3793 + $0x50] sm:$0xff]
    %v3805 = vld [vmem:[%s3793 + $0x58] sm:$0xff]
    %v3806 = vld [vmem:[%s3793 + $0x60] sm:$0xff]
    %v3807 = vld [vmem:[%s3793 + $0x68] sm:$0xff]
    %v3808 = vld [vmem:[%s3793 + $0x70] sm:$0xff]
    %v3809 = vld [vmem:[%s3793 + $0x78] sm:$0xff]
    %v3810 = vld [vmem:[%s3793 + $0x80] sm:$0xff]
    %v3811 = vld [vmem:[%s3793 + $0x88] sm:$0xff]
    %v3812 = vld [vmem:[%s3793 + $0x90] sm:$0xff]
    %v3813 = vld [vmem:[%s3793 + $0x98] sm:$0xff]
    %v3814 = vld [vmem:[%s3793 + $0xa0] sm:$0xff]
    %v3815 = vld [vmem:[%s3793 + $0xa8] sm:$0xff]
    %v3816 = vld [vmem:[%s3793 + $0xb0] sm:$0xff]
    %v3817 = vld [vmem:[%s3793 + $0xb8] sm:$0xff]
    %v3818 = vld [vmem:[%s3793 + $0xc0] sm:$0xff]
    %v3819 = vld [vmem:[%s3793 + $0xc8] sm:$0xff]
    %v3820 = vld [vmem:[%s3793 + $0xd0] sm:$0xff]
    %v3821 = vld [vmem:[%s3793 + $0xd8] sm:$0xff]
    %v3822 = vld [vmem:[%s3793 + $0xe0] sm:$0xff]
    %v3823 = vld [vmem:[%s3793 + $0xe8] sm:$0xff]
    %v3824 = vld [vmem:[%s3793 + $0xf0] sm:$0xff]
    %v3825 = vld [vmem:[%s3793 + $0xf8] sm:$0xff]
    %v3826 = vld [vmem:[%s3793 + $0x100] sm:$0xff]
    %v3827 = vld [vmem:[%s3793 + $0x108] sm:$0xff]
    %v3828 = vld [vmem:[%s3793 + $0x110] sm:$0xff]
    %v3829 = vld [vmem:[%s3793 + $0x118] sm:$0xff]
    %v3830 = vld [vmem:[%s3793 + $0x120] sm:$0xff]
    %v3831 = vld [vmem:[%s3793 + $0x128] sm:$0xff]
    %v3832 = vld [vmem:[%s3793 + $0x130] sm:$0xff]
    %v3833 = vld [vmem:[%s3793 + $0x138] sm:$0xff]
    %v3834 = vld [vmem:[%s3793 + $0x140] sm:$0xff]
    %v3835 = vld [vmem:[%s3793 + $0x148] sm:$0xff]
    %v3836 = vld [vmem:[%s3793 + $0x150] sm:$0xff]
    %v3837 = vld [vmem:[%s3793 + $0x158] sm:$0xff]
    %v3838 = vld [vmem:[%s3793 + $0x160] sm:$0xff]
    %v3839 = vld [vmem:[%s3793 + $0x168] sm:$0xff]
    %v3840 = vld [vmem:[%s3793 + $0x170] sm:$0xff]
    %v3841 = vld [vmem:[%s3793 + $0x178] sm:$0xff]
    %v3842 = vld [vmem:[%s3793 + $0x180] sm:$0xff]
    %v3843 = vld [vmem:[%s3793 + $0x188] sm:$0xff]
    %v3844 = vld [vmem:[%s3793 + $0x190] sm:$0xff]
    %v3845 = vld [vmem:[%s3793 + $0x198] sm:$0xff]
    %v3846 = vld [vmem:[%s3793 + $0x1a0] sm:$0xff]
    %v3847 = vld [vmem:[%s3793 + $0x1a8] sm:$0xff]
    %v3848 = vld [vmem:[%s3793 + $0x1b0] sm:$0xff]
    %v3849 = vld [vmem:[%s3793 + $0x1b8] sm:$0xff]
    %v3850 = vld [vmem:[%s3793 + $0x1c0] sm:$0xff]
    %v3851 = vld [vmem:[%s3793 + $0x1c8] sm:$0xff]
    %v3852 = vld [vmem:[%s3793 + $0x1d0] sm:$0xff]
    %v3853 = vld [vmem:[%s3793 + $0x1d8] sm:$0xff]
    %v3914 = vunpack.c.l.b16 %v3794
    %v3915 = vunpack.c.h.b16 %v3794
    %v3916 = vunpack.c.l.b16 %v3795
    %v3917 = vunpack.c.h.b16 %v3795
    %v3918 = vunpack.c.l.b16 %v3796
    %v3919 = vunpack.c.h.b16 %v3796
    %v3920 = vunpack.c.l.b16 %v3797
    %v3921 = vunpack.c.h.b16 %v3797
    %v3922 = vunpack.c.l.b16 %v3798
    %v3923 = vunpack.c.h.b16 %v3798
    %v3924 = vunpack.c.l.b16 %v3799
    %v3925 = vunpack.c.h.b16 %v3799
    %v3926 = vunpack.c.l.b16 %v3800
    %v3927 = vunpack.c.h.b16 %v3800
    %v3928 = vunpack.c.l.b16 %v3801
    %v3929 = vunpack.c.h.b16 %v3801
    %v3930 = vunpack.c.l.b16 %v3802
    %v3931 = vunpack.c.h.b16 %v3802
    %v3932 = vunpack.c.l.b16 %v3803
    %v3933 = vunpack.c.h.b16 %v3803
    %v3934 = vunpack.c.l.b16 %v3804
    %v3935 = vunpack.c.h.b16 %v3804
    %v3936 = vunpack.c.l.b16 %v3805
    %v3937 = vunpack.c.h.b16 %v3805
    %v3938 = vunpack.c.l.b16 %v3806
    %v3939 = vunpack.c.h.b16 %v3806
    %v3940 = vunpack.c.l.b16 %v3807
    %v3941 = vunpack.c.h.b16 %v3807
    %v3942 = vunpack.c.l.b16 %v3808
    %v3943 = vunpack.c.h.b16 %v3808
    %v3944 = vunpack.c.l.b16 %v3809
    %v3945 = vunpack.c.h.b16 %v3809
    %v3946 = vunpack.c.l.b16 %v3810
    %v3947 = vunpack.c.h.b16 %v3810
    %v3948 = vunpack.c.l.b16 %v3811
    %v3949 = vunpack.c.h.b16 %v3811
    %v3950 = vunpack.c.l.b16 %v3812
    %v3951 = vunpack.c.h.b16 %v3812
    %v3952 = vunpack.c.l.b16 %v3813
    %v3953 = vunpack.c.h.b16 %v3813
    %v3954 = vunpack.c.l.b16 %v3814
    %v3955 = vunpack.c.h.b16 %v3814
    %v3956 = vunpack.c.l.b16 %v3815
    %v3957 = vunpack.c.h.b16 %v3815
    %v3958 = vunpack.c.l.b16 %v3816
    %v3959 = vunpack.c.h.b16 %v3816
    %v3960 = vunpack.c.l.b16 %v3817
    %v3961 = vunpack.c.h.b16 %v3817
    %v3962 = vunpack.c.l.b16 %v3818
    %v3963 = vunpack.c.h.b16 %v3818
    %v3964 = vunpack.c.l.b16 %v3819
    %v3965 = vunpack.c.h.b16 %v3819
    %v3966 = vunpack.c.l.b16 %v3820
    %v3967 = vunpack.c.h.b16 %v3820
    %v3968 = vunpack.c.l.b16 %v3821
    %v3969 = vunpack.c.h.b16 %v3821
    %v3970 = vunpack.c.l.b16 %v3822
    %v3971 = vunpack.c.h.b16 %v3822
    %v3972 = vunpack.c.l.b16 %v3823
    %v3973 = vunpack.c.h.b16 %v3823
    %v3974 = vunpack.c.l.b16 %v3824
    %v3975 = vunpack.c.h.b16 %v3824
    %v3976 = vunpack.c.l.b16 %v3825
    %v3977 = vunpack.c.h.b16 %v3825
    %v3978 = vunpack.c.l.b16 %v3826
    %v3979 = vunpack.c.h.b16 %v3826
    %v3980 = vunpack.c.l.b16 %v3827
    %v3981 = vunpack.c.h.b16 %v3827
    %v3982 = vunpack.c.l.b16 %v3828
    %v3983 = vunpack.c.h.b16 %v3828
    %v3984 = vunpack.c.l.b16 %v3829
    %v3985 = vunpack.c.h.b16 %v3829
    %v3986 = vunpack.c.l.b16 %v3830
    %v3987 = vunpack.c.h.b16 %v3830
    %v3988 = vunpack.c.l.b16 %v3831
    %v3989 = vunpack.c.h.b16 %v3831
    %v3990 = vunpack.c.l.b16 %v3832
    %v3991 = vunpack.c.h.b16 %v3832
    %v3992 = vunpack.c.l.b16 %v3833
    %v3993 = vunpack.c.h.b16 %v3833
    %v3994 = vunpack.c.l.b16 %v3834
    %v3995 = vunpack.c.h.b16 %v3834
    %v3996 = vunpack.c.l.b16 %v3835
    %v3997 = vunpack.c.h.b16 %v3835
    %v3998 = vunpack.c.l.b16 %v3836
    %v3999 = vunpack.c.h.b16 %v3836
    %v4000 = vunpack.c.l.b16 %v3837
    %v4001 = vunpack.c.h.b16 %v3837
    %v4002 = vunpack.c.l.b16 %v3838
    %v4003 = vunpack.c.h.b16 %v3838
    %v4004 = vunpack.c.l.b16 %v3839
    %v4005 = vunpack.c.h.b16 %v3839
    %v4006 = vunpack.c.l.b16 %v3840
    %v4007 = vunpack.c.h.b16 %v3840
    %v4008 = vunpack.c.l.b16 %v3841
    %v4009 = vunpack.c.h.b16 %v3841
    %v4010 = vunpack.c.l.b16 %v3842
    %v4011 = vunpack.c.h.b16 %v3842
    %v4012 = vunpack.c.l.b16 %v3843
    %v4013 = vunpack.c.h.b16 %v3843
    %v4014 = vunpack.c.l.b16 %v3844
    %v4015 = vunpack.c.h.b16 %v3844
    %v4016 = vunpack.c.l.b16 %v3845
    %v4017 = vunpack.c.h.b16 %v3845
    %v4018 = vunpack.c.l.b16 %v3846
    %v4019 = vunpack.c.h.b16 %v3846
    %v4020 = vunpack.c.l.b16 %v3847
    %v4021 = vunpack.c.h.b16 %v3847
    %v4022 = vunpack.c.l.b16 %v3848
    %v4023 = vunpack.c.h.b16 %v3848
    %v4024 = vunpack.c.l.b16 %v3849
    %v4025 = vunpack.c.h.b16 %v3849
    %v4026 = vunpack.c.l.b16 %v3850
    %v4027 = vunpack.c.h.b16 %v3850
    %v4028 = vunpack.c.l.b16 %v3851
    %v4029 = vunpack.c.h.b16 %v3851
    %v4030 = vunpack.c.l.b16 %v3852
    %v4031 = vunpack.c.h.b16 %v3852
    %v4032 = vunpack.c.l.b16 %v3853
    %v4033 = vunpack.c.h.b16 %v3853
    %v4034 = vpack.c.b16 %v3922, %v3914
    %v4035 = vpack.c.b16 %v3923, %v3915
    %v4036 = vpack.c.b16 %v3924, %v3916
    %v4037 = vpack.c.b16 %v3925, %v3917
    %v4038 = vpack.c.b16 %v3926, %v3918
    %v4039 = vpack.c.b16 %v3927, %v3919
    %v4040 = vpack.c.b16 %v3928, %v3920
    %v4041 = vpack.c.b16 %v3929, %v3921
    %v4042 = vpack.c.b16 %v3938, %v3930
    %v4043 = vpack.c.b16 %v3939, %v3931
    %v4044 = vpack.c.b16 %v3940, %v3932
    %v4045 = vpack.c.b16 %v3941, %v3933
    %v4046 = vpack.c.b16 %v3942, %v3934
    %v4047 = vpack.c.b16 %v3943, %v3935
    %v4048 = vpack.c.b16 %v3944, %v3936
    %v4049 = vpack.c.b16 %v3945, %v3937
    %v4050 = vpack.c.b16 %v3954, %v3946
    %v4051 = vpack.c.b16 %v3955, %v3947
    %v4052 = vpack.c.b16 %v3956, %v3948
    %v4053 = vpack.c.b16 %v3957, %v3949
    %v4054 = vpack.c.b16 %v3958, %v3950
    %v4055 = vpack.c.b16 %v3959, %v3951
    %v4056 = vpack.c.b16 %v3960, %v3952
    %v4057 = vpack.c.b16 %v3961, %v3953
    %v4058 = vpack.c.b16 %v3970, %v3962
    %v4059 = vpack.c.b16 %v3971, %v3963
    %v4060 = vpack.c.b16 %v3972, %v3964
    %v4061 = vpack.c.b16 %v3973, %v3965
    %v4062 = vpack.c.b16 %v3974, %v3966
    %v4063 = vpack.c.b16 %v3975, %v3967
    %v4064 = vpack.c.b16 %v3976, %v3968
    %v4065 = vpack.c.b16 %v3977, %v3969
    %v4066 = vpack.c.b16 %v3986, %v3978
    %v4067 = vpack.c.b16 %v3987, %v3979
    %v4068 = vpack.c.b16 %v3988, %v3980
    %v4069 = vpack.c.b16 %v3989, %v3981
    %v4070 = vpack.c.b16 %v3990, %v3982
    %v4071 = vpack.c.b16 %v3991, %v3983
    %v4072 = vpack.c.b16 %v3992, %v3984
    %v4073 = vpack.c.b16 %v3993, %v3985
    %v4074 = vpack.c.b16 %v4002, %v3994
    %v4075 = vpack.c.b16 %v4003, %v3995
    %v4076 = vpack.c.b16 %v4004, %v3996
    %v4077 = vpack.c.b16 %v4005, %v3997
    %v4078 = vpack.c.b16 %v4006, %v3998
    %v4079 = vpack.c.b16 %v4007, %v3999
    %v4080 = vpack.c.b16 %v4008, %v4000
    %v4081 = vpack.c.b16 %v4009, %v4001
    %v4082 = vpack.c.b16 %v4018, %v4010
    %v4083 = vpack.c.b16 %v4019, %v4011
    %v4084 = vpack.c.b16 %v4020, %v4012
    %v4085 = vpack.c.b16 %v4021, %v4013
    %v4086 = vpack.c.b16 %v4022, %v4014
    %v4087 = vpack.c.b16 %v4023, %v4015
    %v4088 = vpack.c.b16 %v4024, %v4016
    %v4089 = vpack.c.b16 %v4025, %v4017
    %v4090 = vpack.c.b16 %v4026, %v4026
    %v4091 = vpack.c.b16 %v4027, %v4027
    %v4092 = vpack.c.b16 %v4028, %v4028
    %v4093 = vpack.c.b16 %v4029, %v4029
    %v4094 = vpack.c.b16 %v4030, %v4030
    %v4095 = vpack.c.b16 %v4031, %v4031
    %v4096 = vpack.c.b16 %v4032, %v4032
    %v4097 = vpack.c.b16 %v4033, %v4033
    %v4155 = vsel %vm2458, %v3792, 0
    %v4158 = vsel %vm181, %v4090, 0
    %v4161 = vsel %vm181, %v4091, 0
    %v4164 = vsel %vm181, %v4092, 0
    %v4167 = vsel %vm181, %v4093, 0
    %v4170 = vsel %vm181, %v4094, 0
    %v4173 = vsel %vm181, %v4095, 0
    %v4176 = vsel %vm181, %v4096, 0
    %v4179 = vsel %vm181, %v4097, 0
    %4181 = vmatprep.subr.bf16.mxu0 %v4035
    %4182 = vmatpush1.bf16.msra.mxu0 %v4034
    %4183 = vmatprep.subr.bf16.mxu0 %v4043
    %4184 = vmatpush1.bf16.msra.mxu0 %v4042
    %4185 = vmatprep.subr.bf16.mxu0 %v4051
    %4186 = vmatpush1.bf16.msra.mxu0 %v4050
    %4187 = vmatprep.subr.bf16.mxu0 %v4059
    %4188 = vmatpush1.bf16.msra.mxu0 %v4058
    %4189 = vmatprep.subr.bf16.mxu0 %v4067
    %4190 = vmatpush1.bf16.msra.mxu0 %v4066
    %4191 = vmatprep.subr.bf16.mxu0 %v4075
    %4192 = vmatpush1.bf16.msra.mxu0 %v4074
    %4193 = vmatprep.subr.bf16.mxu0 %v4083
    %4194 = vmatpush1.bf16.msra.mxu0 %v4082
    %4195 = vmatprep.subr.bf16.mxu0 %v4161
    %4196 = vmatpush1.bf16.msra.mxu0 %v4158
    %4197 = vmatprep.subr.bf16.mxu0 0
    %4198 = vmatpush1.bf16.msra.mxu0 0
    %4199 = vmatprep.subr.bf16.mxu0 0
    %4200 = vmatpush1.bf16.msra.mxu0 0
    %4201 = vmatprep.subr.bf16.mxu0 0
    %4202 = vmatpush1.bf16.msra.mxu0 0
    %4203 = vmatprep.subr.bf16.mxu0 0
    %4204 = vmatpush1.bf16.msra.mxu0 0
    %4205 = vmatprep.subr.bf16.mxu0 0
    %4206 = vmatpush1.bf16.msra.mxu0 0
    %4207 = vmatprep.subr.bf16.mxu0 0
    %4208 = vmatpush1.bf16.msra.mxu0 0
    %4209 = vmatprep.subr.bf16.mxu0 0
    %4210 = vmatpush1.bf16.msra.mxu0 0
    %4211 = vmatprep.subr.bf16.mxu0 0
    %4212 = vmatpush1.bf16.msra.mxu0 0
    %4213 = vmatprep.mubr.bf16.mxu0 0
    %4214 = vmatmul.mubr.bf16.gmra.mrb[0].mxu0 %v4155
    %v4215 = vpop.f32.mrb[0].mxu0
    %v4216 = vadd.f32 0.0, %v4215
    %v4217 = vpop.f32.mrb[0].mxu0
    %v4218 = vadd.f32 0.0, %v4217
    %v4219 = vpop.f32.mrb[0].mxu0
    %v4220 = vpop.f32.mrb[0].mxu0
    %4221 = vdwg.mxu0
    %4222 = vmatprep.subr.bf16.mxu0 %v4037
    %4223 = vmatpush1.bf16.msra.mxu0 %v4036
    %4224 = vmatprep.subr.bf16.mxu0 %v4045
    %4225 = vmatpush1.bf16.msra.mxu0 %v4044
    %4226 = vmatprep.subr.bf16.mxu0 %v4053
    %4227 = vmatpush1.bf16.msra.mxu0 %v4052
    %4228 = vmatprep.subr.bf16.mxu0 %v4061
    %4229 = vmatpush1.bf16.msra.mxu0 %v4060
    %4230 = vmatprep.subr.bf16.mxu0 %v4069
    %4231 = vmatpush1.bf16.msra.mxu0 %v4068
    %4232 = vmatprep.subr.bf16.mxu0 %v4077
    %4233 = vmatpush1.bf16.msra.mxu0 %v4076
    %4234 = vmatprep.subr.bf16.mxu0 %v4085
    %4235 = vmatpush1.bf16.msra.mxu0 %v4084
    %4236 = vmatprep.subr.bf16.mxu0 %v4167
    %4237 = vmatpush1.bf16.msra.mxu0 %v4164
    %4238 = vmatprep.subr.bf16.mxu0 0
    %4239 = vmatpush1.bf16.msra.mxu0 0
    %4240 = vmatprep.subr.bf16.mxu0 0
    %4241 = vmatpush1.bf16.msra.mxu0 0
    %4242 = vmatprep.subr.bf16.mxu0 0
    %4243 = vmatpush1.bf16.msra.mxu0 0
    %4244 = vmatprep.subr.bf16.mxu0 0
    %4245 = vmatpush1.bf16.msra.mxu0 0
    %4246 = vmatprep.subr.bf16.mxu0 0
    %4247 = vmatpush1.bf16.msra.mxu0 0
    %4248 = vmatprep.subr.bf16.mxu0 0
    %4249 = vmatpush1.bf16.msra.mxu0 0
    %4250 = vmatprep.subr.bf16.mxu0 0
    %4251 = vmatpush1.bf16.msra.mxu0 0
    %4252 = vmatprep.subr.bf16.mxu0 0
    %4253 = vmatpush1.bf16.msra.mxu0 0
    %4254 = vmatprep.mubr.bf16.mxu0 0
    %4255 = vmatmul.mubr.bf16.gmra.mrb[0].mxu0 %v4155
    %v4256 = vpop.f32.mrb[0].mxu0
    %v4257 = vadd.f32 0.0, %v4256
    %v4258 = vpop.f32.mrb[0].mxu0
    %v4259 = vadd.f32 0.0, %v4258
    %v4260 = vpop.f32.mrb[0].mxu0
    %v4261 = vpop.f32.mrb[0].mxu0
    %4262 = vdwg.mxu0
    %4263 = vmatprep.subr.bf16.mxu0 %v4039
    %4264 = vmatpush1.bf16.msra.mxu0 %v4038
    %4265 = vmatprep.subr.bf16.mxu0 %v4047
    %4266 = vmatpush1.bf16.msra.mxu0 %v4046
    %4267 = vmatprep.subr.bf16.mxu0 %v4055
    %4268 = vmatpush1.bf16.msra.mxu0 %v4054
    %4269 = vmatprep.subr.bf16.mxu0 %v4063
    %4270 = vmatpush1.bf16.msra.mxu0 %v4062
    %4271 = vmatprep.subr.bf16.mxu0 %v4071
    %4272 = vmatpush1.bf16.msra.mxu0 %v4070
    %4273 = vmatprep.subr.bf16.mxu0 %v4079
    %4274 = vmatpush1.bf16.msra.mxu0 %v4078
    %4275 = vmatprep.subr.bf16.mxu0 %v4087
    %4276 = vmatpush1.bf16.msra.mxu0 %v4086
    %4277 = vmatprep.subr.bf16.mxu0 %v4173
    %4278 = vmatpush1.bf16.msra.mxu0 %v4170
    %4279 = vmatprep.subr.bf16.mxu0 0
    %4280 = vmatpush1.bf16.msra.mxu0 0
    %4281 = vmatprep.subr.bf16.mxu0 0
    %4282 = vmatpush1.bf16.msra.mxu0 0
    %4283 = vmatprep.subr.bf16.mxu0 0
    %4284 = vmatpush1.bf16.msra.mxu0 0
    %4285 = vmatprep.subr.bf16.mxu0 0
    %4286 = vmatpush1.bf16.msra.mxu0 0
    %4287 = vmatprep.subr.bf16.mxu0 0
    %4288 = vmatpush1.bf16.msra.mxu0 0
    %4289 = vmatprep.subr.bf16.mxu0 0
    %4290 = vmatpush1.bf16.msra.mxu0 0
    %4291 = vmatprep.subr.bf16.mxu0 0
    %4292 = vmatpush1.bf16.msra.mxu0 0
    %4293 = vmatprep.subr.bf16.mxu0 0
    %4294 = vmatpush1.bf16.msra.mxu0 0
    %4295 = vmatprep.mubr.bf16.mxu0 0
    %4296 = vmatmul.mubr.bf16.gmra.mrb[0].mxu0 %v4155
    %v4297 = vpop.f32.mrb[0].mxu0
    %v4298 = vadd.f32 0.0, %v4297
    %v4299 = vpop.f32.mrb[0].mxu0
    %v4300 = vadd.f32 0.0, %v4299
    %v4301 = vpop.f32.mrb[0].mxu0
    %v4302 = vpop.f32.mrb[0].mxu0
    %4303 = vdwg.mxu0
    %4304 = vmatprep.subr.bf16.mxu0 %v4041
    %4305 = vmatpush1.bf16.msra.mxu0 %v4040
    %4306 = vmatprep.subr.bf16.mxu0 %v4049
    %4307 = vmatpush1.bf16.msra.mxu0 %v4048
    %4308 = vmatprep.subr.bf16.mxu0 %v4057
    %4309 = vmatpush1.bf16.msra.mxu0 %v4056
    %4310 = vmatprep.subr.bf16.mxu0 %v4065
    %4311 = vmatpush1.bf16.msra.mxu0 %v4064
    %4312 = vmatprep.subr.bf16.mxu0 %v4073
    %4313 = vmatpush1.bf16.msra.mxu0 %v4072
    %4314 = vmatprep.subr.bf16.mxu0 %v4081
    %4315 = vmatpush1.bf16.msra.mxu0 %v4080
    %4316 = vmatprep.subr.bf16.mxu0 %v4089
    %4317 = vmatpush1.bf16.msra.mxu0 %v4088
    %4318 = vmatprep.subr.bf16.mxu0 %v4179
    %4319 = vmatpush1.bf16.msra.mxu0 %v4176
    %4320 = vmatprep.subr.bf16.mxu0 0
    %4321 = vmatpush1.bf16.msra.mxu0 0
    %4322 = vmatprep.subr.bf16.mxu0 0
    %4323 = vmatpush1.bf16.msra.mxu0 0
    %4324 = vmatprep.subr.bf16.mxu0 0
    %4325 = vmatpush1.bf16.msra.mxu0 0
    %4326 = vmatprep.subr.bf16.mxu0 0
    %4327 = vmatpush1.bf16.msra.mxu0 0
    %4328 = vmatprep.subr.bf16.mxu0 0
    %4329 = vmatpush1.bf16.msra.mxu0 0
    %4330 = vmatprep.subr.bf16.mxu0 0
    %4331 = vmatpush1.bf16.msra.mxu0 0
    %4332 = vmatprep.subr.bf16.mxu0 0
    %4333 = vmatpush1.bf16.msra.mxu0 0
    %4334 = vmatprep.subr.bf16.mxu0 0
    %4335 = vmatpush1.bf16.msra.mxu0 0
    %4336 = vmatprep.mubr.bf16.mxu0 0
    %4337 = vmatmul.mubr.bf16.gmra.mrb[0].mxu0 %v4155
    %v4338 = vpop.f32.mrb[0].mxu0
    %v4339 = vadd.f32 0.0, %v4338
    %v4340 = vpop.f32.mrb[0].mxu0
    %v4341 = vadd.f32 0.0, %v4340
    %v4342 = vpop.f32.mrb[0].mxu0
    %v4343 = vpop.f32.mrb[0].mxu0
    %4344 = vdwg.mxu0
    %v4345 = vadd.f32 %v3739, %v4216
    %v4346 = vadd.f32 %v3740, %v4218
    %v4347 = vadd.f32 %v3741, %v4257
    %v4348 = vadd.f32 %v3742, %v4259
    %v4349 = vadd.f32 %v3743, %v4298
    %v4350 = vadd.f32 %v3744, %v4300
    %v4351 = vadd.f32 %v3745, %v4339
    %v4352 = vadd.f32 %v3746, %v4341
    %s4353 = scalar_lea.vmem [#allocation9], 4
    %v4354 = vld [vmem:[%s4353] sm:$0x1]
    %v4356 = vsel %vm1942, %v4354, 0
    %4358 = vmatprep.subr.bf16.mxu0 0
    %4359 = vmatpush1.bf16.msra.mxu0 %v1948
    %4360 = vmatprep.subr.bf16.mxu0 0
    %4361 = vmatpush1.bf16.msra.mxu0 0
    %4362 = vmatprep.subr.bf16.mxu0 0
    %4363 = vmatpush1.bf16.msra.mxu0 0
    %4364 = vmatprep.subr.bf16.mxu0 0
    %4365 = vmatpush1.bf16.msra.mxu0 0
    %4366 = vmatprep.subr.bf16.mxu0 0
    %4367 = vmatpush1.bf16.msra.mxu0 0
    %4368 = vmatprep.subr.bf16.mxu0 0
    %4369 = vmatpush1.bf16.msra.mxu0 0
    %4370 = vmatprep.subr.bf16.mxu0 0
    %4371 = vmatpush1.bf16.msra.mxu0 0
    %4372 = vmatprep.subr.bf16.mxu0 0
    %4373 = vmatpush1.bf16.msra.mxu0 0
    %4374 = vmatprep.subr.bf16.mxu0 0
    %4375 = vmatpush1.bf16.msra.mxu0 0
    %4376 = vmatprep.subr.bf16.mxu0 0
    %4377 = vmatpush1.bf16.msra.mxu0 0
    %4378 = vmatprep.subr.bf16.mxu0 0
    %4379 = vmatpush1.bf16.msra.mxu0 0
    %4380 = vmatprep.subr.bf16.mxu0 0
    %4381 = vmatpush1.bf16.msra.mxu0 0
    %4382 = vmatprep.subr.bf16.mxu0 0
    %4383 = vmatpush1.bf16.msra.mxu0 0
    %4384 = vmatprep.subr.bf16.mxu0 0
    %4385 = vmatpush1.bf16.msra.mxu0 0
    %4386 = vmatprep.subr.bf16.mxu0 0
    %4387 = vmatpush1.bf16.msra.mxu0 0
    %4388 = vmatprep.subr.bf16.mxu0 0
    %4389 = vmatpush1.bf16.msra.mxu0 0
    %4390 = vmatprep.mubr.bf16.mxu0 0
    %4391 = vmatmul.mubr.bf16.gmra.mrb[0].mxu0 %v4356
    %v4392 = vpop.f32.mrb[0].mxu0
    %v4393 = vadd.f32 0.0, %v4392
    %v4394 = vpop.f32.mrb[0].mxu0
    %v4395 = vpop.f32.mrb[0].mxu0
    %v4396 = vpop.f32.mrb[0].mxu0
    %4397 = vdwg.mxu0
    %v4398 = vpack.c.bf16 %v4393, %v4393
    %s4399 = scalar_lea.vmem [#allocation10], 1920
    %v4400 = vld [vmem:[%s4399] sm:$0xff]
    %v4401 = vld [vmem:[%s4399 + $0x8] sm:$0xff]
    %v4402 = vld [vmem:[%s4399 + $0x10] sm:$0xff]
    %v4403 = vld [vmem:[%s4399 + $0x18] sm:$0xff]
    %v4404 = vld [vmem:[%s4399 + $0x20] sm:$0xff]
    %v4405 = vld [vmem:[%s4399 + $0x28] sm:$0xff]
    %v4406 = vld [vmem:[%s4399 + $0x30] sm:$0xff]
    %v4407 = vld [vmem:[%s4399 + $0x38] sm:$0xff]
    %v4408 = vld [vmem:[%s4399 + $0x40] sm:$0xff]
    %v4409 = vld [vmem:[%s4399 + $0x48] sm:$0xff]
    %v4410 = vld [vmem:[%s4399 + $0x50] sm:$0xff]
    %v4411 = vld [vmem:[%s4399 + $0x58] sm:$0xff]
    %v4412 = vld [vmem:[%s4399 + $0x60] sm:$0xff]
    %v4413 = vld [vmem:[%s4399 + $0x68] sm:$0xff]
    %v4414 = vld [vmem:[%s4399 + $0x70] sm:$0xff]
    %v4415 = vld [vmem:[%s4399 + $0x78] sm:$0xff]
    %v4416 = vld [vmem:[%s4399 + $0x80] sm:$0xff]
    %v4417 = vld [vmem:[%s4399 + $0x88] sm:$0xff]
    %v4418 = vld [vmem:[%s4399 + $0x90] sm:$0xff]
    %v4419 = vld [vmem:[%s4399 + $0x98] sm:$0xff]
    %v4420 = vld [vmem:[%s4399 + $0xa0] sm:$0xff]
    %v4421 = vld [vmem:[%s4399 + $0xa8] sm:$0xff]
    %v4422 = vld [vmem:[%s4399 + $0xb0] sm:$0xff]
    %v4423 = vld [vmem:[%s4399 + $0xb8] sm:$0xff]
    %v4424 = vld [vmem:[%s4399 + $0xc0] sm:$0xff]
    %v4425 = vld [vmem:[%s4399 + $0xc8] sm:$0xff]
    %v4426 = vld [vmem:[%s4399 + $0xd0] sm:$0xff]
    %v4427 = vld [vmem:[%s4399 + $0xd8] sm:$0xff]
    %v4428 = vld [vmem:[%s4399 + $0xe0] sm:$0xff]
    %v4429 = vld [vmem:[%s4399 + $0xe8] sm:$0xff]
    %v4430 = vld [vmem:[%s4399 + $0xf0] sm:$0xff]
    %v4431 = vld [vmem:[%s4399 + $0xf8] sm:$0xff]
    %v4432 = vld [vmem:[%s4399 + $0x100] sm:$0xff]
    %v4433 = vld [vmem:[%s4399 + $0x108] sm:$0xff]
    %v4434 = vld [vmem:[%s4399 + $0x110] sm:$0xff]
    %v4435 = vld [vmem:[%s4399 + $0x118] sm:$0xff]
    %v4436 = vld [vmem:[%s4399 + $0x120] sm:$0xff]
    %v4437 = vld [vmem:[%s4399 + $0x128] sm:$0xff]
    %v4438 = vld [vmem:[%s4399 + $0x130] sm:$0xff]
    %v4439 = vld [vmem:[%s4399 + $0x138] sm:$0xff]
    %v4440 = vld [vmem:[%s4399 + $0x140] sm:$0xff]
    %v4441 = vld [vmem:[%s4399 + $0x148] sm:$0xff]
    %v4442 = vld [vmem:[%s4399 + $0x150] sm:$0xff]
    %v4443 = vld [vmem:[%s4399 + $0x158] sm:$0xff]
    %v4444 = vld [vmem:[%s4399 + $0x160] sm:$0xff]
    %v4445 = vld [vmem:[%s4399 + $0x168] sm:$0xff]
    %v4446 = vld [vmem:[%s4399 + $0x170] sm:$0xff]
    %v4447 = vld [vmem:[%s4399 + $0x178] sm:$0xff]
    %v4448 = vld [vmem:[%s4399 + $0x180] sm:$0xff]
    %v4449 = vld [vmem:[%s4399 + $0x188] sm:$0xff]
    %v4450 = vld [vmem:[%s4399 + $0x190] sm:$0xff]
    %v4451 = vld [vmem:[%s4399 + $0x198] sm:$0xff]
    %v4452 = vld [vmem:[%s4399 + $0x1a0] sm:$0xff]
    %v4453 = vld [vmem:[%s4399 + $0x1a8] sm:$0xff]
    %v4454 = vld [vmem:[%s4399 + $0x1b0] sm:$0xff]
    %v4455 = vld [vmem:[%s4399 + $0x1b8] sm:$0xff]
    %v4456 = vld [vmem:[%s4399 + $0x1c0] sm:$0xff]
    %v4457 = vld [vmem:[%s4399 + $0x1c8] sm:$0xff]
    %v4458 = vld [vmem:[%s4399 + $0x1d0] sm:$0xff]
    %v4459 = vld [vmem:[%s4399 + $0x1d8] sm:$0xff]
    %v4520 = vunpack.c.l.b16 %v4400
    %v4521 = vunpack.c.h.b16 %v4400
    %v4522 = vunpack.c.l.b16 %v4401
    %v4523 = vunpack.c.h.b16 %v4401
    %v4524 = vunpack.c.l.b16 %v4402
    %v4525 = vunpack.c.h.b16 %v4402
    %v4526 = vunpack.c.l.b16 %v4403
    %v4527 = vunpack.c.h.b16 %v4403
    %v4528 = vunpack.c.l.b16 %v4404
    %v4529 = vunpack.c.h.b16 %v4404
    %v4530 = vunpack.c.l.b16 %v4405
    %v4531 = vunpack.c.h.b16 %v4405
    %v4532 = vunpack.c.l.b16 %v4406
    %v4533 = vunpack.c.h.b16 %v4406
    %v4534 = vunpack.c.l.b16 %v4407
    %v4535 = vunpack.c.h.b16 %v4407
    %v4536 = vunpack.c.l.b16 %v4408
    %v4537 = vunpack.c.h.b16 %v4408
    %v4538 = vunpack.c.l.b16 %v4409
    %v4539 = vunpack.c.h.b16 %v4409
    %v4540 = vunpack.c.l.b16 %v4410
    %v4541 = vunpack.c.h.b16 %v4410
    %v4542 = vunpack.c.l.b16 %v4411
    %v4543 = vunpack.c.h.b16 %v4411
    %v4544 = vunpack.c.l.b16 %v4412
    %v4545 = vunpack.c.h.b16 %v4412
    %v4546 = vunpack.c.l.b16 %v4413
    %v4547 = vunpack.c.h.b16 %v4413
    %v4548 = vunpack.c.l.b16 %v4414
    %v4549 = vunpack.c.h.b16 %v4414
    %v4550 = vunpack.c.l.b16 %v4415
    %v4551 = vunpack.c.h.b16 %v4415
    %v4552 = vunpack.c.l.b16 %v4416
    %v4553 = vunpack.c.h.b16 %v4416
    %v4554 = vunpack.c.l.b16 %v4417
    %v4555 = vunpack.c.h.b16 %v4417
    %v4556 = vunpack.c.l.b16 %v4418
    %v4557 = vunpack.c.h.b16 %v4418
    %v4558 = vunpack.c.l.b16 %v4419
    %v4559 = vunpack.c.h.b16 %v4419
    %v4560 = vunpack.c.l.b16 %v4420
    %v4561 = vunpack.c.h.b16 %v4420
    %v4562 = vunpack.c.l.b16 %v4421
    %v4563 = vunpack.c.h.b16 %v4421
    %v4564 = vunpack.c.l.b16 %v4422
    %v4565 = vunpack.c.h.b16 %v4422
    %v4566 = vunpack.c.l.b16 %v4423
    %v4567 = vunpack.c.h.b16 %v4423
    %v4568 = vunpack.c.l.b16 %v4424
    %v4569 = vunpack.c.h.b16 %v4424
    %v4570 = vunpack.c.l.b16 %v4425
    %v4571 = vunpack.c.h.b16 %v4425
    %v4572 = vunpack.c.l.b16 %v4426
    %v4573 = vunpack.c.h.b16 %v4426
    %v4574 = vunpack.c.l.b16 %v4427
    %v4575 = vunpack.c.h.b16 %v4427
    %v4576 = vunpack.c.l.b16 %v4428
    %v4577 = vunpack.c.h.b16 %v4428
    %v4578 = vunpack.c.l.b16 %v4429
    %v4579 = vunpack.c.h.b16 %v4429
    %v4580 = vunpack.c.l.b16 %v4430
    %v4581 = vunpack.c.h.b16 %v4430
    %v4582 = vunpack.c.l.b16 %v4431
    %v4583 = vunpack.c.h.b16 %v4431
    %v4584 = vunpack.c.l.b16 %v4432
    %v4585 = vunpack.c.h.b16 %v4432
    %v4586 = vunpack.c.l.b16 %v4433
    %v4587 = vunpack.c.h.b16 %v4433
    %v4588 = vunpack.c.l.b16 %v4434
    %v4589 = vunpack.c.h.b16 %v4434
    %v4590 = vunpack.c.l.b16 %v4435
    %v4591 = vunpack.c.h.b16 %v4435
    %v4592 = vunpack.c.l.b16 %v4436
    %v4593 = vunpack.c.h.b16 %v4436
    %v4594 = vunpack.c.l.b16 %v4437
    %v4595 = vunpack.c.h.b16 %v4437
    %v4596 = vunpack.c.l.b16 %v4438
    %v4597 = vunpack.c.h.b16 %v4438
    %v4598 = vunpack.c.l.b16 %v4439
    %v4599 = vunpack.c.h.b16 %v4439
    %v4600 = vunpack.c.l.b16 %v4440
    %v4601 = vunpack.c.h.b16 %v4440
    %v4602 = vunpack.c.l.b16 %v4441
    %v4603 = vunpack.c.h.b16 %v4441
    %v4604 = vunpack.c.l.b16 %v4442
    %v4605 = vunpack.c.h.b16 %v4442
    %v4606 = vunpack.c.l.b16 %v4443
    %v4607 = vunpack.c.h.b16 %v4443
    %v4608 = vunpack.c.l.b16 %v4444
    %v4609 = vunpack.c.h.b16 %v4444
    %v4610 = vunpack.c.l.b16 %v4445
    %v4611 = vunpack.c.h.b16 %v4445
    %v4612 = vunpack.c.l.b16 %v4446
    %v4613 = vunpack.c.h.b16 %v4446
    %v4614 = vunpack.c.l.b16 %v4447
    %v4615 = vunpack.c.h.b16 %v4447
    %v4616 = vunpack.c.l.b16 %v4448
    %v4617 = vunpack.c.h.b16 %v4448
    %v4618 = vunpack.c.l.b16 %v4449
    %v4619 = vunpack.c.h.b16 %v4449
    %v4620 = vunpack.c.l.b16 %v4450
    %v4621 = vunpack.c.h.b16 %v4450
    %v4622 = vunpack.c.l.b16 %v4451
    %v4623 = vunpack.c.h.b16 %v4451
    %v4624 = vunpack.c.l.b16 %v4452
    %v4625 = vunpack.c.h.b16 %v4452
    %v4626 = vunpack.c.l.b16 %v4453
    %v4627 = vunpack.c.h.b16 %v4453
    %v4628 = vunpack.c.l.b16 %v4454
    %v4629 = vunpack.c.h.b16 %v4454
    %v4630 = vunpack.c.l.b16 %v4455
    %v4631 = vunpack.c.h.b16 %v4455
    %v4632 = vunpack.c.l.b16 %v4456
    %v4633 = vunpack.c.h.b16 %v4456
    %v4634 = vunpack.c.l.b16 %v4457
    %v4635 = vunpack.c.h.b16 %v4457
    %v4636 = vunpack.c.l.b16 %v4458
    %v4637 = vunpack.c.h.b16 %v4458
    %v4638 = vunpack.c.l.b16 %v4459
    %v4639 = vunpack.c.h.b16 %v4459
    %v4640 = vpack.c.b16 %v4528, %v4520
    %v4641 = vpack.c.b16 %v4529, %v4521
    %v4642 = vpack.c.b16 %v4530, %v4522
    %v4643 = vpack.c.b16 %v4531, %v4523
    %v4644 = vpack.c.b16 %v4532, %v4524
    %v4645 = vpack.c.b16 %v4533, %v4525
    %v4646 = vpack.c.b16 %v4534, %v4526
    %v4647 = vpack.c.b16 %v4535, %v4527
    %v4648 = vpack.c.b16 %v4544, %v4536
    %v4649 = vpack.c.b16 %v4545, %v4537
    %v4650 = vpack.c.b16 %v4546, %v4538
    %v4651 = vpack.c.b16 %v4547, %v4539
    %v4652 = vpack.c.b16 %v4548, %v4540
    %v4653 = vpack.c.b16 %v4549, %v4541
    %v4654 = vpack.c.b16 %v4550, %v4542
    %v4655 = vpack.c.b16 %v4551, %v4543
    %v4656 = vpack.c.b16 %v4560, %v4552
    %v4657 = vpack.c.b16 %v4561, %v4553
    %v4658 = vpack.c.b16 %v4562, %v4554
    %v4659 = vpack.c.b16 %v4563, %v4555
    %v4660 = vpack.c.b16 %v4564, %v4556
    %v4661 = vpack.c.b16 %v4565, %v4557
    %v4662 = vpack.c.b16 %v4566, %v4558
    %v4663 = vpack.c.b16 %v4567, %v4559
    %v4664 = vpack.c.b16 %v4576, %v4568
    %v4665 = vpack.c.b16 %v4577, %v4569
    %v4666 = vpack.c.b16 %v4578, %v4570
    %v4667 = vpack.c.b16 %v4579, %v4571
    %v4668 = vpack.c.b16 %v4580, %v4572
    %v4669 = vpack.c.b16 %v4581, %v4573
    %v4670 = vpack.c.b16 %v4582, %v4574
    %v4671 = vpack.c.b16 %v4583, %v4575
    %v4672 = vpack.c.b16 %v4592, %v4584
    %v4673 = vpack.c.b16 %v4593, %v4585
    %v4674 = vpack.c.b16 %v4594, %v4586
    %v4675 = vpack.c.b16 %v4595, %v4587
    %v4676 = vpack.c.b16 %v4596, %v4588
    %v4677 = vpack.c.b16 %v4597, %v4589
    %v4678 = vpack.c.b16 %v4598, %v4590
    %v4679 = vpack.c.b16 %v4599, %v4591
    %v4680 = vpack.c.b16 %v4608, %v4600
    %v4681 = vpack.c.b16 %v4609, %v4601
    %v4682 = vpack.c.b16 %v4610, %v4602
    %v4683 = vpack.c.b16 %v4611, %v4603
    %v4684 = vpack.c.b16 %v4612, %v4604
    %v4685 = vpack.c.b16 %v4613, %v4605
    %v4686 = vpack.c.b16 %v4614, %v4606
    %v4687 = vpack.c.b16 %v4615, %v4607
    %v4688 = vpack.c.b16 %v4624, %v4616
    %v4689 = vpack.c.b16 %v4625, %v4617
    %v4690 = vpack.c.b16 %v4626, %v4618
    %v4691 = vpack.c.b16 %v4627, %v4619
    %v4692 = vpack.c.b16 %v4628, %v4620
    %v4693 = vpack.c.b16 %v4629, %v4621
    %v4694 = vpack.c.b16 %v4630, %v4622
    %v4695 = vpack.c.b16 %v4631, %v4623
    %v4696 = vpack.c.b16 %v4632, %v4632
    %v4697 = vpack.c.b16 %v4633, %v4633
    %v4698 = vpack.c.b16 %v4634, %v4634
    %v4699 = vpack.c.b16 %v4635, %v4635
    %v4700 = vpack.c.b16 %v4636, %v4636
    %v4701 = vpack.c.b16 %v4637, %v4637
    %v4702 = vpack.c.b16 %v4638, %v4638
    %v4703 = vpack.c.b16 %v4639, %v4639
    %v4761 = vsel %vm2458, %v4398, 0
    %v4764 = vsel %vm181, %v4696, 0
    %v4767 = vsel %vm181, %v4697, 0
    %v4770 = vsel %vm181, %v4698, 0
    %v4773 = vsel %vm181, %v4699, 0
    %v4776 = vsel %vm181, %v4700, 0
    %v4779 = vsel %vm181, %v4701, 0
    %v4782 = vsel %vm181, %v4702, 0
    %v4785 = vsel %vm181, %v4703, 0
    %4787 = vmatprep.subr.bf16.mxu0 %v4641
    %4788 = vmatpush1.bf16.msra.mxu0 %v4640
    %4789 = vmatprep.subr.bf16.mxu0 %v4649
    %4790 = vmatpush1.bf16.msra.mxu0 %v4648
    %4791 = vmatprep.subr.bf16.mxu0 %v4657
    %4792 = vmatpush1.bf16.msra.mxu0 %v4656
    %4793 = vmatprep.subr.bf16.mxu0 %v4665
    %4794 = vmatpush1.bf16.msra.mxu0 %v4664
    %4795 = vmatprep.subr.bf16.mxu0 %v4673
    %4796 = vmatpush1.bf16.msra.mxu0 %v4672
    %4797 = vmatprep.subr.bf16.mxu0 %v4681
    %4798 = vmatpush1.bf16.msra.mxu0 %v4680
    %4799 = vmatprep.subr.bf16.mxu0 %v4689
    %4800 = vmatpush1.bf16.msra.mxu0 %v4688
    %4801 = vmatprep.subr.bf16.mxu0 %v4767
    %4802 = vmatpush1.bf16.msra.mxu0 %v4764
    %4803 = vmatprep.subr.bf16.mxu0 0
    %4804 = vmatpush1.bf16.msra.mxu0 0
    %4805 = vmatprep.subr.bf16.mxu0 0
    %4806 = vmatpush1.bf16.msra.mxu0 0
    %4807 = vmatprep.subr.bf16.mxu0 0
    %4808 = vmatpush1.bf16.msra.mxu0 0
    %4809 = vmatprep.subr.bf16.mxu0 0
    %4810 = vmatpush1.bf16.msra.mxu0 0
    %4811 = vmatprep.subr.bf16.mxu0 0
    %4812 = vmatpush1.bf16.msra.mxu0 0
    %4813 = vmatprep.subr.bf16.mxu0 0
    %4814 = vmatpush1.bf16.msra.mxu0 0
    %4815 = vmatprep.subr.bf16.mxu0 0
    %4816 = vmatpush1.bf16.msra.mxu0 0
    %4817 = vmatprep.subr.bf16.mxu0 0
    %4818 = vmatpush1.bf16.msra.mxu0 0
    %4819 = vmatprep.mubr.bf16.mxu0 0
    %4820 = vmatmul.mubr.bf16.gmra.mrb[0].mxu0 %v4761
    %v4821 = vpop.f32.mrb[0].mxu0
    %v4822 = vadd.f32 0.0, %v4821
    %v4823 = vpop.f32.mrb[0].mxu0
    %v4824 = vadd.f32 0.0, %v4823
    %v4825 = vpop.f32.mrb[0].mxu0
    %v4826 = vpop.f32.mrb[0].mxu0
    %4827 = vdwg.mxu0
    %4828 = vmatprep.subr.bf16.mxu0 %v4643
    %4829 = vmatpush1.bf16.msra.mxu0 %v4642
    %4830 = vmatprep.subr.bf16.mxu0 %v4651
    %4831 = vmatpush1.bf16.msra.mxu0 %v4650
    %4832 = vmatprep.subr.bf16.mxu0 %v4659
    %4833 = vmatpush1.bf16.msra.mxu0 %v4658
    %4834 = vmatprep.subr.bf16.mxu0 %v4667
    %4835 = vmatpush1.bf16.msra.mxu0 %v4666
    %4836 = vmatprep.subr.bf16.mxu0 %v4675
    %4837 = vmatpush1.bf16.msra.mxu0 %v4674
    %4838 = vmatprep.subr.bf16.mxu0 %v4683
    %4839 = vmatpush1.bf16.msra.mxu0 %v4682
    %4840 = vmatprep.subr.bf16.mxu0 %v4691
    %4841 = vmatpush1.bf16.msra.mxu0 %v4690
    %4842 = vmatprep.subr.bf16.mxu0 %v4773
    %4843 = vmatpush1.bf16.msra.mxu0 %v4770
    %4844 = vmatprep.subr.bf16.mxu0 0
    %4845 = vmatpush1.bf16.msra.mxu0 0
    %4846 = vmatprep.subr.bf16.mxu0 0
    %4847 = vmatpush1.bf16.msra.mxu0 0
    %4848 = vmatprep.subr.bf16.mxu0 0
    %4849 = vmatpush1.bf16.msra.mxu0 0
    %4850 = vmatprep.subr.bf16.mxu0 0
    %4851 = vmatpush1.bf16.msra.mxu0 0
    %4852 = vmatprep.subr.bf16.mxu0 0
    %4853 = vmatpush1.bf16.msra.mxu0 0
    %4854 = vmatprep.subr.bf16.mxu0 0
    %4855 = vmatpush1.bf16.msra.mxu0 0
    %4856 = vmatprep.subr.bf16.mxu0 0
    %4857 = vmatpush1.bf16.msra.mxu0 0
    %4858 = vmatprep.subr.bf16.mxu0 0
    %4859 = vmatpush1.bf16.msra.mxu0 0
    %4860 = vmatprep.mubr.bf16.mxu0 0
    %4861 = vmatmul.mubr.bf16.gmra.mrb[0].mxu0 %v4761
    %v4862 = vpop.f32.mrb[0].mxu0
    %v4863 = vadd.f32 0.0, %v4862
    %v4864 = vpop.f32.mrb[0].mxu0
    %v4865 = vadd.f32 0.0, %v4864
    %v4866 = vpop.f32.mrb[0].mxu0
    %v4867 = vpop.f32.mrb[0].mxu0
    %4868 = vdwg.mxu0
    %4869 = vmatprep.subr.bf16.mxu0 %v4645
    %4870 = vmatpush1.bf16.msra.mxu0 %v4644
    %4871 = vmatprep.subr.bf16.mxu0 %v4653
    %4872 = vmatpush1.bf16.msra.mxu0 %v4652
    %4873 = vmatprep.subr.bf16.mxu0 %v4661
    %4874 = vmatpush1.bf16.msra.mxu0 %v4660
    %4875 = vmatprep.subr.bf16.mxu0 %v4669
    %4876 = vmatpush1.bf16.msra.mxu0 %v4668
    %4877 = vmatprep.subr.bf16.mxu0 %v4677
    %4878 = vmatpush1.bf16.msra.mxu0 %v4676
    %4879 = vmatprep.subr.bf16.mxu0 %v4685
    %4880 = vmatpush1.bf16.msra.mxu0 %v4684
    %4881 = vmatprep.subr.bf16.mxu0 %v4693
    %4882 = vmatpush1.bf16.msra.mxu0 %v4692
    %4883 = vmatprep.subr.bf16.mxu0 %v4779
    %4884 = vmatpush1.bf16.msra.mxu0 %v4776
    %4885 = vmatprep.subr.bf16.mxu0 0
    %4886 = vmatpush1.bf16.msra.mxu0 0
    %4887 = vmatprep.subr.bf16.mxu0 0
    %4888 = vmatpush1.bf16.msra.mxu0 0
    %4889 = vmatprep.subr.bf16.mxu0 0
    %4890 = vmatpush1.bf16.msra.mxu0 0
    %4891 = vmatprep.subr.bf16.mxu0 0
    %4892 = vmatpush1.bf16.msra.mxu0 0
    %4893 = vmatprep.subr.bf16.mxu0 0
    %4894 = vmatpush1.bf16.msra.mxu0 0
    %4895 = vmatprep.subr.bf16.mxu0 0
    %4896 = vmatpush1.bf16.msra.mxu0 0
    %4897 = vmatprep.subr.bf16.mxu0 0
    %4898 = vmatpush1.bf16.msra.mxu0 0
    %4899 = vmatprep.subr.bf16.mxu0 0
    %4900 = vmatpush1.bf16.msra.mxu0 0
    %4901 = vmatprep.mubr.bf16.mxu0 0
    %4902 = vmatmul.mubr.bf16.gmra.mrb[0].mxu0 %v4761
    %v4903 = vpop.f32.mrb[0].mxu0
    %v4904 = vadd.f32 0.0, %v4903
    %v4905 = vpop.f32.mrb[0].mxu0
    %v4906 = vadd.f32 0.0, %v4905
    %v4907 = vpop.f32.mrb[0].mxu0
    %v4908 = vpop.f32.mrb[0].mxu0
    %4909 = vdwg.mxu0
    %4910 = vmatprep.subr.bf16.mxu0 %v4647
    %4911 = vmatpush1.bf16.msra.mxu0 %v4646
    %4912 = vmatprep.subr.bf16.mxu0 %v4655
    %4913 = vmatpush1.bf16.msra.mxu0 %v4654
    %4914 = vmatprep.subr.bf16.mxu0 %v4663
    %4915 = vmatpush1.bf16.msra.mxu0 %v4662
    %4916 = vmatprep.subr.bf16.mxu0 %v4671
    %4917 = vmatpush1.bf16.msra.mxu0 %v4670
    %4918 = vmatprep.subr.bf16.mxu0 %v4679
    %4919 = vmatpush1.bf16.msra.mxu0 %v4678
    %4920 = vmatprep.subr.bf16.mxu0 %v4687
    %4921 = vmatpush1.bf16.msra.mxu0 %v4686
    %4922 = vmatprep.subr.bf16.mxu0 %v4695
    %4923 = vmatpush1.bf16.msra.mxu0 %v4694
    %4924 = vmatprep.subr.bf16.mxu0 %v4785
    %4925 = vmatpush1.bf16.msra.mxu0 %v4782
    %4926 = vmatprep.subr.bf16.mxu0 0
    %4927 = vmatpush1.bf16.msra.mxu0 0
    %4928 = vmatprep.subr.bf16.mxu0 0
    %4929 = vmatpush1.bf16.msra.mxu0 0
    %4930 = vmatprep.subr.bf16.mxu0 0
    %4931 = vmatpush1.bf16.msra.mxu0 0
    %4932 = vmatprep.subr.bf16.mxu0 0
    %4933 = vmatpush1.bf16.msra.mxu0 0
    %4934 = vmatprep.subr.bf16.mxu0 0
    %4935 = vmatpush1.bf16.msra.mxu0 0
    %4936 = vmatprep.subr.bf16.mxu0 0
    %4937 = vmatpush1.bf16.msra.mxu0 0
    %4938 = vmatprep.subr.bf16.mxu0 0
    %4939 = vmatpush1.bf16.msra.mxu0 0
    %4940 = vmatprep.subr.bf16.mxu0 0
    %4941 = vmatpush1.bf16.msra.mxu0 0
    %4942 = vmatprep.mubr.bf16.mxu0 0
    %4943 = vmatmul.mubr.bf16.gmra.mrb[0].mxu0 %v4761
    %v4944 = vpop.f32.mrb[0].mxu0
    %v4945 = vadd.f32 0.0, %v4944
    %v4946 = vpop.f32.mrb[0].mxu0
    %v4947 = vadd.f32 0.0, %v4946
    %v4948 = vpop.f32.mrb[0].mxu0
    %v4949 = vpop.f32.mrb[0].mxu0
    %4950 = vdwg.mxu0
    %v4951 = vadd.f32 %v4345, %v4822
    %v4952 = vadd.f32 %v4346, %v4824
    %v4953 = vadd.f32 %v4347, %v4863
    %v4954 = vadd.f32 %v4348, %v4865
    %v4955 = vadd.f32 %v4349, %v4904
    %v4956 = vadd.f32 %v4350, %v4906
    %v4957 = vadd.f32 %v4351, %v4945
    %v4958 = vadd.f32 %v4352, %v4947
    %v4959 = vld [vmem:[#allocation12] sm:$0xff]
    %v4961 = vlaneseq
    %v4962 = vshrl.u32 %v4961, 7
    %v4963 = vsub.s32 0, %v4962
    %v4964 = vrot.slane %v4959, %v4963
    %v4965 = vlaneseq
    %v4966 = vshrl.u32 %v4965, 7
    %v4967 = vsub.s32 1, %v4966
    %v4968 = vrot.slane %v4959, %v4967
    %v4969 = vlaneseq
    %v4970 = vshrl.u32 %v4969, 7
    %v4971 = vsub.s32 2, %v4970
    %v4972 = vrot.slane %v4959, %v4971
    %v4973 = vlaneseq
    %v4974 = vshrl.u32 %v4973, 7
    %v4975 = vsub.s32 3, %v4974
    %v4976 = vrot.slane %v4959, %v4975
    %v4977 = vlaneseq
    %v4978 = vshrl.u32 %v4977, 7
    %v4979 = vsub.s32 4, %v4978
    %v4980 = vrot.slane %v4959, %v4979
    %v4981 = vlaneseq
    %v4982 = vshrl.u32 %v4981, 7
    %v4983 = vsub.s32 5, %v4982
    %v4984 = vrot.slane %v4959, %v4983
    %v4985 = vlaneseq
    %v4986 = vshrl.u32 %v4985, 7
    %v4987 = vsub.s32 6, %v4986
    %v4988 = vrot.slane %v4959, %v4987
    %v4989 = vlaneseq
    %v4990 = vshrl.u32 %v4989, 7
    %v4991 = vsub.s32 7, %v4990
    %v4992 = vrot.slane %v4959, %v4991
    %v5001 = vadd.f32 %v4951, %v4964
    %v5002 = vadd.f32 %v4952, %v4968
    %v5003 = vadd.f32 %v4953, %v4972
    %v5004 = vadd.f32 %v4954, %v4976
    %v5005 = vadd.f32 %v4955, %v4980
    %v5006 = vadd.f32 %v4956, %v4984
    %v5007 = vadd.f32 %v4957, %v4988
    %v5008 = vadd.f32 %v4958, %v4992
    %v5017 = vcombine.low %v5001, %v5002
    %v5018 = vcombine.low %v5003, %v5004
    %v5020 = vunpack.c.l.s4 1983009808
    %v5021 = vunpack.c.0.s8 %v5020
    %v5022 = vlaneseq
    %v5023 = vshrl.u32 %v5022, 7
    %v5024 = vsub.s32 %v5021, %v5023
    %v5025 = vrot.slane %v5017, %v5024
    %v5027 = vunpack.c.l.s4 1983009808
    %v5028 = vunpack.c.0.s8 %v5027
    %v5029 = vlaneseq
    %v5030 = vshrl.u32 %v5029, 7
    %v5031 = vsub.s32 %v5028, %v5030
    %v5032 = vrot.slane %v5018, %v5031
    %v5033 = vcombine.low %v5025, %v5032
    %v5034 = vcombine.low %v5005, %v5006
    %v5035 = vcombine.low %v5007, %v5008
    %v5037 = vunpack.c.l.s4 1983009808
    %v5038 = vunpack.c.0.s8 %v5037
    %v5039 = vlaneseq
    %v5040 = vshrl.u32 %v5039, 7
    %v5041 = vsub.s32 %v5038, %v5040
    %v5042 = vrot.slane %v5034, %v5041
    %v5044 = vunpack.c.l.s4 1983009808
    %v5045 = vunpack.c.0.s8 %v5044
    %v5046 = vlaneseq
    %v5047 = vshrl.u32 %v5046, 7
    %v5048 = vsub.s32 %v5045, %v5047
    %v5049 = vrot.slane %v5035, %v5048
    %v5050 = vcombine.low %v5042, %v5049
    %5053 = vst [vmem:[%s13] sm:$0xff] %v5033
    %5054 = vst [vmem:[%s13 + $0x8] sm:$0xff] %v5050
    // Predicated region
    $region82: #{encoder_forward.1} parent=1 // pred_check
      _
    $region83: #{encoder_forward.1} parent=1 // pred_check_branch
      %5056 = sbr.rel (0) target = $region85
    $region84: #{encoder_forward.1} parent=1 // pred_region
      _
    $region85: #{encoder_forward.1} parent=1 // pred_fallthru
      _
    // Predicated region
    $region86: #{encoder_forward.1} parent=1 // pred_check
      _
    $region87: #{encoder_forward.1} parent=1 // pred_check_branch
      %5058 = sbr.rel (0) target = $region89
    $region88: #{encoder_forward.1} parent=1 // pred_region
      _
    $region89: #{encoder_forward.1} parent=1 // pred_fallthru
      _
    %5059 = vsyncpa [#allocation3], 1
    %5060 = vsyncpa [#allocation5], 1
    %5061 = vsyncpa [#allocation8], 1
    %5062 = vsyncpa [#allocation11], 1

</llo_original>
